<compile_context>
chip_gen: v7x
topology: tpu7x:2x2x1
jax: 0.10.0
libtpu: 0.0.40
codegen_flags: <defaults>
</compile_context>

<pallas_src>
import functools

import jax
import jax.numpy as jnp
from jax.experimental import pallas as pl
from jax.experimental.pallas import tpu as pltpu


# ----------------------------------------------------------------------------
# Fused Conv3x3 (padding=1, stride=1) + bias + ReLU (+ optional 2x2 maxpool)
# ----------------------------------------------------------------------------
def _conv3x3_relu_kernel(x_ref, w_ref, b_ref, o_ref, xpad_ref, *,
                         H, W, Cin, Cout, pool, im2col):
    # x_ref   : (1, H, W, Cin)        bf16, one batch element
    # w_ref   : (9, Cin, Cout) bf16   or (9*Cin, Cout) bf16 when im2col
    # b_ref   : (1, Cout)             f32
    # o_ref   : (1, Ho, Wo, Cout)     bf16 (Ho/Wo halved when pool)
    # xpad_ref: (H+2, W+2, Cin)       bf16 VMEM scratch holding the halo'd tile

    # Build the halo'd input in VMEM: zero border, interior = current element.
    xpad_ref[...] = jnp.zeros((H + 2, W + 2, Cin), xpad_ref.dtype)
    xpad_ref[pl.ds(1, H), pl.ds(1, W), :] = x_ref[0]

    if im2col:
        # Stem conv (Cin=3): fold the 9 taps into a single K = 9*Cin matmul.
        slabs = [
            xpad_ref[pl.ds(k // 3, H), pl.ds(k % 3, W), :].reshape(H * W, Cin)
            for k in range(9)
        ]
        patch = jnp.concatenate(slabs, axis=-1)                 # (H*W, 9*Cin)
        acc = jnp.dot(patch, w_ref[...],
                      preferred_element_type=jnp.float32)       # (H*W, Cout) f32
    else:
        # 9 shifted-slab matmuls, each (H*W, Cin) x (Cin, Cout), f32 accumulate.
        # Weight taps are re-indexed from VMEM per tap (not hoisted as values)
        # to keep vreg pressure low on 512-channel layers.
        acc = None
        for k in range(9):
            ky, kx = divmod(k, 3)
            slab = xpad_ref[pl.ds(ky, H), pl.ds(kx, W), :].reshape(H * W, Cin)
            d = jnp.dot(slab, w_ref[k], preferred_element_type=jnp.float32)
            acc = d if acc is None else acc + d

    # Bias + ReLU once per tile, in f32.
    act = jnp.maximum(acc + b_ref[...], 0.0)                    # (H*W, Cout)

    if pool:
        # Fused 2x2/stride-2 maxpool epilogue; lane (channel) dim untouched.
        Ho, Wo = H // 2, W // 2
        cm = jnp.max(act.reshape(H * Wo, 2, Cout), axis=1)      # adjacent cols
        r = cm.reshape(Ho, 2 * Wo, Cout)
        out = jnp.maximum(r[:, :Wo, :], r[:, Wo:, :])           # adjacent rows
    else:
        out = act.reshape(H, W, Cout)

    o_ref[0] = out.astype(o_ref.dtype)


def conv3x3_relu(x, w_taps, b, *, pool=False):
    """x: (N,H,W,Cin); w_taps: (9,Cin,Cout) or (9*Cin,Cout) bf16; b: (Cout,)."""
    x = x.astype(jnp.bfloat16)
    w_taps = w_taps.astype(jnp.bfloat16)
    N, H, W, Cin = x.shape
    Cout = w_taps.shape[-1]
    im2col = (w_taps.ndim == 2)
    Ho, Wo = (H // 2, W // 2) if pool else (H, W)
    b2 = b.reshape(1, Cout).astype(jnp.float32)

    kernel = functools.partial(_conv3x3_relu_kernel, H=H, W=W, Cin=Cin,
                               Cout=Cout, pool=pool, im2col=im2col)
    w_ndim = w_taps.ndim
    # TODO(synk): at realistic (e.g. 224x224) resolutions, add a row-tile grid
    # axis (grid=(N, H//TH)) and Cout tiling so tiles fit v7x's 64 MiB VMEM;
    # whole-image-per-block is fine for this small test.
    return pl.pallas_call(
        kernel,
        out_shape=jax.ShapeDtypeStruct((N, Ho, Wo, Cout), jnp.bfloat16),
        grid=(N,),
        in_specs=[
            pl.BlockSpec((1, H, W, Cin), lambda n: (n, 0, 0, 0)),
            pl.BlockSpec(w_taps.shape, lambda n: (0,) * w_ndim),
            pl.BlockSpec((1, Cout), lambda n: (0, 0)),
        ],
        out_specs=pl.BlockSpec((1, Ho, Wo, Cout), lambda n: (n, 0, 0, 0)),
        scratch_shapes=[pltpu.VMEM((H + 2, W + 2, Cin), jnp.bfloat16)],
        compiler_params=pltpu.CompilerParams(
            dimension_semantics=("parallel",),      # megacore-shard the batch
            vmem_limit_bytes=48 * 1024 * 1024,      # fits v7x's 64 MiB VMEM
        ),
    )(x, w_taps, b2)


# ----------------------------------------------------------------------------
# VGG19 "features" slices (torchvision indices 0..29), as in the PyTorch module
# Every maxpool directly follows a conv+relu, so it is expressed as a flag on
# the preceding conv (fused pooling epilogue).
#   entry = (Cin, Cout, pool_after)
# ----------------------------------------------------------------------------
_SLICE_CFGS = [
    [(3, 64, False)],
    [(64, 64, True), (64, 128, False)],
    [(128, 128, True), (128, 256, False)],
    [(256, 256, False), (256, 256, False), (256, 256, True), (256, 512, False)],
    [(512, 512, False), (512, 512, False), (512, 512, True), (512, 512, False)],
]


def _init_conv_params(key, cin, cout):
    # TODO(synk): real module loads torchvision pretrained VGG19 weights from disk;
    # here we use deterministic He-scaled random weights of identical shape.
    kw, _ = jax.random.split(key)
    w = jax.random.normal(kw, (cout, cin, 3, 3), jnp.float32) * jnp.sqrt(2.0 / (cin * 9))
    b = jnp.zeros((cout,), jnp.float32)
    return w, b  # PyTorch layout: (Cout, Cin, kH, kW)


def init_vgg19_params(key):
    params = []
    for slice_cfg in _SLICE_CFGS:
        sp = []
        for (cin, cout, _pool) in slice_cfg:
            key, sub = jax.random.split(key)
            sp.append(_init_conv_params(sub, cin, cout))
        params.append(sp)
    return params


def prepare_vgg19_params(params):
    """One-time weight prep (hoisted out of the forward pass):
    (Cout,Cin,3,3) f32 -> (9,Cin,Cout) bf16 (tap k = ky*3+kx), or (9*Cin,Cout)
    bf16 im2col layout for the Cin=3 stem conv; bias kept f32."""
    prepared = []
    for slice_cfg, slice_params in zip(_SLICE_CFGS, params):
        sp = []
        for (cin, cout, pool), (w, b) in zip(slice_cfg, slice_params):
            wt = jnp.transpose(w, (2, 3, 1, 0)).reshape(9, cin, cout)
            if cin < 128:
                wt = wt.reshape(9 * cin, cout)          # im2col weights
            sp.append((wt.astype(jnp.bfloat16), b.astype(jnp.float32), pool))
        prepared.append(sp)
    return prepared


def vgg19_forward(prepared_params, x_nchw):
    """Mirrors Vgg19.forward: returns [h_relu1, ..., h_relu5] in NCHW (f32)."""
    h = jnp.transpose(x_nchw, (0, 2, 3, 1)).astype(jnp.bfloat16)   # NCHW -> NHWC
    outs = []
    for slice_params in prepared_params:
        for (w, b, pool) in slice_params:
            h = conv3x3_relu(h, w, b, pool=pool)
        outs.append(jnp.transpose(h, (0, 3, 1, 2)).astype(jnp.float32))
    return outs


if __name__ == "__main__":
    key = jax.random.PRNGKey(0)
    k_params, k_x = jax.random.split(key)
    params = init_vgg19_params(k_params)
    prepared = prepare_vgg19_params(params)

    # Small input consistent with the module: batch=2, 3 channels, 16x16 image.
    x = jax.random.normal(k_x, (2, 3, 16, 16), jnp.float32)

    outs = vgg19_forward(prepared, x)
    outs = jax.block_until_ready(outs)

    expected = [(2, 64, 16, 16), (2, 128, 8, 8), (2, 256, 4, 4),
                (2, 512, 2, 2), (2, 512, 1, 1)]
    got = [tuple(o.shape) for o in outs]
    assert got == expected, f"shape mismatch: {got} vs {expected}"
    assert all(bool(jnp.all(jnp.isfinite(o))) for o in outs)
    assert all(bool(jnp.all(o >= 0.0)) for o in outs)  # every slice ends in ReLU

    print("KERNEL_OK")
</pallas_src>

<mosaic_0001>
module attributes {stable_mosaic.version = 11 : i64} {
  func.func @_conv3x3_relu_kernel(%arg0: i32, %arg1: memref<1x16x16x3xbf16, #tpu.memory_space<vmem>>, %arg2: memref<27x64xbf16, #tpu.memory_space<vmem>>, %arg3: memref<1x64xf32, #tpu.memory_space<vmem>>, %arg4: memref<1x16x16x64xbf16, #tpu.memory_space<vmem>>, %arg5: memref<18x18x3xbf16, #tpu.memory_space<vmem>>) attributes {dimension_semantics = [#tpu.dimension_semantics<parallel>], iteration_bounds = array<i64: 2>, scalar_prefetch = 0 : i64, scratch_operands = 1 : i64, tpu.core_type = #tpu.core_type<tc>, window_params = [{transform_indices = @transform_0, window_bounds = array<i64: 1, 16, 16, 3>}, {pipeline_mode = #tpu.pipeline_mode<synchronous>, transform_indices = @transform_1, window_bounds = array<i64: 27, 64>}, {pipeline_mode = #tpu.pipeline_mode<synchronous>, transform_indices = @transform_2, window_bounds = array<i64: 1, 64>}, {transform_indices = @transform_3, window_bounds = array<i64: 1, 16, 16, 64>}]} {
    %cst = arith.constant 0.000000e+00 : bf16
    %0 = vector.broadcast %cst : bf16 to vector<18x18x3xbf16>
    %c0 = arith.constant 0 : index
    %c0_0 = arith.constant 0 : index
    %c0_1 = arith.constant 0 : index
    %1 = vector.load %arg5[%c0, %c0_0, %c0_1] : memref<18x18x3xbf16, #tpu.memory_space<vmem>>, vector<18x18x3xbf16>
    tpu.vector_store %arg5[%c0, %c0_0, %c0_1], %0 {strides = array<i32>} : memref<18x18x3xbf16, #tpu.memory_space<vmem>>, vector<18x18x3xbf16>,
    %c0_2 = arith.constant 0 : index
    %c0_3 = arith.constant 0 : index
    %c0_4 = arith.constant 0 : index
    %c0_5 = arith.constant 0 : index
    %2 = vector.load %arg1[%c0_2, %c0_3, %c0_4, %c0_5] : memref<1x16x16x3xbf16, #tpu.memory_space<vmem>>, vector<1x16x16x3xbf16>
    %3 = vector.shape_cast %2 : vector<1x16x16x3xbf16> to vector<16x16x3xbf16>
    %c1 = arith.constant 1 : index
    %c1_6 = arith.constant 1 : index
    %c0_7 = arith.constant 0 : index
    %4 = vector.load %arg5[%c1, %c1_6, %c0_7] : memref<18x18x3xbf16, #tpu.memory_space<vmem>>, vector<16x16x3xbf16>
    tpu.vector_store %arg5[%c1, %c1_6, %c0_7], %3 {strides = array<i32>} : memref<18x18x3xbf16, #tpu.memory_space<vmem>>, vector<16x16x3xbf16>,
    %c0_8 = arith.constant 0 : index
    %c0_9 = arith.constant 0 : index
    %c0_10 = arith.constant 0 : index
    %5 = vector.load %arg5[%c0_8, %c0_9, %c0_10] : memref<18x18x3xbf16, #tpu.memory_space<vmem>>, vector<16x16x3xbf16>
    %6 = vector.shape_cast %5 : vector<16x16x3xbf16> to vector<256x3xbf16>
    %c0_11 = arith.constant 0 : index
    %c1_12 = arith.constant 1 : index
    %c0_13 = arith.constant 0 : index
    %7 = vector.load %arg5[%c0_11, %c1_12, %c0_13] : memref<18x18x3xbf16, #tpu.memory_space<vmem>>, vector<16x16x3xbf16>
    %8 = vector.shape_cast %7 : vector<16x16x3xbf16> to vector<256x3xbf16>
    %c0_14 = arith.constant 0 : index
    %c2 = arith.constant 2 : index
    %c0_15 = arith.constant 0 : index
    %9 = vector.load %arg5[%c0_14, %c2, %c0_15] : memref<18x18x3xbf16, #tpu.memory_space<vmem>>, vector<16x16x3xbf16>
    %10 = vector.shape_cast %9 : vector<16x16x3xbf16> to vector<256x3xbf16>
    %c1_16 = arith.constant 1 : index
    %c0_17 = arith.constant 0 : index
    %c0_18 = arith.constant 0 : index
    %11 = vector.load %arg5[%c1_16, %c0_17, %c0_18] : memref<18x18x3xbf16, #tpu.memory_space<vmem>>, vector<16x16x3xbf16>
    %12 = vector.shape_cast %11 : vector<16x16x3xbf16> to vector<256x3xbf16>
    %c1_19 = arith.constant 1 : index
    %c1_20 = arith.constant 1 : index
    %c0_21 = arith.constant 0 : index
    %13 = vector.load %arg5[%c1_19, %c1_20, %c0_21] : memref<18x18x3xbf16, #tpu.memory_space<vmem>>, vector<16x16x3xbf16>
    %14 = vector.shape_cast %13 : vector<16x16x3xbf16> to vector<256x3xbf16>
    %c1_22 = arith.constant 1 : index
    %c2_23 = arith.constant 2 : index
    %c0_24 = arith.constant 0 : index
    %15 = vector.load %arg5[%c1_22, %c2_23, %c0_24] : memref<18x18x3xbf16, #tpu.memory_space<vmem>>, vector<16x16x3xbf16>
    %16 = vector.shape_cast %15 : vector<16x16x3xbf16> to vector<256x3xbf16>
    %c2_25 = arith.constant 2 : index
    %c0_26 = arith.constant 0 : index
    %c0_27 = arith.constant 0 : index
    %17 = vector.load %arg5[%c2_25, %c0_26, %c0_27] : memref<18x18x3xbf16, #tpu.memory_space<vmem>>, vector<16x16x3xbf16>
    %18 = vector.shape_cast %17 : vector<16x16x3xbf16> to vector<256x3xbf16>
    %c2_28 = arith.constant 2 : index
    %c1_29 = arith.constant 1 : index
    %c0_30 = arith.constant 0 : index
    %19 = vector.load %arg5[%c2_28, %c1_29, %c0_30] : memref<18x18x3xbf16, #tpu.memory_space<vmem>>, vector<16x16x3xbf16>
    %20 = vector.shape_cast %19 : vector<16x16x3xbf16> to vector<256x3xbf16>
    %c2_31 = arith.constant 2 : index
    %c2_32 = arith.constant 2 : index
    %c0_33 = arith.constant 0 : index
    %21 = vector.load %arg5[%c2_31, %c2_32, %c0_33] : memref<18x18x3xbf16, #tpu.memory_space<vmem>>, vector<16x16x3xbf16>
    %22 = vector.shape_cast %21 : vector<16x16x3xbf16> to vector<256x3xbf16>
    %23 = tpu.concatenate %6, %8, %10, %12, %14, %16, %18, %20, %22 in 1 : vector<256x3xbf16>, vector<256x3xbf16>, vector<256x3xbf16>, vector<256x3xbf16>, vector<256x3xbf16>, vector<256x3xbf16>, vector<256x3xbf16>, vector<256x3xbf16>, vector<256x3xbf16> -> vector<256x27xbf16>
    %c0_34 = arith.constant 0 : index
    %c0_35 = arith.constant 0 : index
    %24 = vector.load %arg2[%c0_34, %c0_35] : memref<27x64xbf16, #tpu.memory_space<vmem>>, vector<27x64xbf16>
    %cst_36 = arith.constant dense<0.000000e+00> : vector<256x64xf32>
    %25 = tpu.matmul %23, %24, %cst_36 {dimension_numbers = #tpu.dot_dimension_numbers<[1], [0], [0], [1], [0, 0, 1, 1], [], []>} : vector<256x27xbf16>, vector<27x64xbf16>, vector<256x64xf32> -> vector<256x64xf32>
    %c0_37 = arith.constant 0 : index
    %c0_38 = arith.constant 0 : index
    %26 = vector.load %arg3[%c0_37, %c0_38] : memref<1x64xf32, #tpu.memory_space<vmem>>, vector<1x64xf32>
    %27 = vector.broadcast %26 : vector<1x64xf32> to vector<256x64xf32>
    %28 = arith.addf %25, %27 : vector<256x64xf32>
    %cst_39 = arith.constant 0.000000e+00 : f32
    %29 = vector.broadcast %cst_39 : f32 to vector<256x64xf32>
    %30 = arith.maximumf %28, %29 : vector<256x64xf32>
    %31 = vector.shape_cast %30 : vector<256x64xf32> to vector<16x16x64xf32>
    %32 = arith.truncf %31 : vector<16x16x64xf32> to vector<16x16x64xbf16>
    %c0_40 = arith.constant 0 : index
    %c0_41 = arith.constant 0 : index
    %c0_42 = arith.constant 0 : index
    %c0_43 = arith.constant 0 : index
    %33 = vector.load %arg4[%c0_40, %c0_41, %c0_42, %c0_43] : memref<1x16x16x64xbf16, #tpu.memory_space<vmem>>, vector<1x16x16x64xbf16>
    %34 = vector.shape_cast %33 : vector<1x16x16x64xbf16> to vector<16x16x64xbf16>
    %35 = vector.shape_cast %32 : vector<16x16x64xbf16> to vector<1x16x16x64xbf16>
    tpu.vector_store %arg4[%c0_40, %c0_41, %c0_42, %c0_43], %35 {strides = array<i32>} : memref<1x16x16x64xbf16, #tpu.memory_space<vmem>>, vector<1x16x16x64xbf16>,
    return
  }
  func.func @transform_0(%arg0: i32) -> (i32, i32, i32, i32) {
    %c0_i32 = arith.constant 0 : i32
    %c0_i32_0 = arith.constant 0 : i32
    %c0_i32_1 = arith.constant 0 : i32
    %c0_i32_2 = arith.constant 0 : i32
    return %arg0, %c0_i32, %c0_i32_0, %c0_i32_1 : i32, i32, i32, i32
  }
  func.func @transform_1(%arg0: i32) -> (i32, i32) {
    %c0_i32 = arith.constant 0 : i32
    %c0_i32_0 = arith.constant 0 : i32
    %c0_i32_1 = arith.constant 0 : i32
    return %c0_i32, %c0_i32_0 : i32, i32
  }
  func.func @transform_2(%arg0: i32) -> (i32, i32) {
    %c0_i32 = arith.constant 0 : i32
    %c0_i32_0 = arith.constant 0 : i32
    %c0_i32_1 = arith.constant 0 : i32
    return %c0_i32, %c0_i32_0 : i32, i32
  }
  func.func @transform_3(%arg0: i32) -> (i32, i32, i32, i32) {
    %c0_i32 = arith.constant 0 : i32
    %c0_i32_0 = arith.constant 0 : i32
    %c0_i32_1 = arith.constant 0 : i32
    %c0_i32_2 = arith.constant 0 : i32
    return %arg0, %c0_i32, %c0_i32_0, %c0_i32_1 : i32, i32, i32, i32
  }
}

</mosaic_0001>

<llo_original>
// kernel: tpu_custom_call.1
$region0: #{tpu_custom_call.1}
  #allocation0 [shape = 'u32[]', space=smem, size = 0x4, offset = 0x4, fixed_abs, tag = 'smem constant byte address 0x4 - core index']
  #allocation1 [shape = 'u32[144,128]{1,0:T(1,128)}', space=vmem, size = 0x12000, scoped, tag = 'internal scratch']
  #allocation2 [shape = 'bf16[18,18,3]{2,1,0:T(8,128)(2,1)}', space=vmem, size = 0x1b000, scoped, tag = 'scratch operand']
  %s0 = inlined_call_operand.vmem [shape: bf16[2,16,16,3], index: 0, kind: input, shape index: {}]
  %s1 = inlined_call_operand.vmem [shape: bf16[27,64], index: 1, kind: input, shape index: {}]
  %s2 = inlined_call_operand.vmem [shape: f32[1,64], index: 2, kind: input, shape index: {}]
  %s3 = inlined_call_operand.hbm [shape: bf16[2,16,16,64], index: 3, kind: output, shape index: {}]
  %s4 = sld [smem:[#allocation0]]
  $region45: #{tpu_custom_call.1} parent=0
    _
  %s6 = ssub.s32 1, %s4
  %s7 = scalar_select 0, %s6, %s4
  $region1: #{tpu_custom_call.1} parent=0
    #allocation3 [shape = 'u8[131072]{0}', space=vmem, size = 0x20000, scoped, tag = 'output window, operand 0']
    #allocation4 [shape = 's32[2]{0}', space=sflag, size = 0x8, scoped, tag = 'scoped memory for tpu_custom_call.1']
    %8 = vsyncpa [#allocation4], 0
    %s9 = scalar_lea.sflag [#allocation4], 1
    %10 = vsyncpa %s9, 0
    loop: start=0, step=1, limit=4
    $region2: #{tpu_custom_call.1} parent=1 // loop_pre_header
      _
    $region3: #{tpu_custom_call.1} parent=1 // loop_header
      %s12 = sphi 0, %s16
      %p13 = scmp.ge.s32.totalorder %s12, 4
      %s22 = sphi 0, %s24
      %s25 = sphi 0, %s22
      %s26 = sphi 0, %s25
      %s42 = sphi 0, %s26
      %s46 = sphi 0, %s46
      %s48 = sphi 0, %s46
      %s49 = sphi 0, %s48
      %s63 = sphi 0, %s49
      %s67 = sphi 0, %s67
      %s69 = sphi 0, %s67
      %s70 = sphi 0, %s69
      %s84 = sphi 0, %s70
      %s90 = sphi 0, %s92
      %s93 = sphi 0, %s90
      %s94 = sphi 0, %s93
      %s110 = sphi 0, %s94
    $region4: #{tpu_custom_call.1} parent=1 // loop_header_branch
      %15 = sbr.rel (%p13) target = $region8
    $region5: #{tpu_custom_call.1} parent=1 // loop_body
      %s17 = ssub.s32 %s12, 1
      %s18 = ssub.s32 %s12, 2
      %s19 = sadd.s32 %s12, 1
      %s20 = ssub.s32 %s12, %s19
      %p21 = scmp.eq.s32.totalorder %s20, 0
      %s23 = sadd.s32 %s22, 1
      %s24 = scalar_select %p21, %s22, %s23
      %p27 = pneg %p21
      %p28 = scmp.eq.s32.totalorder %s12, 1
      %p29 = por %p27, %p28
      %p30 = scmp.ne.s32.totalorder %s22, %s25
      %p31 = scmp.eq.s32.totalorder %s12, 0
      %p32 = por %p30, %p31
      %p33 = scmp.ne.s32.totalorder %s22, %s25
      %p34 = scmp.eq.s32.totalorder %s17, 1
      %p35 = por %p33, %p34
      %p36 = scmp.ne.s32.totalorder %s25, %s26
      %p37 = scmp.eq.s32.totalorder %s17, 0
      %p38 = por %p36, %p37
      %p39 = scmp.ne.s32.totalorder %s25, %s26
      %p40 = scmp.eq.s32.totalorder %s18, 1
      %p41 = por %p39, %p40
      %p43 = scmp.ne.s32.totalorder %s26, %s42
      %p44 = scmp.eq.s32.totalorder %s18, 0
      %p45 = por %p43, %p44
      %s47 = sadd.s32 %s46, 1
      %p50 = scmp.eq.s32.totalorder %s12, 1
      %p51 = scmp.ne.s32.totalorder %s46, %s48
      %p52 = scmp.eq.s32.totalorder %s12, 0
      %p53 = por %p51, %p52
      %p54 = scmp.ne.s32.totalorder %s46, %s48
      %p55 = scmp.eq.s32.totalorder %s17, 1
      %p56 = por %p54, %p55
      %p57 = scmp.ne.s32.totalorder %s48, %s49
      %p58 = scmp.eq.s32.totalorder %s17, 0
      %p59 = por %p57, %p58
      %p60 = scmp.ne.s32.totalorder %s48, %s49
      %p61 = scmp.eq.s32.totalorder %s18, 1
      %p62 = por %p60, %p61
      %p64 = scmp.ne.s32.totalorder %s49, %s63
      %p65 = scmp.eq.s32.totalorder %s18, 0
      %p66 = por %p64, %p65
      %s68 = sadd.s32 %s67, 1
      %p71 = scmp.eq.s32.totalorder %s12, 1
      %p72 = scmp.ne.s32.totalorder %s67, %s69
      %p73 = scmp.eq.s32.totalorder %s12, 0
      %p74 = por %p72, %p73
      %p75 = scmp.ne.s32.totalorder %s67, %s69
      %p76 = scmp.eq.s32.totalorder %s17, 1
      %p77 = por %p75, %p76
      %p78 = scmp.ne.s32.totalorder %s69, %s70
      %p79 = scmp.eq.s32.totalorder %s17, 0
      %p80 = por %p78, %p79
      %p81 = scmp.ne.s32.totalorder %s69, %s70
      %p82 = scmp.eq.s32.totalorder %s18, 1
      %p83 = por %p81, %p82
      %p85 = scmp.ne.s32.totalorder %s70, %s84
      %p86 = scmp.eq.s32.totalorder %s18, 0
      %p87 = por %p85, %p86
      %s88 = ssub.s32 %s12, %s19
      %p89 = scmp.eq.s32.totalorder %s88, 0
      %s91 = sadd.s32 %s90, 1
      %s92 = scalar_select %p89, %s90, %s91
      %p95 = pneg %p89
      %p96 = scmp.eq.s32.totalorder %s12, 1
      %p97 = por %p95, %p96
      %p98 = scmp.ne.s32.totalorder %s90, %s93
      %p99 = scmp.eq.s32.totalorder %s12, 0
      %p100 = por %p98, %p99
      %p101 = scmp.ne.s32.totalorder %s90, %s93
      %p102 = scmp.eq.s32.totalorder %s17, 1
      %p103 = por %p101, %p102
      %p104 = scmp.ne.s32.totalorder %s93, %s94
      %p105 = scmp.eq.s32.totalorder %s17, 0
      %p106 = por %p104, %p105
      %p107 = scmp.ne.s32.totalorder %s93, %s94
      %p108 = scmp.eq.s32.totalorder %s18, 1
      %p109 = por %p107, %p108
      %p111 = scmp.ne.s32.totalorder %s94, %s110
      %p112 = scmp.eq.s32.totalorder %s18, 0
      %p113 = por %p111, %p112
      %p114 = scmp.le.s32.totalorder 1, %s12
      %p115 = scmp.lt.s32.totalorder %s12, 3
      %p116 = pnand %p114, %p115
      %p117 = pneg %p116
      // Predicated region
      $region9: #{tpu_custom_call.1} parent=5 // pred_check
        _
      $region10: #{tpu_custom_call.1} parent=5 // pred_check_branch
        %119 = sbr.rel (%p116) target = $region12
      $region11: #{tpu_custom_call.1} parent=5 // pred_region
        %s120 = ssub.s32 %s12, 1
        // Predicated region
        $region13: #{tpu_custom_call.1} parent=11 // pred_check
          %p121 = pneg %p59
        $region14: #{tpu_custom_call.1} parent=11 // pred_check_branch
          %123 = sbr.rel (%p121) target = $region16
        $region15: #{tpu_custom_call.1} parent=11 // pred_region
          _
        $region16: #{tpu_custom_call.1} parent=11 // pred_fallthru
          _
        // Predicated region
        $region17: #{tpu_custom_call.1} parent=11 // pred_check
          %p124 = pneg %p80
        $region18: #{tpu_custom_call.1} parent=11 // pred_check_branch
          %126 = sbr.rel (%p124) target = $region20
        $region19: #{tpu_custom_call.1} parent=11 // pred_region
          _
        $region20: #{tpu_custom_call.1} parent=11 // pred_fallthru
          _
      $region12: #{tpu_custom_call.1} parent=5 // pred_fallthru
        _
      %p127 = scmp.lt.s32.totalorder %s12, 2
      // Predicated region
      $region21: #{tpu_custom_call.1} parent=5 // pred_check
        %p128 = pneg %p127
      $region22: #{tpu_custom_call.1} parent=5 // pred_check_branch
        %130 = sbr.rel (%p128) target = $region24
      $region23: #{tpu_custom_call.1} parent=5 // pred_region
        // Predicated region
        $region25: #{tpu_custom_call.1} parent=23 // pred_check
          %p131 = pneg %p32
        $region26: #{tpu_custom_call.1} parent=23 // pred_check_branch
          %133 = sbr.rel (%p131) target = $region28
        $region27: #{tpu_custom_call.1} parent=23 // pred_region
          %p134 = scmp.lt.s32.totalorder %s12, 1
          %s135 = scalar_select %p134, %s12, 1
          %s136 = smul.addr %s135, 32
          %s137 = smul.addr %s136, 4
          %s138 = scalar_lea.vmem %s0, %s137
        $region28: #{tpu_custom_call.1} parent=23 // pred_fallthru
          _
      $region24: #{tpu_custom_call.1} parent=5 // pred_fallthru
        _
      %p139 = scmp.le.s32.totalorder 1, %s12
      %p140 = scmp.lt.s32.totalorder %s12, 3
      %p141 = pnand %p139, %p140
      %p142 = pneg %p141
      // Predicated region
      $region29: #{tpu_custom_call.1} parent=5 // pred_check
        _
      $region30: #{tpu_custom_call.1} parent=5 // pred_check_branch
        %144 = sbr.rel (%p141) target = $region32
      $region31: #{tpu_custom_call.1} parent=5 // pred_region
        %s145 = ssub.s32 %s12, 1
        %p146 = scmp.lt.s32.totalorder %s17, 1
        %s147 = scalar_select %p146, %s17, 1
        %s148 = smul.addr %s147, 32
        %s149 = smul.addr %s148, 4
        %s150 = scalar_lea.vmem %s0, %s149
        %p151 = pneg %p38
        %p152 = pneg %p35
        %p153 = pneg %p59
        %p154 = pneg %p56
        %p155 = pneg %p80
        %p156 = pneg %p77
        %p157 = pneg %p106
        %p158 = pneg %p103
        %s159 = sand.u32 %s93, 1
        %s160 = scalar_lea.sflag [#allocation4], %s159
        %s161 = sand.u32 %s93, 1
        %s162 = smul.addr %s161, 128
        %s163 = scalar_lea.vmem [#allocation3], %s162
        %p164 = scmp.lt.s32.totalorder %s17, 1
        %s165 = scalar_select %p164, %s17, 1
        %s166 = smul.addr %s165, 32
        %s167 = smul.addr %s166, 4
        %s168 = scalar_lea.vmem %s0, %s167
        %vm170 = vcmask 19456
        %171 = vst.msk [vmem:[#allocation2] sm:$0xf] %vm170, 0
        %172 = vst.msk [vmem:[#allocation2 + $0x4] sm:$0xf] %vm170, 0
        %vm173 = vcmask 16384
        %174 = vst.msk [vmem:[#allocation2 + $0x8] sm:$0x1] %vm173, 0
        %175 = vst.msk [vmem:[#allocation2 + $0xc] sm:$0xf] %vm170, 0
        %176 = vst.msk [vmem:[#allocation2 + $0x10] sm:$0xf] %vm170, 0
        %177 = vst.msk [vmem:[#allocation2 + $0x14] sm:$0x1] %vm173, 0
        %178 = vst.msk [vmem:[#allocation2 + $0x18] sm:$0xf] %vm170, 0
        %179 = vst.msk [vmem:[#allocation2 + $0x1c] sm:$0xf] %vm170, 0
        %180 = vst.msk [vmem:[#allocation2 + $0x20] sm:$0x1] %vm173, 0
        %181 = vst.msk [vmem:[#allocation2 + $0x24] sm:$0xf] %vm170, 0
        %182 = vst.msk [vmem:[#allocation2 + $0x28] sm:$0xf] %vm170, 0
        %183 = vst.msk [vmem:[#allocation2 + $0x2c] sm:$0x1] %vm173, 0
        %184 = vst.msk [vmem:[#allocation2 + $0x30] sm:$0xf] %vm170, 0
        %185 = vst.msk [vmem:[#allocation2 + $0x34] sm:$0xf] %vm170, 0
        %186 = vst.msk [vmem:[#allocation2 + $0x38] sm:$0x1] %vm173, 0
        %187 = vst.msk [vmem:[#allocation2 + $0x3c] sm:$0xf] %vm170, 0
        %188 = vst.msk [vmem:[#allocation2 + $0x40] sm:$0xf] %vm170, 0
        %189 = vst.msk [vmem:[#allocation2 + $0x44] sm:$0x1] %vm173, 0
        %190 = vst.msk [vmem:[#allocation2 + $0x48] sm:$0xf] %vm170, 0
        %191 = vst.msk [vmem:[#allocation2 + $0x4c] sm:$0xf] %vm170, 0
        %192 = vst.msk [vmem:[#allocation2 + $0x50] sm:$0x1] %vm173, 0
        %193 = vst.msk [vmem:[#allocation2 + $0x54] sm:$0xf] %vm170, 0
        %194 = vst.msk [vmem:[#allocation2 + $0x58] sm:$0xf] %vm170, 0
        %195 = vst.msk [vmem:[#allocation2 + $0x5c] sm:$0x1] %vm173, 0
        %196 = vst.msk [vmem:[#allocation2 + $0x60] sm:$0xf] %vm170, 0
        %197 = vst.msk [vmem:[#allocation2 + $0x64] sm:$0xf] %vm170, 0
        %198 = vst.msk [vmem:[#allocation2 + $0x68] sm:$0x1] %vm173, 0
        %199 = vst.msk [vmem:[#allocation2 + $0x6c] sm:$0xf] %vm170, 0
        %200 = vst.msk [vmem:[#allocation2 + $0x70] sm:$0xf] %vm170, 0
        %201 = vst.msk [vmem:[#allocation2 + $0x74] sm:$0x1] %vm173, 0
        %202 = vst.msk [vmem:[#allocation2 + $0x78] sm:$0xf] %vm170, 0
        %203 = vst.msk [vmem:[#allocation2 + $0x7c] sm:$0xf] %vm170, 0
        %204 = vst.msk [vmem:[#allocation2 + $0x80] sm:$0x1] %vm173, 0
        %205 = vst.msk [vmem:[#allocation2 + $0x84] sm:$0xf] %vm170, 0
        %206 = vst.msk [vmem:[#allocation2 + $0x88] sm:$0xf] %vm170, 0
        %207 = vst.msk [vmem:[#allocation2 + $0x8c] sm:$0x1] %vm173, 0
        %208 = vst.msk [vmem:[#allocation2 + $0x90] sm:$0xf] %vm170, 0
        %209 = vst.msk [vmem:[#allocation2 + $0x94] sm:$0xf] %vm170, 0
        %210 = vst.msk [vmem:[#allocation2 + $0x98] sm:$0x1] %vm173, 0
        %211 = vst.msk [vmem:[#allocation2 + $0x9c] sm:$0xf] %vm170, 0
        %212 = vst.msk [vmem:[#allocation2 + $0xa0] sm:$0xf] %vm170, 0
        %213 = vst.msk [vmem:[#allocation2 + $0xa4] sm:$0x1] %vm173, 0
        %214 = vst.msk [vmem:[#allocation2 + $0xa8] sm:$0xf] %vm170, 0
        %215 = vst.msk [vmem:[#allocation2 + $0xac] sm:$0xf] %vm170, 0
        %216 = vst.msk [vmem:[#allocation2 + $0xb0] sm:$0x1] %vm173, 0
        %217 = vst.msk [vmem:[#allocation2 + $0xb4] sm:$0xf] %vm170, 0
        %218 = vst.msk [vmem:[#allocation2 + $0xb8] sm:$0xf] %vm170, 0
        %219 = vst.msk [vmem:[#allocation2 + $0xbc] sm:$0x1] %vm173, 0
        %220 = vst.msk [vmem:[#allocation2 + $0xc0] sm:$0xf] %vm170, 0
        %221 = vst.msk [vmem:[#allocation2 + $0xc4] sm:$0xf] %vm170, 0
        %222 = vst.msk [vmem:[#allocation2 + $0xc8] sm:$0x1] %vm173, 0
        %223 = vst.msk [vmem:[#allocation2 + $0xcc] sm:$0xf] %vm170, 0
        %224 = vst.msk [vmem:[#allocation2 + $0xd0] sm:$0xf] %vm170, 0
        %225 = vst.msk [vmem:[#allocation2 + $0xd4] sm:$0x1] %vm173, 0
        %v226 = vld [vmem:[%s168] sm:$0xf]
        %v227 = vld [vmem:[%s168 + $0x4] sm:$0xf]
        %v228 = vld [vmem:[%s168 + $0x8] sm:$0xf]
        %v229 = vld [vmem:[%s168 + $0xc] sm:$0xf]
        %v230 = vld [vmem:[%s168 + $0x10] sm:$0xf]
        %v231 = vld [vmem:[%s168 + $0x14] sm:$0xf]
        %v232 = vld [vmem:[%s168 + $0x18] sm:$0xf]
        %v233 = vld [vmem:[%s168 + $0x1c] sm:$0xf]
        %v234 = vld [vmem:[%s168 + $0x20] sm:$0xf]
        %v235 = vld [vmem:[%s168 + $0x24] sm:$0xf]
        %v236 = vld [vmem:[%s168 + $0x28] sm:$0xf]
        %v237 = vld [vmem:[%s168 + $0x2c] sm:$0xf]
        %v238 = vld [vmem:[%s168 + $0x30] sm:$0xf]
        %v239 = vld [vmem:[%s168 + $0x34] sm:$0xf]
        %v240 = vld [vmem:[%s168 + $0x38] sm:$0xf]
        %v241 = vld [vmem:[%s168 + $0x3c] sm:$0xf]
        %v242 = vld [vmem:[%s168 + $0x40] sm:$0xf]
        %v243 = vld [vmem:[%s168 + $0x44] sm:$0xf]
        %v244 = vld [vmem:[%s168 + $0x48] sm:$0xf]
        %v245 = vld [vmem:[%s168 + $0x4c] sm:$0xf]
        %v246 = vld [vmem:[%s168 + $0x50] sm:$0xf]
        %v247 = vld [vmem:[%s168 + $0x54] sm:$0xf]
        %v248 = vld [vmem:[%s168 + $0x58] sm:$0xf]
        %v249 = vld [vmem:[%s168 + $0x5c] sm:$0xf]
        %v250 = vld [vmem:[%s168 + $0x60] sm:$0xf]
        %v251 = vld [vmem:[%s168 + $0x64] sm:$0xf]
        %v252 = vld [vmem:[%s168 + $0x68] sm:$0xf]
        %v253 = vld [vmem:[%s168 + $0x6c] sm:$0xf]
        %v254 = vld [vmem:[%s168 + $0x70] sm:$0xf]
        %v255 = vld [vmem:[%s168 + $0x74] sm:$0xf]
        %v256 = vld [vmem:[%s168 + $0x78] sm:$0xf]
        %v257 = vld [vmem:[%s168 + $0x7c] sm:$0xf]
        %vm258 = vsmask.f32 256
        %vm259 = vsmask.f32 4368
        %vm260 = vmor %vm258, %vm259
        %v262 = vshrl.u32 %v226, 16
        %v264 = vrot.slane %v262, 7
        %v265 = vshll.u32 %v226, 16
        %v267 = vor.u32 %v264, %v265
        %v268 = vrot.slane %v264, 4
        %v270 = vshrl.u32 %v227, 16
        %v272 = vrot.slane %v270, 7
        %v273 = vshll.u32 %v227, 16
        %v275 = vor.u32 %v272, %v273
        %v276 = vsel %vm260, %v268, %v275
        %v277 = vrot.slane %v272, 4
        %v279 = vshrl.u32 %v228, 16
        %v281 = vrot.slane %v279, 7
        %v282 = vshll.u32 %v228, 16
        %v284 = vor.u32 %v281, %v282
        %v285 = vrot.slane %v281, 4
        %v287 = vshrl.u32 %v229, 16
        %v289 = vrot.slane %v287, 7
        %v290 = vshll.u32 %v229, 16
        %v292 = vor.u32 %v289, %v290
        %v293 = vsel %vm260, %v285, %v292
        %v294 = vrot.slane %v289, 4
        %v296 = vshrl.u32 %v230, 16
        %v298 = vrot.slane %v296, 7
        %v299 = vshll.u32 %v230, 16
        %v301 = vor.u32 %v298, %v299
        %v302 = vrot.slane %v298, 4
        %v304 = vshrl.u32 %v231, 16
        %v306 = vrot.slane %v304, 7
        %v307 = vshll.u32 %v231, 16
        %v309 = vor.u32 %v306, %v307
        %v310 = vsel %vm260, %v302, %v309
        %v311 = vrot.slane %v306, 4
        %v313 = vshrl.u32 %v232, 16
        %v315 = vrot.slane %v313, 7
        %v316 = vshll.u32 %v232, 16
        %v318 = vor.u32 %v315, %v316
        %v319 = vrot.slane %v315, 4
        %v321 = vshrl.u32 %v233, 16
        %v323 = vrot.slane %v321, 7
        %v324 = vshll.u32 %v233, 16
        %v326 = vor.u32 %v323, %v324
        %v327 = vsel %vm260, %v319, %v326
        %v328 = vrot.slane %v323, 4
        %v330 = vshrl.u32 %v234, 16
        %v332 = vrot.slane %v330, 7
        %v333 = vshll.u32 %v234, 16
        %v335 = vor.u32 %v332, %v333
        %v336 = vrot.slane %v332, 4
        %v338 = vshrl.u32 %v235, 16
        %v340 = vrot.slane %v338, 7
        %v341 = vshll.u32 %v235, 16
        %v343 = vor.u32 %v340, %v341
        %v344 = vsel %vm260, %v336, %v343
        %v345 = vrot.slane %v340, 4
        %v347 = vshrl.u32 %v236, 16
        %v349 = vrot.slane %v347, 7
        %v350 = vshll.u32 %v236, 16
        %v352 = vor.u32 %v349, %v350
        %v353 = vrot.slane %v349, 4
        %v355 = vshrl.u32 %v237, 16
        %v357 = vrot.slane %v355, 7
        %v358 = vshll.u32 %v237, 16
        %v360 = vor.u32 %v357, %v358
        %v361 = vsel %vm260, %v353, %v360
        %v362 = vrot.slane %v357, 4
        %v364 = vshrl.u32 %v238, 16
        %v366 = vrot.slane %v364, 7
        %v367 = vshll.u32 %v238, 16
        %v369 = vor.u32 %v366, %v367
        %v370 = vrot.slane %v366, 4
        %v372 = vshrl.u32 %v239, 16
        %v374 = vrot.slane %v372, 7
        %v375 = vshll.u32 %v239, 16
        %v377 = vor.u32 %v374, %v375
        %v378 = vsel %vm260, %v370, %v377
        %v379 = vrot.slane %v374, 4
        %v381 = vshrl.u32 %v240, 16
        %v383 = vrot.slane %v381, 7
        %v384 = vshll.u32 %v240, 16
        %v386 = vor.u32 %v383, %v384
        %v387 = vrot.slane %v383, 4
        %v389 = vshrl.u32 %v241, 16
        %v391 = vrot.slane %v389, 7
        %v392 = vshll.u32 %v241, 16
        %v394 = vor.u32 %v391, %v392
        %v395 = vsel %vm260, %v387, %v394
        %v396 = vrot.slane %v391, 4
        %v398 = vshrl.u32 %v242, 16
        %v400 = vrot.slane %v398, 7
        %v401 = vshll.u32 %v242, 16
        %v403 = vor.u32 %v400, %v401
        %v404 = vrot.slane %v400, 4
        %v406 = vshrl.u32 %v243, 16
        %v408 = vrot.slane %v406, 7
        %v409 = vshll.u32 %v243, 16
        %v411 = vor.u32 %v408, %v409
        %v412 = vsel %vm260, %v404, %v411
        %v413 = vrot.slane %v408, 4
        %v415 = vshrl.u32 %v244, 16
        %v417 = vrot.slane %v415, 7
        %v418 = vshll.u32 %v244, 16
        %v420 = vor.u32 %v417, %v418
        %v421 = vrot.slane %v417, 4
        %v423 = vshrl.u32 %v245, 16
        %v425 = vrot.slane %v423, 7
        %v426 = vshll.u32 %v245, 16
        %v428 = vor.u32 %v425, %v426
        %v429 = vsel %vm260, %v421, %v428
        %v430 = vrot.slane %v425, 4
        %v432 = vshrl.u32 %v246, 16
        %v434 = vrot.slane %v432, 7
        %v435 = vshll.u32 %v246, 16
        %v437 = vor.u32 %v434, %v435
        %v438 = vrot.slane %v434, 4
        %v440 = vshrl.u32 %v247, 16
        %v442 = vrot.slane %v440, 7
        %v443 = vshll.u32 %v247, 16
        %v445 = vor.u32 %v442, %v443
        %v446 = vsel %vm260, %v438, %v445
        %v447 = vrot.slane %v442, 4
        %v449 = vshrl.u32 %v248, 16
        %v451 = vrot.slane %v449, 7
        %v452 = vshll.u32 %v248, 16
        %v454 = vor.u32 %v451, %v452
        %v455 = vrot.slane %v451, 4
        %v457 = vshrl.u32 %v249, 16
        %v459 = vrot.slane %v457, 7
        %v460 = vshll.u32 %v249, 16
        %v462 = vor.u32 %v459, %v460
        %v463 = vsel %vm260, %v455, %v462
        %v464 = vrot.slane %v459, 4
        %v466 = vshrl.u32 %v250, 16
        %v468 = vrot.slane %v466, 7
        %v469 = vshll.u32 %v250, 16
        %v471 = vor.u32 %v468, %v469
        %v472 = vrot.slane %v468, 4
        %v474 = vshrl.u32 %v251, 16
        %v476 = vrot.slane %v474, 7
        %v477 = vshll.u32 %v251, 16
        %v479 = vor.u32 %v476, %v477
        %v480 = vsel %vm260, %v472, %v479
        %v481 = vrot.slane %v476, 4
        %v483 = vshrl.u32 %v252, 16
        %v485 = vrot.slane %v483, 7
        %v486 = vshll.u32 %v252, 16
        %v488 = vor.u32 %v485, %v486
        %v489 = vrot.slane %v485, 4
        %v491 = vshrl.u32 %v253, 16
        %v493 = vrot.slane %v491, 7
        %v494 = vshll.u32 %v253, 16
        %v496 = vor.u32 %v493, %v494
        %v497 = vsel %vm260, %v489, %v496
        %v498 = vrot.slane %v493, 4
        %v500 = vshrl.u32 %v254, 16
        %v502 = vrot.slane %v500, 7
        %v503 = vshll.u32 %v254, 16
        %v505 = vor.u32 %v502, %v503
        %v506 = vrot.slane %v502, 4
        %v508 = vshrl.u32 %v255, 16
        %v510 = vrot.slane %v508, 7
        %v511 = vshll.u32 %v255, 16
        %v513 = vor.u32 %v510, %v511
        %v514 = vsel %vm260, %v506, %v513
        %v515 = vrot.slane %v510, 4
        %v517 = vshrl.u32 %v256, 16
        %v519 = vrot.slane %v517, 7
        %v520 = vshll.u32 %v256, 16
        %v522 = vor.u32 %v519, %v520
        %v523 = vrot.slane %v519, 4
        %v525 = vshrl.u32 %v257, 16
        %v527 = vrot.slane %v525, 7
        %v528 = vshll.u32 %v257, 16
        %v530 = vor.u32 %v527, %v528
        %v531 = vsel %vm260, %v523, %v530
        %v532 = vrot.slane %v527, 4
        %s581 = scalar_lea.vmem [#allocation2], 12
        %vm582 = vcmask 19456
        %vm583 = vsmask.f32 7938
        %vm584 = vmand %vm582, %vm583
        %v585 = vld [vmem:[%s581] sm:$0xf]
        %v586 = vsel %vm584, %v267, %v585
        %587 = vst [vmem:[%s581] sm:$0xf] %v586
        %588 = vst.msk [vmem:[%s581 + $0x4] sm:$0xf] %vm170, %v276
        %vm589 = vcmask 16384
        %vm590 = vmand %vm589, %vm258
        %v591 = vld [vmem:[%s581 + $0x8] sm:$0x1]
        %v592 = vsel %vm590, %v277, %v591
        %593 = vst [vmem:[%s581 + $0x8] sm:$0x1] %v592
        %v594 = vld [vmem:[%s581 + $0xc] sm:$0xf]
        %v595 = vsel %vm584, %v284, %v594
        %596 = vst [vmem:[%s581 + $0xc] sm:$0xf] %v595
        %597 = vst.msk [vmem:[%s581 + $0x10] sm:$0xf] %vm170, %v293
        %v598 = vld [vmem:[%s581 + $0x14] sm:$0x1]
        %v599 = vsel %vm590, %v294, %v598
        %600 = vst [vmem:[%s581 + $0x14] sm:$0x1] %v599
        %v601 = vld [vmem:[%s581 + $0x18] sm:$0xf]
        %v602 = vsel %vm584, %v301, %v601
        %603 = vst [vmem:[%s581 + $0x18] sm:$0xf] %v602
        %604 = vst.msk [vmem:[%s581 + $0x1c] sm:$0xf] %vm170, %v310
        %v605 = vld [vmem:[%s581 + $0x20] sm:$0x1]
        %v606 = vsel %vm590, %v311, %v605
        %607 = vst [vmem:[%s581 + $0x20] sm:$0x1] %v606
        %v608 = vld [vmem:[%s581 + $0x24] sm:$0xf]
        %v609 = vsel %vm584, %v318, %v608
        %610 = vst [vmem:[%s581 + $0x24] sm:$0xf] %v609
        %611 = vst.msk [vmem:[%s581 + $0x28] sm:$0xf] %vm170, %v327
        %v612 = vld [vmem:[%s581 + $0x2c] sm:$0x1]
        %v613 = vsel %vm590, %v328, %v612
        %614 = vst [vmem:[%s581 + $0x2c] sm:$0x1] %v613
        %v615 = vld [vmem:[%s581 + $0x30] sm:$0xf]
        %v616 = vsel %vm584, %v335, %v615
        %617 = vst [vmem:[%s581 + $0x30] sm:$0xf] %v616
        %618 = vst.msk [vmem:[%s581 + $0x34] sm:$0xf] %vm170, %v344
        %v619 = vld [vmem:[%s581 + $0x38] sm:$0x1]
        %v620 = vsel %vm590, %v345, %v619
        %621 = vst [vmem:[%s581 + $0x38] sm:$0x1] %v620
        %v622 = vld [vmem:[%s581 + $0x3c] sm:$0xf]
        %v623 = vsel %vm584, %v352, %v622
        %624 = vst [vmem:[%s581 + $0x3c] sm:$0xf] %v623
        %625 = vst.msk [vmem:[%s581 + $0x40] sm:$0xf] %vm170, %v361
        %v626 = vld [vmem:[%s581 + $0x44] sm:$0x1]
        %v627 = vsel %vm590, %v362, %v626
        %628 = vst [vmem:[%s581 + $0x44] sm:$0x1] %v627
        %v629 = vld [vmem:[%s581 + $0x48] sm:$0xf]
        %v630 = vsel %vm584, %v369, %v629
        %631 = vst [vmem:[%s581 + $0x48] sm:$0xf] %v630
        %632 = vst.msk [vmem:[%s581 + $0x4c] sm:$0xf] %vm170, %v378
        %v633 = vld [vmem:[%s581 + $0x50] sm:$0x1]
        %v634 = vsel %vm590, %v379, %v633
        %635 = vst [vmem:[%s581 + $0x50] sm:$0x1] %v634
        %v636 = vld [vmem:[%s581 + $0x54] sm:$0xf]
        %v637 = vsel %vm584, %v386, %v636
        %638 = vst [vmem:[%s581 + $0x54] sm:$0xf] %v637
        %639 = vst.msk [vmem:[%s581 + $0x58] sm:$0xf] %vm170, %v395
        %v640 = vld [vmem:[%s581 + $0x5c] sm:$0x1]
        %v641 = vsel %vm590, %v396, %v640
        %642 = vst [vmem:[%s581 + $0x5c] sm:$0x1] %v641
        %v643 = vld [vmem:[%s581 + $0x60] sm:$0xf]
        %v644 = vsel %vm584, %v403, %v643
        %645 = vst [vmem:[%s581 + $0x60] sm:$0xf] %v644
        %646 = vst.msk [vmem:[%s581 + $0x64] sm:$0xf] %vm170, %v412
        %v647 = vld [vmem:[%s581 + $0x68] sm:$0x1]
        %v648 = vsel %vm590, %v413, %v647
        %649 = vst [vmem:[%s581 + $0x68] sm:$0x1] %v648
        %v650 = vld [vmem:[%s581 + $0x6c] sm:$0xf]
        %v651 = vsel %vm584, %v420, %v650
        %652 = vst [vmem:[%s581 + $0x6c] sm:$0xf] %v651
        %653 = vst.msk [vmem:[%s581 + $0x70] sm:$0xf] %vm170, %v429
        %v654 = vld [vmem:[%s581 + $0x74] sm:$0x1]
        %v655 = vsel %vm590, %v430, %v654
        %656 = vst [vmem:[%s581 + $0x74] sm:$0x1] %v655
        %v657 = vld [vmem:[%s581 + $0x78] sm:$0xf]
        %v658 = vsel %vm584, %v437, %v657
        %659 = vst [vmem:[%s581 + $0x78] sm:$0xf] %v658
        %660 = vst.msk [vmem:[%s581 + $0x7c] sm:$0xf] %vm170, %v446
        %v661 = vld [vmem:[%s581 + $0x80] sm:$0x1]
        %v662 = vsel %vm590, %v447, %v661
        %663 = vst [vmem:[%s581 + $0x80] sm:$0x1] %v662
        %v664 = vld [vmem:[%s581 + $0x84] sm:$0xf]
        %v665 = vsel %vm584, %v454, %v664
        %666 = vst [vmem:[%s581 + $0x84] sm:$0xf] %v665
        %667 = vst.msk [vmem:[%s581 + $0x88] sm:$0xf] %vm170, %v463
        %v668 = vld [vmem:[%s581 + $0x8c] sm:$0x1]
        %v669 = vsel %vm590, %v464, %v668
        %670 = vst [vmem:[%s581 + $0x8c] sm:$0x1] %v669
        %v671 = vld [vmem:[%s581 + $0x90] sm:$0xf]
        %v672 = vsel %vm584, %v471, %v671
        %673 = vst [vmem:[%s581 + $0x90] sm:$0xf] %v672
        %674 = vst.msk [vmem:[%s581 + $0x94] sm:$0xf] %vm170, %v480
        %v675 = vld [vmem:[%s581 + $0x98] sm:$0x1]
        %v676 = vsel %vm590, %v481, %v675
        %677 = vst [vmem:[%s581 + $0x98] sm:$0x1] %v676
        %v678 = vld [vmem:[%s581 + $0x9c] sm:$0xf]
        %v679 = vsel %vm584, %v488, %v678
        %680 = vst [vmem:[%s581 + $0x9c] sm:$0xf] %v679
        %681 = vst.msk [vmem:[%s581 + $0xa0] sm:$0xf] %vm170, %v497
        %v682 = vld [vmem:[%s581 + $0xa4] sm:$0x1]
        %v683 = vsel %vm590, %v498, %v682
        %684 = vst [vmem:[%s581 + $0xa4] sm:$0x1] %v683
        %v685 = vld [vmem:[%s581 + $0xa8] sm:$0xf]
        %v686 = vsel %vm584, %v505, %v685
        %687 = vst [vmem:[%s581 + $0xa8] sm:$0xf] %v686
        %688 = vst.msk [vmem:[%s581 + $0xac] sm:$0xf] %vm170, %v514
        %v689 = vld [vmem:[%s581 + $0xb0] sm:$0x1]
        %v690 = vsel %vm590, %v515, %v689
        %691 = vst [vmem:[%s581 + $0xb0] sm:$0x1] %v690
        %v692 = vld [vmem:[%s581 + $0xb4] sm:$0xf]
        %v693 = vsel %vm584, %v522, %v692
        %694 = vst [vmem:[%s581 + $0xb4] sm:$0xf] %v693
        %695 = vst.msk [vmem:[%s581 + $0xb8] sm:$0xf] %vm170, %v531
        %v696 = vld [vmem:[%s581 + $0xbc] sm:$0x1]
        %v697 = vsel %vm590, %v532, %v696
        %698 = vst [vmem:[%s581 + $0xbc] sm:$0x1] %v697
        %v699 = vld [vmem:[#allocation2] sm:$0xf]
        %v700 = vld [vmem:[#allocation2 + $0x4] sm:$0xf]
        %v701 = vld [vmem:[#allocation2 + $0xc] sm:$0xf]
        %v702 = vld [vmem:[#allocation2 + $0x10] sm:$0xf]
        %v703 = vld [vmem:[#allocation2 + $0x18] sm:$0xf]
        %v704 = vld [vmem:[#allocation2 + $0x1c] sm:$0xf]
        %v705 = vld [vmem:[#allocation2 + $0x24] sm:$0xf]
        %v706 = vld [vmem:[#allocation2 + $0x28] sm:$0xf]
        %v707 = vld [vmem:[#allocation2 + $0x30] sm:$0xf]
        %v708 = vld [vmem:[#allocation2 + $0x34] sm:$0xf]
        %v709 = vld [vmem:[#allocation2 + $0x3c] sm:$0xf]
        %v710 = vld [vmem:[#allocation2 + $0x40] sm:$0xf]
        %v711 = vld [vmem:[#allocation2 + $0x48] sm:$0xf]
        %v712 = vld [vmem:[#allocation2 + $0x4c] sm:$0xf]
        %v713 = vld [vmem:[#allocation2 + $0x54] sm:$0xf]
        %v714 = vld [vmem:[#allocation2 + $0x58] sm:$0xf]
        %v715 = vld [vmem:[#allocation2 + $0x60] sm:$0xf]
        %v716 = vld [vmem:[#allocation2 + $0x64] sm:$0xf]
        %v717 = vld [vmem:[#allocation2 + $0x6c] sm:$0xf]
        %v718 = vld [vmem:[#allocation2 + $0x70] sm:$0xf]
        %v719 = vld [vmem:[#allocation2 + $0x78] sm:$0xf]
        %v720 = vld [vmem:[#allocation2 + $0x7c] sm:$0xf]
        %v721 = vld [vmem:[#allocation2 + $0x84] sm:$0xf]
        %v722 = vld [vmem:[#allocation2 + $0x88] sm:$0xf]
        %v723 = vld [vmem:[#allocation2 + $0x90] sm:$0xf]
        %v724 = vld [vmem:[#allocation2 + $0x94] sm:$0xf]
        %v725 = vld [vmem:[#allocation2 + $0x9c] sm:$0xf]
        %v726 = vld [vmem:[#allocation2 + $0xa0] sm:$0xf]
        %v727 = vld [vmem:[#allocation2 + $0xa8] sm:$0xf]
        %v728 = vld [vmem:[#allocation2 + $0xac] sm:$0xf]
        %v729 = vld [vmem:[#allocation2 + $0xb4] sm:$0xf]
        %v730 = vld [vmem:[#allocation2 + $0xb8] sm:$0xf]
        %v731 = vld [vmem:[#allocation2 + $0x8] sm:$0x1]
        %v732 = vld [vmem:[#allocation2 + $0x14] sm:$0x1]
        %v733 = vld [vmem:[#allocation2 + $0x20] sm:$0x1]
        %v734 = vld [vmem:[#allocation2 + $0x2c] sm:$0x1]
        %v735 = vld [vmem:[#allocation2 + $0x38] sm:$0x1]
        %v736 = vld [vmem:[#allocation2 + $0x44] sm:$0x1]
        %v737 = vld [vmem:[#allocation2 + $0x50] sm:$0x1]
        %v738 = vld [vmem:[#allocation2 + $0x5c] sm:$0x1]
        %v739 = vld [vmem:[#allocation2 + $0x68] sm:$0x1]
        %v740 = vld [vmem:[#allocation2 + $0x74] sm:$0x1]
        %v741 = vld [vmem:[#allocation2 + $0x80] sm:$0x1]
        %v742 = vld [vmem:[#allocation2 + $0x8c] sm:$0x1]
        %v743 = vld [vmem:[#allocation2 + $0x98] sm:$0x1]
        %v744 = vld [vmem:[#allocation2 + $0xa4] sm:$0x1]
        %v745 = vld [vmem:[#allocation2 + $0xb0] sm:$0x1]
        %v746 = vld [vmem:[#allocation2 + $0xbc] sm:$0x1]
        %vm747 = vsmask.f32 3328
        %vm748 = vsmask.f32 7440
        %vm749 = vmor %vm747, %vm748
        %v751 = vshrl.u32 %v699, 16
        %v753 = vrot.slane %v751, 4
        %v754 = vshll.u32 %v699, 16
        %v756 = vrot.slane %v754, 5
        %v757 = vor.u32 %v753, %v756
        %v758 = vrot.slane %v757, 4
        %v760 = vshll.u32 %v700, 16
        %v762 = vrot.slane %v760, 5
        %v763 = vsel %vm749, %v758, %v762
        %v764 = vshrl.u32 %v700, 16
        %v766 = vrot.slane %v764, 4
        %v767 = vor.u32 %v766, %v762
        %v768 = vrot.slane %v767, 4
        %v770 = vshll.u32 %v731, 16
        %v772 = vrot.slane %v770, 5
        %v773 = vsel %vm749, %v768, %v772
        %v775 = vshrl.u32 %v701, 16
        %v777 = vrot.slane %v775, 4
        %v778 = vshll.u32 %v701, 16
        %v780 = vrot.slane %v778, 5
        %v781 = vor.u32 %v777, %v780
        %v782 = vrot.slane %v781, 4
        %v784 = vshll.u32 %v702, 16
        %v786 = vrot.slane %v784, 5
        %v787 = vsel %vm749, %v782, %v786
        %v788 = vshrl.u32 %v702, 16
        %v790 = vrot.slane %v788, 4
        %v791 = vor.u32 %v790, %v786
        %v792 = vrot.slane %v791, 4
        %v794 = vshll.u32 %v732, 16
        %v796 = vrot.slane %v794, 5
        %v797 = vsel %vm749, %v792, %v796
        %v799 = vshrl.u32 %v703, 16
        %v801 = vrot.slane %v799, 4
        %v802 = vshll.u32 %v703, 16
        %v804 = vrot.slane %v802, 5
        %v805 = vor.u32 %v801, %v804
        %v806 = vrot.slane %v805, 4
        %v808 = vshll.u32 %v704, 16
        %v810 = vrot.slane %v808, 5
        %v811 = vsel %vm749, %v806, %v810
        %v812 = vshrl.u32 %v704, 16
        %v814 = vrot.slane %v812, 4
        %v815 = vor.u32 %v814, %v810
        %v816 = vrot.slane %v815, 4
        %v818 = vshll.u32 %v733, 16
        %v820 = vrot.slane %v818, 5
        %v821 = vsel %vm749, %v816, %v820
        %v823 = vshrl.u32 %v705, 16
        %v825 = vrot.slane %v823, 4
        %v826 = vshll.u32 %v705, 16
        %v828 = vrot.slane %v826, 5
        %v829 = vor.u32 %v825, %v828
        %v830 = vrot.slane %v829, 4
        %v832 = vshll.u32 %v706, 16
        %v834 = vrot.slane %v832, 5
        %v835 = vsel %vm749, %v830, %v834
        %v836 = vshrl.u32 %v706, 16
        %v838 = vrot.slane %v836, 4
        %v839 = vor.u32 %v838, %v834
        %v840 = vrot.slane %v839, 4
        %v842 = vshll.u32 %v734, 16
        %v844 = vrot.slane %v842, 5
        %v845 = vsel %vm749, %v840, %v844
        %v847 = vshrl.u32 %v707, 16
        %v849 = vrot.slane %v847, 4
        %v850 = vshll.u32 %v707, 16
        %v852 = vrot.slane %v850, 5
        %v853 = vor.u32 %v849, %v852
        %v854 = vrot.slane %v853, 4
        %v856 = vshll.u32 %v708, 16
        %v858 = vrot.slane %v856, 5
        %v859 = vsel %vm749, %v854, %v858
        %v860 = vshrl.u32 %v708, 16
        %v862 = vrot.slane %v860, 4
        %v863 = vor.u32 %v862, %v858
        %v864 = vrot.slane %v863, 4
        %v866 = vshll.u32 %v735, 16
        %v868 = vrot.slane %v866, 5
        %v869 = vsel %vm749, %v864, %v868
        %v871 = vshrl.u32 %v709, 16
        %v873 = vrot.slane %v871, 4
        %v874 = vshll.u32 %v709, 16
        %v876 = vrot.slane %v874, 5
        %v877 = vor.u32 %v873, %v876
        %v878 = vrot.slane %v877, 4
        %v880 = vshll.u32 %v710, 16
        %v882 = vrot.slane %v880, 5
        %v883 = vsel %vm749, %v878, %v882
        %v884 = vshrl.u32 %v710, 16
        %v886 = vrot.slane %v884, 4
        %v887 = vor.u32 %v886, %v882
        %v888 = vrot.slane %v887, 4
        %v890 = vshll.u32 %v736, 16
        %v892 = vrot.slane %v890, 5
        %v893 = vsel %vm749, %v888, %v892
        %v895 = vshrl.u32 %v711, 16
        %v897 = vrot.slane %v895, 4
        %v898 = vshll.u32 %v711, 16
        %v900 = vrot.slane %v898, 5
        %v901 = vor.u32 %v897, %v900
        %v902 = vrot.slane %v901, 4
        %v904 = vshll.u32 %v712, 16
        %v906 = vrot.slane %v904, 5
        %v907 = vsel %vm749, %v902, %v906
        %v908 = vshrl.u32 %v712, 16
        %v910 = vrot.slane %v908, 4
        %v911 = vor.u32 %v910, %v906
        %v912 = vrot.slane %v911, 4
        %v914 = vshll.u32 %v737, 16
        %v916 = vrot.slane %v914, 5
        %v917 = vsel %vm749, %v912, %v916
        %v919 = vshrl.u32 %v713, 16
        %v921 = vrot.slane %v919, 4
        %v922 = vshll.u32 %v713, 16
        %v924 = vrot.slane %v922, 5
        %v925 = vor.u32 %v921, %v924
        %v926 = vrot.slane %v925, 4
        %v928 = vshll.u32 %v714, 16
        %v930 = vrot.slane %v928, 5
        %v931 = vsel %vm749, %v926, %v930
        %v932 = vshrl.u32 %v714, 16
        %v934 = vrot.slane %v932, 4
        %v935 = vor.u32 %v934, %v930
        %v936 = vrot.slane %v935, 4
        %v938 = vshll.u32 %v738, 16
        %v940 = vrot.slane %v938, 5
        %v941 = vsel %vm749, %v936, %v940
        %v943 = vshrl.u32 %v715, 16
        %v945 = vrot.slane %v943, 4
        %v946 = vshll.u32 %v715, 16
        %v948 = vrot.slane %v946, 5
        %v949 = vor.u32 %v945, %v948
        %v950 = vrot.slane %v949, 4
        %v952 = vshll.u32 %v716, 16
        %v954 = vrot.slane %v952, 5
        %v955 = vsel %vm749, %v950, %v954
        %v956 = vshrl.u32 %v716, 16
        %v958 = vrot.slane %v956, 4
        %v959 = vor.u32 %v958, %v954
        %v960 = vrot.slane %v959, 4
        %v962 = vshll.u32 %v739, 16
        %v964 = vrot.slane %v962, 5
        %v965 = vsel %vm749, %v960, %v964
        %v967 = vshrl.u32 %v717, 16
        %v969 = vrot.slane %v967, 4
        %v970 = vshll.u32 %v717, 16
        %v972 = vrot.slane %v970, 5
        %v973 = vor.u32 %v969, %v972
        %v974 = vrot.slane %v973, 4
        %v976 = vshll.u32 %v718, 16
        %v978 = vrot.slane %v976, 5
        %v979 = vsel %vm749, %v974, %v978
        %v980 = vshrl.u32 %v718, 16
        %v982 = vrot.slane %v980, 4
        %v983 = vor.u32 %v982, %v978
        %v984 = vrot.slane %v983, 4
        %v986 = vshll.u32 %v740, 16
        %v988 = vrot.slane %v986, 5
        %v989 = vsel %vm749, %v984, %v988
        %v991 = vshrl.u32 %v719, 16
        %v993 = vrot.slane %v991, 4
        %v994 = vshll.u32 %v719, 16
        %v996 = vrot.slane %v994, 5
        %v997 = vor.u32 %v993, %v996
        %v998 = vrot.slane %v997, 4
        %v1000 = vshll.u32 %v720, 16
        %v1002 = vrot.slane %v1000, 5
        %v1003 = vsel %vm749, %v998, %v1002
        %v1004 = vshrl.u32 %v720, 16
        %v1006 = vrot.slane %v1004, 4
        %v1007 = vor.u32 %v1006, %v1002
        %v1008 = vrot.slane %v1007, 4
        %v1010 = vshll.u32 %v741, 16
        %v1012 = vrot.slane %v1010, 5
        %v1013 = vsel %vm749, %v1008, %v1012
        %v1015 = vshrl.u32 %v721, 16
        %v1017 = vrot.slane %v1015, 4
        %v1018 = vshll.u32 %v721, 16
        %v1020 = vrot.slane %v1018, 5
        %v1021 = vor.u32 %v1017, %v1020
        %v1022 = vrot.slane %v1021, 4
        %v1024 = vshll.u32 %v722, 16
        %v1026 = vrot.slane %v1024, 5
        %v1027 = vsel %vm749, %v1022, %v1026
        %v1028 = vshrl.u32 %v722, 16
        %v1030 = vrot.slane %v1028, 4
        %v1031 = vor.u32 %v1030, %v1026
        %v1032 = vrot.slane %v1031, 4
        %v1034 = vshll.u32 %v742, 16
        %v1036 = vrot.slane %v1034, 5
        %v1037 = vsel %vm749, %v1032, %v1036
        %v1039 = vshrl.u32 %v723, 16
        %v1041 = vrot.slane %v1039, 4
        %v1042 = vshll.u32 %v723, 16
        %v1044 = vrot.slane %v1042, 5
        %v1045 = vor.u32 %v1041, %v1044
        %v1046 = vrot.slane %v1045, 4
        %v1048 = vshll.u32 %v724, 16
        %v1050 = vrot.slane %v1048, 5
        %v1051 = vsel %vm749, %v1046, %v1050
        %v1052 = vshrl.u32 %v724, 16
        %v1054 = vrot.slane %v1052, 4
        %v1055 = vor.u32 %v1054, %v1050
        %v1056 = vrot.slane %v1055, 4
        %v1058 = vshll.u32 %v743, 16
        %v1060 = vrot.slane %v1058, 5
        %v1061 = vsel %vm749, %v1056, %v1060
        %v1063 = vshrl.u32 %v725, 16
        %v1065 = vrot.slane %v1063, 4
        %v1066 = vshll.u32 %v725, 16
        %v1068 = vrot.slane %v1066, 5
        %v1069 = vor.u32 %v1065, %v1068
        %v1070 = vrot.slane %v1069, 4
        %v1072 = vshll.u32 %v726, 16
        %v1074 = vrot.slane %v1072, 5
        %v1075 = vsel %vm749, %v1070, %v1074
        %v1076 = vshrl.u32 %v726, 16
        %v1078 = vrot.slane %v1076, 4
        %v1079 = vor.u32 %v1078, %v1074
        %v1080 = vrot.slane %v1079, 4
        %v1082 = vshll.u32 %v744, 16
        %v1084 = vrot.slane %v1082, 5
        %v1085 = vsel %vm749, %v1080, %v1084
        %v1087 = vshrl.u32 %v727, 16
        %v1089 = vrot.slane %v1087, 4
        %v1090 = vshll.u32 %v727, 16
        %v1092 = vrot.slane %v1090, 5
        %v1093 = vor.u32 %v1089, %v1092
        %v1094 = vrot.slane %v1093, 4
        %v1096 = vshll.u32 %v728, 16
        %v1098 = vrot.slane %v1096, 5
        %v1099 = vsel %vm749, %v1094, %v1098
        %v1100 = vshrl.u32 %v728, 16
        %v1102 = vrot.slane %v1100, 4
        %v1103 = vor.u32 %v1102, %v1098
        %v1104 = vrot.slane %v1103, 4
        %v1106 = vshll.u32 %v745, 16
        %v1108 = vrot.slane %v1106, 5
        %v1109 = vsel %vm749, %v1104, %v1108
        %v1111 = vshrl.u32 %v729, 16
        %v1113 = vrot.slane %v1111, 4
        %v1114 = vshll.u32 %v729, 16
        %v1116 = vrot.slane %v1114, 5
        %v1117 = vor.u32 %v1113, %v1116
        %v1118 = vrot.slane %v1117, 4
        %v1120 = vshll.u32 %v730, 16
        %v1122 = vrot.slane %v1120, 5
        %v1123 = vsel %vm749, %v1118, %v1122
        %v1124 = vshrl.u32 %v730, 16
        %v1126 = vrot.slane %v1124, 4
        %v1127 = vor.u32 %v1126, %v1122
        %v1128 = vrot.slane %v1127, 4
        %v1130 = vshll.u32 %v746, 16
        %v1132 = vrot.slane %v1130, 5
        %v1133 = vsel %vm749, %v1128, %v1132
        %v1134 = vld [vmem:[#allocation2] sm:$0xe]
        %v1135 = vld [vmem:[#allocation2 + $0xc] sm:$0xe]
        %v1136 = vld [vmem:[#allocation2 + $0x18] sm:$0xe]
        %v1137 = vld [vmem:[#allocation2 + $0x24] sm:$0xe]
        %v1138 = vld [vmem:[#allocation2 + $0x30] sm:$0xe]
        %v1139 = vld [vmem:[#allocation2 + $0x3c] sm:$0xe]
        %v1140 = vld [vmem:[#allocation2 + $0x48] sm:$0xe]
        %v1141 = vld [vmem:[#allocation2 + $0x54] sm:$0xe]
        %v1142 = vld [vmem:[#allocation2 + $0x60] sm:$0xe]
        %v1143 = vld [vmem:[#allocation2 + $0x6c] sm:$0xe]
        %v1144 = vld [vmem:[#allocation2 + $0x78] sm:$0xe]
        %v1145 = vld [vmem:[#allocation2 + $0x84] sm:$0xe]
        %v1146 = vld [vmem:[#allocation2 + $0x90] sm:$0xe]
        %v1147 = vld [vmem:[#allocation2 + $0x9c] sm:$0xe]
        %v1148 = vld [vmem:[#allocation2 + $0xa8] sm:$0xe]
        %v1149 = vld [vmem:[#allocation2 + $0xb4] sm:$0xe]
        %vm1198 = vcmask 1042432
        %vm1199 = vcmask 1046532
        %vm1200 = vmor %vm1198, %vm1199
        %v1201 = vrot.slane %v1134, 5
        %v1202 = vrot.slane %v1201, 4
        %v1203 = vrot.slane %v700, 5
        %v1204 = vsel %vm1200, %v1202, %v1203
        %v1205 = vrot.slane %v1203, 4
        %v1206 = vrot.slane %v731, 5
        %v1207 = vsel %vm1200, %v1205, %v1206
        %v1208 = vrot.slane %v1135, 5
        %v1209 = vrot.slane %v1208, 4
        %v1210 = vrot.slane %v702, 5
        %v1211 = vsel %vm1200, %v1209, %v1210
        %v1212 = vrot.slane %v1210, 4
        %v1213 = vrot.slane %v732, 5
        %v1214 = vsel %vm1200, %v1212, %v1213
        %v1215 = vrot.slane %v1136, 5
        %v1216 = vrot.slane %v1215, 4
        %v1217 = vrot.slane %v704, 5
        %v1218 = vsel %vm1200, %v1216, %v1217
        %v1219 = vrot.slane %v1217, 4
        %v1220 = vrot.slane %v733, 5
        %v1221 = vsel %vm1200, %v1219, %v1220
        %v1222 = vrot.slane %v1137, 5
        %v1223 = vrot.slane %v1222, 4
        %v1224 = vrot.slane %v706, 5
        %v1225 = vsel %vm1200, %v1223, %v1224
        %v1226 = vrot.slane %v1224, 4
        %v1227 = vrot.slane %v734, 5
        %v1228 = vsel %vm1200, %v1226, %v1227
        %v1229 = vrot.slane %v1138, 5
        %v1230 = vrot.slane %v1229, 4
        %v1231 = vrot.slane %v708, 5
        %v1232 = vsel %vm1200, %v1230, %v1231
        %v1233 = vrot.slane %v1231, 4
        %v1234 = vrot.slane %v735, 5
        %v1235 = vsel %vm1200, %v1233, %v1234
        %v1236 = vrot.slane %v1139, 5
        %v1237 = vrot.slane %v1236, 4
        %v1238 = vrot.slane %v710, 5
        %v1239 = vsel %vm1200, %v1237, %v1238
        %v1240 = vrot.slane %v1238, 4
        %v1241 = vrot.slane %v736, 5
        %v1242 = vsel %vm1200, %v1240, %v1241
        %v1243 = vrot.slane %v1140, 5
        %v1244 = vrot.slane %v1243, 4
        %v1245 = vrot.slane %v712, 5
        %v1246 = vsel %vm1200, %v1244, %v1245
        %v1247 = vrot.slane %v1245, 4
        %v1248 = vrot.slane %v737, 5
        %v1249 = vsel %vm1200, %v1247, %v1248
        %v1250 = vrot.slane %v1141, 5
        %v1251 = vrot.slane %v1250, 4
        %v1252 = vrot.slane %v714, 5
        %v1253 = vsel %vm1200, %v1251, %v1252
        %v1254 = vrot.slane %v1252, 4
        %v1255 = vrot.slane %v738, 5
        %v1256 = vsel %vm1200, %v1254, %v1255
        %v1257 = vrot.slane %v1142, 5
        %v1258 = vrot.slane %v1257, 4
        %v1259 = vrot.slane %v716, 5
        %v1260 = vsel %vm1200, %v1258, %v1259
        %v1261 = vrot.slane %v1259, 4
        %v1262 = vrot.slane %v739, 5
        %v1263 = vsel %vm1200, %v1261, %v1262
        %v1264 = vrot.slane %v1143, 5
        %v1265 = vrot.slane %v1264, 4
        %v1266 = vrot.slane %v718, 5
        %v1267 = vsel %vm1200, %v1265, %v1266
        %v1268 = vrot.slane %v1266, 4
        %v1269 = vrot.slane %v740, 5
        %v1270 = vsel %vm1200, %v1268, %v1269
        %v1271 = vrot.slane %v1144, 5
        %v1272 = vrot.slane %v1271, 4
        %v1273 = vrot.slane %v720, 5
        %v1274 = vsel %vm1200, %v1272, %v1273
        %v1275 = vrot.slane %v1273, 4
        %v1276 = vrot.slane %v741, 5
        %v1277 = vsel %vm1200, %v1275, %v1276
        %v1278 = vrot.slane %v1145, 5
        %v1279 = vrot.slane %v1278, 4
        %v1280 = vrot.slane %v722, 5
        %v1281 = vsel %vm1200, %v1279, %v1280
        %v1282 = vrot.slane %v1280, 4
        %v1283 = vrot.slane %v742, 5
        %v1284 = vsel %vm1200, %v1282, %v1283
        %v1285 = vrot.slane %v1146, 5
        %v1286 = vrot.slane %v1285, 4
        %v1287 = vrot.slane %v724, 5
        %v1288 = vsel %vm1200, %v1286, %v1287
        %v1289 = vrot.slane %v1287, 4
        %v1290 = vrot.slane %v743, 5
        %v1291 = vsel %vm1200, %v1289, %v1290
        %v1292 = vrot.slane %v1147, 5
        %v1293 = vrot.slane %v1292, 4
        %v1294 = vrot.slane %v726, 5
        %v1295 = vsel %vm1200, %v1293, %v1294
        %v1296 = vrot.slane %v1294, 4
        %v1297 = vrot.slane %v744, 5
        %v1298 = vsel %vm1200, %v1296, %v1297
        %v1299 = vrot.slane %v1148, 5
        %v1300 = vrot.slane %v1299, 4
        %v1301 = vrot.slane %v728, 5
        %v1302 = vsel %vm1200, %v1300, %v1301
        %v1303 = vrot.slane %v1301, 4
        %v1304 = vrot.slane %v745, 5
        %v1305 = vsel %vm1200, %v1303, %v1304
        %v1306 = vrot.slane %v1149, 5
        %v1307 = vrot.slane %v1306, 4
        %v1308 = vrot.slane %v730, 5
        %v1309 = vsel %vm1200, %v1307, %v1308
        %v1310 = vrot.slane %v1308, 4
        %v1311 = vrot.slane %v746, 5
        %v1312 = vsel %vm1200, %v1310, %v1311
        %v1313 = vld [vmem:[%s581] sm:$0xf]
        %v1314 = vld [vmem:[%s581 + $0x4] sm:$0xf]
        %v1315 = vld [vmem:[%s581 + $0xc] sm:$0xf]
        %v1316 = vld [vmem:[%s581 + $0x10] sm:$0xf]
        %v1317 = vld [vmem:[%s581 + $0x18] sm:$0xf]
        %v1318 = vld [vmem:[%s581 + $0x1c] sm:$0xf]
        %v1319 = vld [vmem:[%s581 + $0x24] sm:$0xf]
        %v1320 = vld [vmem:[%s581 + $0x28] sm:$0xf]
        %v1321 = vld [vmem:[%s581 + $0x30] sm:$0xf]
        %v1322 = vld [vmem:[%s581 + $0x34] sm:$0xf]
        %v1323 = vld [vmem:[%s581 + $0x3c] sm:$0xf]
        %v1324 = vld [vmem:[%s581 + $0x40] sm:$0xf]
        %v1325 = vld [vmem:[%s581 + $0x48] sm:$0xf]
        %v1326 = vld [vmem:[%s581 + $0x4c] sm:$0xf]
        %v1327 = vld [vmem:[%s581 + $0x54] sm:$0xf]
        %v1328 = vld [vmem:[%s581 + $0x58] sm:$0xf]
        %v1329 = vld [vmem:[%s581 + $0x60] sm:$0xf]
        %v1330 = vld [vmem:[%s581 + $0x64] sm:$0xf]
        %v1331 = vld [vmem:[%s581 + $0x6c] sm:$0xf]
        %v1332 = vld [vmem:[%s581 + $0x70] sm:$0xf]
        %v1333 = vld [vmem:[%s581 + $0x78] sm:$0xf]
        %v1334 = vld [vmem:[%s581 + $0x7c] sm:$0xf]
        %v1335 = vld [vmem:[%s581 + $0x84] sm:$0xf]
        %v1336 = vld [vmem:[%s581 + $0x88] sm:$0xf]
        %v1337 = vld [vmem:[%s581 + $0x90] sm:$0xf]
        %v1338 = vld [vmem:[%s581 + $0x94] sm:$0xf]
        %v1339 = vld [vmem:[%s581 + $0x9c] sm:$0xf]
        %v1340 = vld [vmem:[%s581 + $0xa0] sm:$0xf]
        %v1341 = vld [vmem:[%s581 + $0xa8] sm:$0xf]
        %v1342 = vld [vmem:[%s581 + $0xac] sm:$0xf]
        %v1343 = vld [vmem:[%s581 + $0xb4] sm:$0xf]
        %v1344 = vld [vmem:[%s581 + $0xb8] sm:$0xf]
        %v1345 = vld [vmem:[%s581 + $0x8] sm:$0x1]
        %v1346 = vld [vmem:[%s581 + $0x14] sm:$0x1]
        %v1347 = vld [vmem:[%s581 + $0x20] sm:$0x1]
        %v1348 = vld [vmem:[%s581 + $0x2c] sm:$0x1]
        %v1349 = vld [vmem:[%s581 + $0x38] sm:$0x1]
        %v1350 = vld [vmem:[%s581 + $0x44] sm:$0x1]
        %v1351 = vld [vmem:[%s581 + $0x50] sm:$0x1]
        %v1352 = vld [vmem:[%s581 + $0x5c] sm:$0x1]
        %v1353 = vld [vmem:[%s581 + $0x68] sm:$0x1]
        %v1354 = vld [vmem:[%s581 + $0x74] sm:$0x1]
        %v1355 = vld [vmem:[%s581 + $0x80] sm:$0x1]
        %v1356 = vld [vmem:[%s581 + $0x8c] sm:$0x1]
        %v1357 = vld [vmem:[%s581 + $0x98] sm:$0x1]
        %v1358 = vld [vmem:[%s581 + $0xa4] sm:$0x1]
        %v1359 = vld [vmem:[%s581 + $0xb0] sm:$0x1]
        %v1360 = vld [vmem:[%s581 + $0xbc] sm:$0x1]
        %v1362 = vshrl.u32 %v1313, 16
        %v1364 = vrot.slane %v1362, 4
        %v1365 = vshll.u32 %v1313, 16
        %v1367 = vrot.slane %v1365, 5
        %v1368 = vor.u32 %v1364, %v1367
        %v1369 = vrot.slane %v1368, 4
        %v1371 = vshll.u32 %v1314, 16
        %v1373 = vrot.slane %v1371, 5
        %v1374 = vsel %vm749, %v1369, %v1373
        %v1375 = vshrl.u32 %v1314, 16
        %v1377 = vrot.slane %v1375, 4
        %v1378 = vor.u32 %v1377, %v1373
        %v1379 = vrot.slane %v1378, 4
        %v1381 = vshll.u32 %v1345, 16
        %v1383 = vrot.slane %v1381, 5
        %v1384 = vsel %vm749, %v1379, %v1383
        %v1386 = vshrl.u32 %v1315, 16
        %v1388 = vrot.slane %v1386, 4
        %v1389 = vshll.u32 %v1315, 16
        %v1391 = vrot.slane %v1389, 5
        %v1392 = vor.u32 %v1388, %v1391
        %v1393 = vrot.slane %v1392, 4
        %v1395 = vshll.u32 %v1316, 16
        %v1397 = vrot.slane %v1395, 5
        %v1398 = vsel %vm749, %v1393, %v1397
        %v1399 = vshrl.u32 %v1316, 16
        %v1401 = vrot.slane %v1399, 4
        %v1402 = vor.u32 %v1401, %v1397
        %v1403 = vrot.slane %v1402, 4
        %v1405 = vshll.u32 %v1346, 16
        %v1407 = vrot.slane %v1405, 5
        %v1408 = vsel %vm749, %v1403, %v1407
        %v1410 = vshrl.u32 %v1317, 16
        %v1412 = vrot.slane %v1410, 4
        %v1413 = vshll.u32 %v1317, 16
        %v1415 = vrot.slane %v1413, 5
        %v1416 = vor.u32 %v1412, %v1415
        %v1417 = vrot.slane %v1416, 4
        %v1419 = vshll.u32 %v1318, 16
        %v1421 = vrot.slane %v1419, 5
        %v1422 = vsel %vm749, %v1417, %v1421
        %v1423 = vshrl.u32 %v1318, 16
        %v1425 = vrot.slane %v1423, 4
        %v1426 = vor.u32 %v1425, %v1421
        %v1427 = vrot.slane %v1426, 4
        %v1429 = vshll.u32 %v1347, 16
        %v1431 = vrot.slane %v1429, 5
        %v1432 = vsel %vm749, %v1427, %v1431
        %v1434 = vshrl.u32 %v1319, 16
        %v1436 = vrot.slane %v1434, 4
        %v1437 = vshll.u32 %v1319, 16
        %v1439 = vrot.slane %v1437, 5
        %v1440 = vor.u32 %v1436, %v1439
        %v1441 = vrot.slane %v1440, 4
        %v1443 = vshll.u32 %v1320, 16
        %v1445 = vrot.slane %v1443, 5
        %v1446 = vsel %vm749, %v1441, %v1445
        %v1447 = vshrl.u32 %v1320, 16
        %v1449 = vrot.slane %v1447, 4
        %v1450 = vor.u32 %v1449, %v1445
        %v1451 = vrot.slane %v1450, 4
        %v1453 = vshll.u32 %v1348, 16
        %v1455 = vrot.slane %v1453, 5
        %v1456 = vsel %vm749, %v1451, %v1455
        %v1458 = vshrl.u32 %v1321, 16
        %v1460 = vrot.slane %v1458, 4
        %v1461 = vshll.u32 %v1321, 16
        %v1463 = vrot.slane %v1461, 5
        %v1464 = vor.u32 %v1460, %v1463
        %v1465 = vrot.slane %v1464, 4
        %v1467 = vshll.u32 %v1322, 16
        %v1469 = vrot.slane %v1467, 5
        %v1470 = vsel %vm749, %v1465, %v1469
        %v1471 = vshrl.u32 %v1322, 16
        %v1473 = vrot.slane %v1471, 4
        %v1474 = vor.u32 %v1473, %v1469
        %v1475 = vrot.slane %v1474, 4
        %v1477 = vshll.u32 %v1349, 16
        %v1479 = vrot.slane %v1477, 5
        %v1480 = vsel %vm749, %v1475, %v1479
        %v1482 = vshrl.u32 %v1323, 16
        %v1484 = vrot.slane %v1482, 4
        %v1485 = vshll.u32 %v1323, 16
        %v1487 = vrot.slane %v1485, 5
        %v1488 = vor.u32 %v1484, %v1487
        %v1489 = vrot.slane %v1488, 4
        %v1491 = vshll.u32 %v1324, 16
        %v1493 = vrot.slane %v1491, 5
        %v1494 = vsel %vm749, %v1489, %v1493
        %v1495 = vshrl.u32 %v1324, 16
        %v1497 = vrot.slane %v1495, 4
        %v1498 = vor.u32 %v1497, %v1493
        %v1499 = vrot.slane %v1498, 4
        %v1501 = vshll.u32 %v1350, 16
        %v1503 = vrot.slane %v1501, 5
        %v1504 = vsel %vm749, %v1499, %v1503
        %v1506 = vshrl.u32 %v1325, 16
        %v1508 = vrot.slane %v1506, 4
        %v1509 = vshll.u32 %v1325, 16
        %v1511 = vrot.slane %v1509, 5
        %v1512 = vor.u32 %v1508, %v1511
        %v1513 = vrot.slane %v1512, 4
        %v1515 = vshll.u32 %v1326, 16
        %v1517 = vrot.slane %v1515, 5
        %v1518 = vsel %vm749, %v1513, %v1517
        %v1519 = vshrl.u32 %v1326, 16
        %v1521 = vrot.slane %v1519, 4
        %v1522 = vor.u32 %v1521, %v1517
        %v1523 = vrot.slane %v1522, 4
        %v1525 = vshll.u32 %v1351, 16
        %v1527 = vrot.slane %v1525, 5
        %v1528 = vsel %vm749, %v1523, %v1527
        %v1530 = vshrl.u32 %v1327, 16
        %v1532 = vrot.slane %v1530, 4
        %v1533 = vshll.u32 %v1327, 16
        %v1535 = vrot.slane %v1533, 5
        %v1536 = vor.u32 %v1532, %v1535
        %v1537 = vrot.slane %v1536, 4
        %v1539 = vshll.u32 %v1328, 16
        %v1541 = vrot.slane %v1539, 5
        %v1542 = vsel %vm749, %v1537, %v1541
        %v1543 = vshrl.u32 %v1328, 16
        %v1545 = vrot.slane %v1543, 4
        %v1546 = vor.u32 %v1545, %v1541
        %v1547 = vrot.slane %v1546, 4
        %v1549 = vshll.u32 %v1352, 16
        %v1551 = vrot.slane %v1549, 5
        %v1552 = vsel %vm749, %v1547, %v1551
        %v1554 = vshrl.u32 %v1329, 16
        %v1556 = vrot.slane %v1554, 4
        %v1557 = vshll.u32 %v1329, 16
        %v1559 = vrot.slane %v1557, 5
        %v1560 = vor.u32 %v1556, %v1559
        %v1561 = vrot.slane %v1560, 4
        %v1563 = vshll.u32 %v1330, 16
        %v1565 = vrot.slane %v1563, 5
        %v1566 = vsel %vm749, %v1561, %v1565
        %v1567 = vshrl.u32 %v1330, 16
        %v1569 = vrot.slane %v1567, 4
        %v1570 = vor.u32 %v1569, %v1565
        %v1571 = vrot.slane %v1570, 4
        %v1573 = vshll.u32 %v1353, 16
        %v1575 = vrot.slane %v1573, 5
        %v1576 = vsel %vm749, %v1571, %v1575
        %v1578 = vshrl.u32 %v1331, 16
        %v1580 = vrot.slane %v1578, 4
        %v1581 = vshll.u32 %v1331, 16
        %v1583 = vrot.slane %v1581, 5
        %v1584 = vor.u32 %v1580, %v1583
        %v1585 = vrot.slane %v1584, 4
        %v1587 = vshll.u32 %v1332, 16
        %v1589 = vrot.slane %v1587, 5
        %v1590 = vsel %vm749, %v1585, %v1589
        %v1591 = vshrl.u32 %v1332, 16
        %v1593 = vrot.slane %v1591, 4
        %v1594 = vor.u32 %v1593, %v1589
        %v1595 = vrot.slane %v1594, 4
        %v1597 = vshll.u32 %v1354, 16
        %v1599 = vrot.slane %v1597, 5
        %v1600 = vsel %vm749, %v1595, %v1599
        %v1602 = vshrl.u32 %v1333, 16
        %v1604 = vrot.slane %v1602, 4
        %v1605 = vshll.u32 %v1333, 16
        %v1607 = vrot.slane %v1605, 5
        %v1608 = vor.u32 %v1604, %v1607
        %v1609 = vrot.slane %v1608, 4
        %v1611 = vshll.u32 %v1334, 16
        %v1613 = vrot.slane %v1611, 5
        %v1614 = vsel %vm749, %v1609, %v1613
        %v1615 = vshrl.u32 %v1334, 16
        %v1617 = vrot.slane %v1615, 4
        %v1618 = vor.u32 %v1617, %v1613
        %v1619 = vrot.slane %v1618, 4
        %v1621 = vshll.u32 %v1355, 16
        %v1623 = vrot.slane %v1621, 5
        %v1624 = vsel %vm749, %v1619, %v1623
        %v1626 = vshrl.u32 %v1335, 16
        %v1628 = vrot.slane %v1626, 4
        %v1629 = vshll.u32 %v1335, 16
        %v1631 = vrot.slane %v1629, 5
        %v1632 = vor.u32 %v1628, %v1631
        %v1633 = vrot.slane %v1632, 4
        %v1635 = vshll.u32 %v1336, 16
        %v1637 = vrot.slane %v1635, 5
        %v1638 = vsel %vm749, %v1633, %v1637
        %v1639 = vshrl.u32 %v1336, 16
        %v1641 = vrot.slane %v1639, 4
        %v1642 = vor.u32 %v1641, %v1637
        %v1643 = vrot.slane %v1642, 4
        %v1645 = vshll.u32 %v1356, 16
        %v1647 = vrot.slane %v1645, 5
        %v1648 = vsel %vm749, %v1643, %v1647
        %v1650 = vshrl.u32 %v1337, 16
        %v1652 = vrot.slane %v1650, 4
        %v1653 = vshll.u32 %v1337, 16
        %v1655 = vrot.slane %v1653, 5
        %v1656 = vor.u32 %v1652, %v1655
        %v1657 = vrot.slane %v1656, 4
        %v1659 = vshll.u32 %v1338, 16
        %v1661 = vrot.slane %v1659, 5
        %v1662 = vsel %vm749, %v1657, %v1661
        %v1663 = vshrl.u32 %v1338, 16
        %v1665 = vrot.slane %v1663, 4
        %v1666 = vor.u32 %v1665, %v1661
        %v1667 = vrot.slane %v1666, 4
        %v1669 = vshll.u32 %v1357, 16
        %v1671 = vrot.slane %v1669, 5
        %v1672 = vsel %vm749, %v1667, %v1671
        %v1674 = vshrl.u32 %v1339, 16
        %v1676 = vrot.slane %v1674, 4
        %v1677 = vshll.u32 %v1339, 16
        %v1679 = vrot.slane %v1677, 5
        %v1680 = vor.u32 %v1676, %v1679
        %v1681 = vrot.slane %v1680, 4
        %v1683 = vshll.u32 %v1340, 16
        %v1685 = vrot.slane %v1683, 5
        %v1686 = vsel %vm749, %v1681, %v1685
        %v1687 = vshrl.u32 %v1340, 16
        %v1689 = vrot.slane %v1687, 4
        %v1690 = vor.u32 %v1689, %v1685
        %v1691 = vrot.slane %v1690, 4
        %v1693 = vshll.u32 %v1358, 16
        %v1695 = vrot.slane %v1693, 5
        %v1696 = vsel %vm749, %v1691, %v1695
        %v1698 = vshrl.u32 %v1341, 16
        %v1700 = vrot.slane %v1698, 4
        %v1701 = vshll.u32 %v1341, 16
        %v1703 = vrot.slane %v1701, 5
        %v1704 = vor.u32 %v1700, %v1703
        %v1705 = vrot.slane %v1704, 4
        %v1707 = vshll.u32 %v1342, 16
        %v1709 = vrot.slane %v1707, 5
        %v1710 = vsel %vm749, %v1705, %v1709
        %v1711 = vshrl.u32 %v1342, 16
        %v1713 = vrot.slane %v1711, 4
        %v1714 = vor.u32 %v1713, %v1709
        %v1715 = vrot.slane %v1714, 4
        %v1717 = vshll.u32 %v1359, 16
        %v1719 = vrot.slane %v1717, 5
        %v1720 = vsel %vm749, %v1715, %v1719
        %v1722 = vshrl.u32 %v1343, 16
        %v1724 = vrot.slane %v1722, 4
        %v1725 = vshll.u32 %v1343, 16
        %v1727 = vrot.slane %v1725, 5
        %v1728 = vor.u32 %v1724, %v1727
        %v1729 = vrot.slane %v1728, 4
        %v1731 = vshll.u32 %v1344, 16
        %v1733 = vrot.slane %v1731, 5
        %v1734 = vsel %vm749, %v1729, %v1733
        %v1735 = vshrl.u32 %v1344, 16
        %v1737 = vrot.slane %v1735, 4
        %v1738 = vor.u32 %v1737, %v1733
        %v1739 = vrot.slane %v1738, 4
        %v1741 = vshll.u32 %v1360, 16
        %v1743 = vrot.slane %v1741, 5
        %v1744 = vsel %vm749, %v1739, %v1743
        %v1745 = vld [vmem:[%s581] sm:$0xe]
        %v1746 = vld [vmem:[%s581 + $0xc] sm:$0xe]
        %v1747 = vld [vmem:[%s581 + $0x18] sm:$0xe]
        %v1748 = vld [vmem:[%s581 + $0x24] sm:$0xe]
        %v1749 = vld [vmem:[%s581 + $0x30] sm:$0xe]
        %v1750 = vld [vmem:[%s581 + $0x3c] sm:$0xe]
        %v1751 = vld [vmem:[%s581 + $0x48] sm:$0xe]
        %v1752 = vld [vmem:[%s581 + $0x54] sm:$0xe]
        %v1753 = vld [vmem:[%s581 + $0x60] sm:$0xe]
        %v1754 = vld [vmem:[%s581 + $0x6c] sm:$0xe]
        %v1755 = vld [vmem:[%s581 + $0x78] sm:$0xe]
        %v1756 = vld [vmem:[%s581 + $0x84] sm:$0xe]
        %v1757 = vld [vmem:[%s581 + $0x90] sm:$0xe]
        %v1758 = vld [vmem:[%s581 + $0x9c] sm:$0xe]
        %v1759 = vld [vmem:[%s581 + $0xa8] sm:$0xe]
        %v1760 = vld [vmem:[%s581 + $0xb4] sm:$0xe]
        %v1809 = vrot.slane %v1745, 5
        %v1810 = vrot.slane %v1809, 4
        %v1811 = vrot.slane %v1314, 5
        %v1812 = vsel %vm1200, %v1810, %v1811
        %v1813 = vrot.slane %v1811, 4
        %v1814 = vrot.slane %v1345, 5
        %v1815 = vsel %vm1200, %v1813, %v1814
        %v1816 = vrot.slane %v1746, 5
        %v1817 = vrot.slane %v1816, 4
        %v1818 = vrot.slane %v1316, 5
        %v1819 = vsel %vm1200, %v1817, %v1818
        %v1820 = vrot.slane %v1818, 4
        %v1821 = vrot.slane %v1346, 5
        %v1822 = vsel %vm1200, %v1820, %v1821
        %v1823 = vrot.slane %v1747, 5
        %v1824 = vrot.slane %v1823, 4
        %v1825 = vrot.slane %v1318, 5
        %v1826 = vsel %vm1200, %v1824, %v1825
        %v1827 = vrot.slane %v1825, 4
        %v1828 = vrot.slane %v1347, 5
        %v1829 = vsel %vm1200, %v1827, %v1828
        %v1830 = vrot.slane %v1748, 5
        %v1831 = vrot.slane %v1830, 4
        %v1832 = vrot.slane %v1320, 5
        %v1833 = vsel %vm1200, %v1831, %v1832
        %v1834 = vrot.slane %v1832, 4
        %v1835 = vrot.slane %v1348, 5
        %v1836 = vsel %vm1200, %v1834, %v1835
        %v1837 = vrot.slane %v1749, 5
        %v1838 = vrot.slane %v1837, 4
        %v1839 = vrot.slane %v1322, 5
        %v1840 = vsel %vm1200, %v1838, %v1839
        %v1841 = vrot.slane %v1839, 4
        %v1842 = vrot.slane %v1349, 5
        %v1843 = vsel %vm1200, %v1841, %v1842
        %v1844 = vrot.slane %v1750, 5
        %v1845 = vrot.slane %v1844, 4
        %v1846 = vrot.slane %v1324, 5
        %v1847 = vsel %vm1200, %v1845, %v1846
        %v1848 = vrot.slane %v1846, 4
        %v1849 = vrot.slane %v1350, 5
        %v1850 = vsel %vm1200, %v1848, %v1849
        %v1851 = vrot.slane %v1751, 5
        %v1852 = vrot.slane %v1851, 4
        %v1853 = vrot.slane %v1326, 5
        %v1854 = vsel %vm1200, %v1852, %v1853
        %v1855 = vrot.slane %v1853, 4
        %v1856 = vrot.slane %v1351, 5
        %v1857 = vsel %vm1200, %v1855, %v1856
        %v1858 = vrot.slane %v1752, 5
        %v1859 = vrot.slane %v1858, 4
        %v1860 = vrot.slane %v1328, 5
        %v1861 = vsel %vm1200, %v1859, %v1860
        %v1862 = vrot.slane %v1860, 4
        %v1863 = vrot.slane %v1352, 5
        %v1864 = vsel %vm1200, %v1862, %v1863
        %v1865 = vrot.slane %v1753, 5
        %v1866 = vrot.slane %v1865, 4
        %v1867 = vrot.slane %v1330, 5
        %v1868 = vsel %vm1200, %v1866, %v1867
        %v1869 = vrot.slane %v1867, 4
        %v1870 = vrot.slane %v1353, 5
        %v1871 = vsel %vm1200, %v1869, %v1870
        %v1872 = vrot.slane %v1754, 5
        %v1873 = vrot.slane %v1872, 4
        %v1874 = vrot.slane %v1332, 5
        %v1875 = vsel %vm1200, %v1873, %v1874
        %v1876 = vrot.slane %v1874, 4
        %v1877 = vrot.slane %v1354, 5
        %v1878 = vsel %vm1200, %v1876, %v1877
        %v1879 = vrot.slane %v1755, 5
        %v1880 = vrot.slane %v1879, 4
        %v1881 = vrot.slane %v1334, 5
        %v1882 = vsel %vm1200, %v1880, %v1881
        %v1883 = vrot.slane %v1881, 4
        %v1884 = vrot.slane %v1355, 5
        %v1885 = vsel %vm1200, %v1883, %v1884
        %v1886 = vrot.slane %v1756, 5
        %v1887 = vrot.slane %v1886, 4
        %v1888 = vrot.slane %v1336, 5
        %v1889 = vsel %vm1200, %v1887, %v1888
        %v1890 = vrot.slane %v1888, 4
        %v1891 = vrot.slane %v1356, 5
        %v1892 = vsel %vm1200, %v1890, %v1891
        %v1893 = vrot.slane %v1757, 5
        %v1894 = vrot.slane %v1893, 4
        %v1895 = vrot.slane %v1338, 5
        %v1896 = vsel %vm1200, %v1894, %v1895
        %v1897 = vrot.slane %v1895, 4
        %v1898 = vrot.slane %v1357, 5
        %v1899 = vsel %vm1200, %v1897, %v1898
        %v1900 = vrot.slane %v1758, 5
        %v1901 = vrot.slane %v1900, 4
        %v1902 = vrot.slane %v1340, 5
        %v1903 = vsel %vm1200, %v1901, %v1902
        %v1904 = vrot.slane %v1902, 4
        %v1905 = vrot.slane %v1358, 5
        %v1906 = vsel %vm1200, %v1904, %v1905
        %v1907 = vrot.slane %v1759, 5
        %v1908 = vrot.slane %v1907, 4
        %v1909 = vrot.slane %v1342, 5
        %v1910 = vsel %vm1200, %v1908, %v1909
        %v1911 = vrot.slane %v1909, 4
        %v1912 = vrot.slane %v1359, 5
        %v1913 = vsel %vm1200, %v1911, %v1912
        %v1914 = vrot.slane %v1760, 5
        %v1915 = vrot.slane %v1914, 4
        %v1916 = vrot.slane %v1344, 5
        %v1917 = vsel %vm1200, %v1915, %v1916
        %v1918 = vrot.slane %v1916, 4
        %v1919 = vrot.slane %v1360, 5
        %v1920 = vsel %vm1200, %v1918, %v1919
        %s1921 = scalar_lea.vmem [#allocation2], 24
        %v1922 = vld [vmem:[%s1921] sm:$0xf]
        %v1923 = vld [vmem:[%s1921 + $0x4] sm:$0xf]
        %v1924 = vld [vmem:[%s1921 + $0xc] sm:$0xf]
        %v1925 = vld [vmem:[%s1921 + $0x10] sm:$0xf]
        %v1926 = vld [vmem:[%s1921 + $0x18] sm:$0xf]
        %v1927 = vld [vmem:[%s1921 + $0x1c] sm:$0xf]
        %v1928 = vld [vmem:[%s1921 + $0x24] sm:$0xf]
        %v1929 = vld [vmem:[%s1921 + $0x28] sm:$0xf]
        %v1930 = vld [vmem:[%s1921 + $0x30] sm:$0xf]
        %v1931 = vld [vmem:[%s1921 + $0x34] sm:$0xf]
        %v1932 = vld [vmem:[%s1921 + $0x3c] sm:$0xf]
        %v1933 = vld [vmem:[%s1921 + $0x40] sm:$0xf]
        %v1934 = vld [vmem:[%s1921 + $0x48] sm:$0xf]
        %v1935 = vld [vmem:[%s1921 + $0x4c] sm:$0xf]
        %v1936 = vld [vmem:[%s1921 + $0x54] sm:$0xf]
        %v1937 = vld [vmem:[%s1921 + $0x58] sm:$0xf]
        %v1938 = vld [vmem:[%s1921 + $0x60] sm:$0xf]
        %v1939 = vld [vmem:[%s1921 + $0x64] sm:$0xf]
        %v1940 = vld [vmem:[%s1921 + $0x6c] sm:$0xf]
        %v1941 = vld [vmem:[%s1921 + $0x70] sm:$0xf]
        %v1942 = vld [vmem:[%s1921 + $0x78] sm:$0xf]
        %v1943 = vld [vmem:[%s1921 + $0x7c] sm:$0xf]
        %v1944 = vld [vmem:[%s1921 + $0x84] sm:$0xf]
        %v1945 = vld [vmem:[%s1921 + $0x88] sm:$0xf]
        %v1946 = vld [vmem:[%s1921 + $0x90] sm:$0xf]
        %v1947 = vld [vmem:[%s1921 + $0x94] sm:$0xf]
        %v1948 = vld [vmem:[%s1921 + $0x9c] sm:$0xf]
        %v1949 = vld [vmem:[%s1921 + $0xa0] sm:$0xf]
        %v1950 = vld [vmem:[%s1921 + $0xa8] sm:$0xf]
        %v1951 = vld [vmem:[%s1921 + $0xac] sm:$0xf]
        %v1952 = vld [vmem:[%s1921 + $0xb4] sm:$0xf]
        %v1953 = vld [vmem:[%s1921 + $0xb8] sm:$0xf]
        %v1954 = vld [vmem:[%s1921 + $0x8] sm:$0x1]
        %v1955 = vld [vmem:[%s1921 + $0x14] sm:$0x1]
        %v1956 = vld [vmem:[%s1921 + $0x20] sm:$0x1]
        %v1957 = vld [vmem:[%s1921 + $0x2c] sm:$0x1]
        %v1958 = vld [vmem:[%s1921 + $0x38] sm:$0x1]
        %v1959 = vld [vmem:[%s1921 + $0x44] sm:$0x1]
        %v1960 = vld [vmem:[%s1921 + $0x50] sm:$0x1]
        %v1961 = vld [vmem:[%s1921 + $0x5c] sm:$0x1]
        %v1962 = vld [vmem:[%s1921 + $0x68] sm:$0x1]
        %v1963 = vld [vmem:[%s1921 + $0x74] sm:$0x1]
        %v1964 = vld [vmem:[%s1921 + $0x80] sm:$0x1]
        %v1965 = vld [vmem:[%s1921 + $0x8c] sm:$0x1]
        %v1966 = vld [vmem:[%s1921 + $0x98] sm:$0x1]
        %v1967 = vld [vmem:[%s1921 + $0xa4] sm:$0x1]
        %v1968 = vld [vmem:[%s1921 + $0xb0] sm:$0x1]
        %v1969 = vld [vmem:[%s1921 + $0xbc] sm:$0x1]
        %v1971 = vshrl.u32 %v1922, 16
        %v1973 = vrot.slane %v1971, 4
        %v1974 = vshll.u32 %v1922, 16
        %v1976 = vrot.slane %v1974, 5
        %v1977 = vor.u32 %v1973, %v1976
        %v1978 = vrot.slane %v1977, 4
        %v1980 = vshll.u32 %v1923, 16
        %v1982 = vrot.slane %v1980, 5
        %v1983 = vsel %vm749, %v1978, %v1982
        %v1984 = vshrl.u32 %v1923, 16
        %v1986 = vrot.slane %v1984, 4
        %v1987 = vor.u32 %v1986, %v1982
        %v1988 = vrot.slane %v1987, 4
        %v1990 = vshll.u32 %v1954, 16
        %v1992 = vrot.slane %v1990, 5
        %v1993 = vsel %vm749, %v1988, %v1992
        %v1995 = vshrl.u32 %v1924, 16
        %v1997 = vrot.slane %v1995, 4
        %v1998 = vshll.u32 %v1924, 16
        %v2000 = vrot.slane %v1998, 5
        %v2001 = vor.u32 %v1997, %v2000
        %v2002 = vrot.slane %v2001, 4
        %v2004 = vshll.u32 %v1925, 16
        %v2006 = vrot.slane %v2004, 5
        %v2007 = vsel %vm749, %v2002, %v2006
        %v2008 = vshrl.u32 %v1925, 16
        %v2010 = vrot.slane %v2008, 4
        %v2011 = vor.u32 %v2010, %v2006
        %v2012 = vrot.slane %v2011, 4
        %v2014 = vshll.u32 %v1955, 16
        %v2016 = vrot.slane %v2014, 5
        %v2017 = vsel %vm749, %v2012, %v2016
        %v2019 = vshrl.u32 %v1926, 16
        %v2021 = vrot.slane %v2019, 4
        %v2022 = vshll.u32 %v1926, 16
        %v2024 = vrot.slane %v2022, 5
        %v2025 = vor.u32 %v2021, %v2024
        %v2026 = vrot.slane %v2025, 4
        %v2028 = vshll.u32 %v1927, 16
        %v2030 = vrot.slane %v2028, 5
        %v2031 = vsel %vm749, %v2026, %v2030
        %v2032 = vshrl.u32 %v1927, 16
        %v2034 = vrot.slane %v2032, 4
        %v2035 = vor.u32 %v2034, %v2030
        %v2036 = vrot.slane %v2035, 4
        %v2038 = vshll.u32 %v1956, 16
        %v2040 = vrot.slane %v2038, 5
        %v2041 = vsel %vm749, %v2036, %v2040
        %v2043 = vshrl.u32 %v1928, 16
        %v2045 = vrot.slane %v2043, 4
        %v2046 = vshll.u32 %v1928, 16
        %v2048 = vrot.slane %v2046, 5
        %v2049 = vor.u32 %v2045, %v2048
        %v2050 = vrot.slane %v2049, 4
        %v2052 = vshll.u32 %v1929, 16
        %v2054 = vrot.slane %v2052, 5
        %v2055 = vsel %vm749, %v2050, %v2054
        %v2056 = vshrl.u32 %v1929, 16
        %v2058 = vrot.slane %v2056, 4
        %v2059 = vor.u32 %v2058, %v2054
        %v2060 = vrot.slane %v2059, 4
        %v2062 = vshll.u32 %v1957, 16
        %v2064 = vrot.slane %v2062, 5
        %v2065 = vsel %vm749, %v2060, %v2064
        %v2067 = vshrl.u32 %v1930, 16
        %v2069 = vrot.slane %v2067, 4
        %v2070 = vshll.u32 %v1930, 16
        %v2072 = vrot.slane %v2070, 5
        %v2073 = vor.u32 %v2069, %v2072
        %v2074 = vrot.slane %v2073, 4
        %v2076 = vshll.u32 %v1931, 16
        %v2078 = vrot.slane %v2076, 5
        %v2079 = vsel %vm749, %v2074, %v2078
        %v2080 = vshrl.u32 %v1931, 16
        %v2082 = vrot.slane %v2080, 4
        %v2083 = vor.u32 %v2082, %v2078
        %v2084 = vrot.slane %v2083, 4
        %v2086 = vshll.u32 %v1958, 16
        %v2088 = vrot.slane %v2086, 5
        %v2089 = vsel %vm749, %v2084, %v2088
        %v2091 = vshrl.u32 %v1932, 16
        %v2093 = vrot.slane %v2091, 4
        %v2094 = vshll.u32 %v1932, 16
        %v2096 = vrot.slane %v2094, 5
        %v2097 = vor.u32 %v2093, %v2096
        %v2098 = vrot.slane %v2097, 4
        %v2100 = vshll.u32 %v1933, 16
        %v2102 = vrot.slane %v2100, 5
        %v2103 = vsel %vm749, %v2098, %v2102
        %v2104 = vshrl.u32 %v1933, 16
        %v2106 = vrot.slane %v2104, 4
        %v2107 = vor.u32 %v2106, %v2102
        %v2108 = vrot.slane %v2107, 4
        %v2110 = vshll.u32 %v1959, 16
        %v2112 = vrot.slane %v2110, 5
        %v2113 = vsel %vm749, %v2108, %v2112
        %v2115 = vshrl.u32 %v1934, 16
        %v2117 = vrot.slane %v2115, 4
        %v2118 = vshll.u32 %v1934, 16
        %v2120 = vrot.slane %v2118, 5
        %v2121 = vor.u32 %v2117, %v2120
        %v2122 = vrot.slane %v2121, 4
        %v2124 = vshll.u32 %v1935, 16
        %v2126 = vrot.slane %v2124, 5
        %v2127 = vsel %vm749, %v2122, %v2126
        %v2128 = vshrl.u32 %v1935, 16
        %v2130 = vrot.slane %v2128, 4
        %v2131 = vor.u32 %v2130, %v2126
        %v2132 = vrot.slane %v2131, 4
        %v2134 = vshll.u32 %v1960, 16
        %v2136 = vrot.slane %v2134, 5
        %v2137 = vsel %vm749, %v2132, %v2136
        %v2139 = vshrl.u32 %v1936, 16
        %v2141 = vrot.slane %v2139, 4
        %v2142 = vshll.u32 %v1936, 16
        %v2144 = vrot.slane %v2142, 5
        %v2145 = vor.u32 %v2141, %v2144
        %v2146 = vrot.slane %v2145, 4
        %v2148 = vshll.u32 %v1937, 16
        %v2150 = vrot.slane %v2148, 5
        %v2151 = vsel %vm749, %v2146, %v2150
        %v2152 = vshrl.u32 %v1937, 16
        %v2154 = vrot.slane %v2152, 4
        %v2155 = vor.u32 %v2154, %v2150
        %v2156 = vrot.slane %v2155, 4
        %v2158 = vshll.u32 %v1961, 16
        %v2160 = vrot.slane %v2158, 5
        %v2161 = vsel %vm749, %v2156, %v2160
        %v2163 = vshrl.u32 %v1938, 16
        %v2165 = vrot.slane %v2163, 4
        %v2166 = vshll.u32 %v1938, 16
        %v2168 = vrot.slane %v2166, 5
        %v2169 = vor.u32 %v2165, %v2168
        %v2170 = vrot.slane %v2169, 4
        %v2172 = vshll.u32 %v1939, 16
        %v2174 = vrot.slane %v2172, 5
        %v2175 = vsel %vm749, %v2170, %v2174
        %v2176 = vshrl.u32 %v1939, 16
        %v2178 = vrot.slane %v2176, 4
        %v2179 = vor.u32 %v2178, %v2174
        %v2180 = vrot.slane %v2179, 4
        %v2182 = vshll.u32 %v1962, 16
        %v2184 = vrot.slane %v2182, 5
        %v2185 = vsel %vm749, %v2180, %v2184
        %v2187 = vshrl.u32 %v1940, 16
        %v2189 = vrot.slane %v2187, 4
        %v2190 = vshll.u32 %v1940, 16
        %v2192 = vrot.slane %v2190, 5
        %v2193 = vor.u32 %v2189, %v2192
        %v2194 = vrot.slane %v2193, 4
        %v2196 = vshll.u32 %v1941, 16
        %v2198 = vrot.slane %v2196, 5
        %v2199 = vsel %vm749, %v2194, %v2198
        %v2200 = vshrl.u32 %v1941, 16
        %v2202 = vrot.slane %v2200, 4
        %v2203 = vor.u32 %v2202, %v2198
        %v2204 = vrot.slane %v2203, 4
        %v2206 = vshll.u32 %v1963, 16
        %v2208 = vrot.slane %v2206, 5
        %v2209 = vsel %vm749, %v2204, %v2208
        %v2211 = vshrl.u32 %v1942, 16
        %v2213 = vrot.slane %v2211, 4
        %v2214 = vshll.u32 %v1942, 16
        %v2216 = vrot.slane %v2214, 5
        %v2217 = vor.u32 %v2213, %v2216
        %v2218 = vrot.slane %v2217, 4
        %v2220 = vshll.u32 %v1943, 16
        %v2222 = vrot.slane %v2220, 5
        %v2223 = vsel %vm749, %v2218, %v2222
        %v2224 = vshrl.u32 %v1943, 16
        %v2226 = vrot.slane %v2224, 4
        %v2227 = vor.u32 %v2226, %v2222
        %v2228 = vrot.slane %v2227, 4
        %v2230 = vshll.u32 %v1964, 16
        %v2232 = vrot.slane %v2230, 5
        %v2233 = vsel %vm749, %v2228, %v2232
        %v2235 = vshrl.u32 %v1944, 16
        %v2237 = vrot.slane %v2235, 4
        %v2238 = vshll.u32 %v1944, 16
        %v2240 = vrot.slane %v2238, 5
        %v2241 = vor.u32 %v2237, %v2240
        %v2242 = vrot.slane %v2241, 4
        %v2244 = vshll.u32 %v1945, 16
        %v2246 = vrot.slane %v2244, 5
        %v2247 = vsel %vm749, %v2242, %v2246
        %v2248 = vshrl.u32 %v1945, 16
        %v2250 = vrot.slane %v2248, 4
        %v2251 = vor.u32 %v2250, %v2246
        %v2252 = vrot.slane %v2251, 4
        %v2254 = vshll.u32 %v1965, 16
        %v2256 = vrot.slane %v2254, 5
        %v2257 = vsel %vm749, %v2252, %v2256
        %v2259 = vshrl.u32 %v1946, 16
        %v2261 = vrot.slane %v2259, 4
        %v2262 = vshll.u32 %v1946, 16
        %v2264 = vrot.slane %v2262, 5
        %v2265 = vor.u32 %v2261, %v2264
        %v2266 = vrot.slane %v2265, 4
        %v2268 = vshll.u32 %v1947, 16
        %v2270 = vrot.slane %v2268, 5
        %v2271 = vsel %vm749, %v2266, %v2270
        %v2272 = vshrl.u32 %v1947, 16
        %v2274 = vrot.slane %v2272, 4
        %v2275 = vor.u32 %v2274, %v2270
        %v2276 = vrot.slane %v2275, 4
        %v2278 = vshll.u32 %v1966, 16
        %v2280 = vrot.slane %v2278, 5
        %v2281 = vsel %vm749, %v2276, %v2280
        %v2283 = vshrl.u32 %v1948, 16
        %v2285 = vrot.slane %v2283, 4
        %v2286 = vshll.u32 %v1948, 16
        %v2288 = vrot.slane %v2286, 5
        %v2289 = vor.u32 %v2285, %v2288
        %v2290 = vrot.slane %v2289, 4
        %v2292 = vshll.u32 %v1949, 16
        %v2294 = vrot.slane %v2292, 5
        %v2295 = vsel %vm749, %v2290, %v2294
        %v2296 = vshrl.u32 %v1949, 16
        %v2298 = vrot.slane %v2296, 4
        %v2299 = vor.u32 %v2298, %v2294
        %v2300 = vrot.slane %v2299, 4
        %v2302 = vshll.u32 %v1967, 16
        %v2304 = vrot.slane %v2302, 5
        %v2305 = vsel %vm749, %v2300, %v2304
        %v2307 = vshrl.u32 %v1950, 16
        %v2309 = vrot.slane %v2307, 4
        %v2310 = vshll.u32 %v1950, 16
        %v2312 = vrot.slane %v2310, 5
        %v2313 = vor.u32 %v2309, %v2312
        %v2314 = vrot.slane %v2313, 4
        %v2316 = vshll.u32 %v1951, 16
        %v2318 = vrot.slane %v2316, 5
        %v2319 = vsel %vm749, %v2314, %v2318
        %v2320 = vshrl.u32 %v1951, 16
        %v2322 = vrot.slane %v2320, 4
        %v2323 = vor.u32 %v2322, %v2318
        %v2324 = vrot.slane %v2323, 4
        %v2326 = vshll.u32 %v1968, 16
        %v2328 = vrot.slane %v2326, 5
        %v2329 = vsel %vm749, %v2324, %v2328
        %v2331 = vshrl.u32 %v1952, 16
        %v2333 = vrot.slane %v2331, 4
        %v2334 = vshll.u32 %v1952, 16
        %v2336 = vrot.slane %v2334, 5
        %v2337 = vor.u32 %v2333, %v2336
        %v2338 = vrot.slane %v2337, 4
        %v2340 = vshll.u32 %v1953, 16
        %v2342 = vrot.slane %v2340, 5
        %v2343 = vsel %vm749, %v2338, %v2342
        %v2344 = vshrl.u32 %v1953, 16
        %v2346 = vrot.slane %v2344, 4
        %v2347 = vor.u32 %v2346, %v2342
        %v2348 = vrot.slane %v2347, 4
        %v2350 = vshll.u32 %v1969, 16
        %v2352 = vrot.slane %v2350, 5
        %v2353 = vsel %vm749, %v2348, %v2352
        %v2354 = vld [vmem:[%s1921] sm:$0xe]
        %v2355 = vld [vmem:[%s1921 + $0xc] sm:$0xe]
        %v2356 = vld [vmem:[%s1921 + $0x18] sm:$0xe]
        %v2357 = vld [vmem:[%s1921 + $0x24] sm:$0xe]
        %v2358 = vld [vmem:[%s1921 + $0x30] sm:$0xe]
        %v2359 = vld [vmem:[%s1921 + $0x3c] sm:$0xe]
        %v2360 = vld [vmem:[%s1921 + $0x48] sm:$0xe]
        %v2361 = vld [vmem:[%s1921 + $0x54] sm:$0xe]
        %v2362 = vld [vmem:[%s1921 + $0x60] sm:$0xe]
        %v2363 = vld [vmem:[%s1921 + $0x6c] sm:$0xe]
        %v2364 = vld [vmem:[%s1921 + $0x78] sm:$0xe]
        %v2365 = vld [vmem:[%s1921 + $0x84] sm:$0xe]
        %v2366 = vld [vmem:[%s1921 + $0x90] sm:$0xe]
        %v2367 = vld [vmem:[%s1921 + $0x9c] sm:$0xe]
        %v2368 = vld [vmem:[%s1921 + $0xa8] sm:$0xe]
        %v2369 = vld [vmem:[%s1921 + $0xb4] sm:$0xe]
        %v2418 = vrot.slane %v2354, 5
        %v2419 = vrot.slane %v2418, 4
        %v2420 = vrot.slane %v1923, 5
        %v2421 = vsel %vm1200, %v2419, %v2420
        %v2422 = vrot.slane %v2420, 4
        %v2423 = vrot.slane %v1954, 5
        %v2424 = vsel %vm1200, %v2422, %v2423
        %v2425 = vrot.slane %v2355, 5
        %v2426 = vrot.slane %v2425, 4
        %v2427 = vrot.slane %v1925, 5
        %v2428 = vsel %vm1200, %v2426, %v2427
        %v2429 = vrot.slane %v2427, 4
        %v2430 = vrot.slane %v1955, 5
        %v2431 = vsel %vm1200, %v2429, %v2430
        %v2432 = vrot.slane %v2356, 5
        %v2433 = vrot.slane %v2432, 4
        %v2434 = vrot.slane %v1927, 5
        %v2435 = vsel %vm1200, %v2433, %v2434
        %v2436 = vrot.slane %v2434, 4
        %v2437 = vrot.slane %v1956, 5
        %v2438 = vsel %vm1200, %v2436, %v2437
        %v2439 = vrot.slane %v2357, 5
        %v2440 = vrot.slane %v2439, 4
        %v2441 = vrot.slane %v1929, 5
        %v2442 = vsel %vm1200, %v2440, %v2441
        %v2443 = vrot.slane %v2441, 4
        %v2444 = vrot.slane %v1957, 5
        %v2445 = vsel %vm1200, %v2443, %v2444
        %v2446 = vrot.slane %v2358, 5
        %v2447 = vrot.slane %v2446, 4
        %v2448 = vrot.slane %v1931, 5
        %v2449 = vsel %vm1200, %v2447, %v2448
        %v2450 = vrot.slane %v2448, 4
        %v2451 = vrot.slane %v1958, 5
        %v2452 = vsel %vm1200, %v2450, %v2451
        %v2453 = vrot.slane %v2359, 5
        %v2454 = vrot.slane %v2453, 4
        %v2455 = vrot.slane %v1933, 5
        %v2456 = vsel %vm1200, %v2454, %v2455
        %v2457 = vrot.slane %v2455, 4
        %v2458 = vrot.slane %v1959, 5
        %v2459 = vsel %vm1200, %v2457, %v2458
        %v2460 = vrot.slane %v2360, 5
        %v2461 = vrot.slane %v2460, 4
        %v2462 = vrot.slane %v1935, 5
        %v2463 = vsel %vm1200, %v2461, %v2462
        %v2464 = vrot.slane %v2462, 4
        %v2465 = vrot.slane %v1960, 5
        %v2466 = vsel %vm1200, %v2464, %v2465
        %v2467 = vrot.slane %v2361, 5
        %v2468 = vrot.slane %v2467, 4
        %v2469 = vrot.slane %v1937, 5
        %v2470 = vsel %vm1200, %v2468, %v2469
        %v2471 = vrot.slane %v2469, 4
        %v2472 = vrot.slane %v1961, 5
        %v2473 = vsel %vm1200, %v2471, %v2472
        %v2474 = vrot.slane %v2362, 5
        %v2475 = vrot.slane %v2474, 4
        %v2476 = vrot.slane %v1939, 5
        %v2477 = vsel %vm1200, %v2475, %v2476
        %v2478 = vrot.slane %v2476, 4
        %v2479 = vrot.slane %v1962, 5
        %v2480 = vsel %vm1200, %v2478, %v2479
        %v2481 = vrot.slane %v2363, 5
        %v2482 = vrot.slane %v2481, 4
        %v2483 = vrot.slane %v1941, 5
        %v2484 = vsel %vm1200, %v2482, %v2483
        %v2485 = vrot.slane %v2483, 4
        %v2486 = vrot.slane %v1963, 5
        %v2487 = vsel %vm1200, %v2485, %v2486
        %v2488 = vrot.slane %v2364, 5
        %v2489 = vrot.slane %v2488, 4
        %v2490 = vrot.slane %v1943, 5
        %v2491 = vsel %vm1200, %v2489, %v2490
        %v2492 = vrot.slane %v2490, 4
        %v2493 = vrot.slane %v1964, 5
        %v2494 = vsel %vm1200, %v2492, %v2493
        %v2495 = vrot.slane %v2365, 5
        %v2496 = vrot.slane %v2495, 4
        %v2497 = vrot.slane %v1945, 5
        %v2498 = vsel %vm1200, %v2496, %v2497
        %v2499 = vrot.slane %v2497, 4
        %v2500 = vrot.slane %v1965, 5
        %v2501 = vsel %vm1200, %v2499, %v2500
        %v2502 = vrot.slane %v2366, 5
        %v2503 = vrot.slane %v2502, 4
        %v2504 = vrot.slane %v1947, 5
        %v2505 = vsel %vm1200, %v2503, %v2504
        %v2506 = vrot.slane %v2504, 4
        %v2507 = vrot.slane %v1966, 5
        %v2508 = vsel %vm1200, %v2506, %v2507
        %v2509 = vrot.slane %v2367, 5
        %v2510 = vrot.slane %v2509, 4
        %v2511 = vrot.slane %v1949, 5
        %v2512 = vsel %vm1200, %v2510, %v2511
        %v2513 = vrot.slane %v2511, 4
        %v2514 = vrot.slane %v1967, 5
        %v2515 = vsel %vm1200, %v2513, %v2514
        %v2516 = vrot.slane %v2368, 5
        %v2517 = vrot.slane %v2516, 4
        %v2518 = vrot.slane %v1951, 5
        %v2519 = vsel %vm1200, %v2517, %v2518
        %v2520 = vrot.slane %v2518, 4
        %v2521 = vrot.slane %v1968, 5
        %v2522 = vsel %vm1200, %v2520, %v2521
        %v2523 = vrot.slane %v2369, 5
        %v2524 = vrot.slane %v2523, 4
        %v2525 = vrot.slane %v1953, 5
        %v2526 = vsel %vm1200, %v2524, %v2525
        %v2527 = vrot.slane %v2525, 4
        %v2528 = vrot.slane %v1969, 5
        %v2529 = vsel %vm1200, %v2527, %v2528
        %v2546 = vunpack.c.l.b16 %v699
        %v2547 = vunpack.c.l.b16 %v700
        %v2548 = vunpack.c.l.b16 %v701
        %v2549 = vunpack.c.l.b16 %v702
        %v2550 = vunpack.c.l.b16 %v703
        %v2551 = vunpack.c.l.b16 %v704
        %v2552 = vunpack.c.l.b16 %v705
        %v2553 = vunpack.c.l.b16 %v706
        %v2554 = vunpack.c.l.b16 %v707
        %v2555 = vunpack.c.l.b16 %v708
        %v2556 = vunpack.c.l.b16 %v709
        %v2557 = vunpack.c.l.b16 %v710
        %v2558 = vunpack.c.l.b16 %v711
        %v2559 = vunpack.c.l.b16 %v712
        %v2560 = vunpack.c.l.b16 %v713
        %v2561 = vunpack.c.l.b16 %v714
        %v2562 = vunpack.c.l.b16 %v715
        %v2563 = vunpack.c.l.b16 %v716
        %v2564 = vunpack.c.l.b16 %v717
        %v2565 = vunpack.c.l.b16 %v718
        %v2566 = vunpack.c.l.b16 %v719
        %v2567 = vunpack.c.l.b16 %v720
        %v2568 = vunpack.c.l.b16 %v721
        %v2569 = vunpack.c.l.b16 %v722
        %v2570 = vunpack.c.l.b16 %v723
        %v2571 = vunpack.c.l.b16 %v724
        %v2572 = vunpack.c.l.b16 %v725
        %v2573 = vunpack.c.l.b16 %v726
        %v2574 = vunpack.c.l.b16 %v727
        %v2575 = vunpack.c.l.b16 %v728
        %v2576 = vunpack.c.l.b16 %v729
        %v2577 = vunpack.c.l.b16 %v730
        %v2578 = vpack.c.b16 %v2547, %v2546
        %v2579 = vpack.c.b16 %v2549, %v2548
        %v2580 = vpack.c.b16 %v2551, %v2550
        %v2581 = vpack.c.b16 %v2553, %v2552
        %v2582 = vpack.c.b16 %v2555, %v2554
        %v2583 = vpack.c.b16 %v2557, %v2556
        %v2584 = vpack.c.b16 %v2559, %v2558
        %v2585 = vpack.c.b16 %v2561, %v2560
        %v2586 = vpack.c.b16 %v2563, %v2562
        %v2587 = vpack.c.b16 %v2565, %v2564
        %v2588 = vpack.c.b16 %v2567, %v2566
        %v2589 = vpack.c.b16 %v2569, %v2568
        %v2590 = vpack.c.b16 %v2571, %v2570
        %v2591 = vpack.c.b16 %v2573, %v2572
        %v2592 = vpack.c.b16 %v2575, %v2574
        %v2593 = vpack.c.b16 %v2577, %v2576
        %v2594 = vunpack.c.l.b16 %v763
        %v2595 = vunpack.c.l.b16 %v773
        %v2596 = vunpack.c.l.b16 %v787
        %v2597 = vunpack.c.l.b16 %v797
        %v2598 = vunpack.c.l.b16 %v811
        %v2599 = vunpack.c.l.b16 %v821
        %v2600 = vunpack.c.l.b16 %v835
        %v2601 = vunpack.c.l.b16 %v845
        %v2602 = vunpack.c.l.b16 %v859
        %v2603 = vunpack.c.l.b16 %v869
        %v2604 = vunpack.c.l.b16 %v883
        %v2605 = vunpack.c.l.b16 %v893
        %v2606 = vunpack.c.l.b16 %v907
        %v2607 = vunpack.c.l.b16 %v917
        %v2608 = vunpack.c.l.b16 %v931
        %v2609 = vunpack.c.l.b16 %v941
        %v2610 = vunpack.c.l.b16 %v955
        %v2611 = vunpack.c.l.b16 %v965
        %v2612 = vunpack.c.l.b16 %v979
        %v2613 = vunpack.c.l.b16 %v989
        %v2614 = vunpack.c.l.b16 %v1003
        %v2615 = vunpack.c.l.b16 %v1013
        %v2616 = vunpack.c.l.b16 %v1027
        %v2617 = vunpack.c.l.b16 %v1037
        %v2618 = vunpack.c.l.b16 %v1051
        %v2619 = vunpack.c.l.b16 %v1061
        %v2620 = vunpack.c.l.b16 %v1075
        %v2621 = vunpack.c.l.b16 %v1085
        %v2622 = vunpack.c.l.b16 %v1099
        %v2623 = vunpack.c.l.b16 %v1109
        %v2624 = vunpack.c.l.b16 %v1123
        %v2625 = vunpack.c.l.b16 %v1133
        %v2626 = vpack.c.b16 %v2595, %v2594
        %v2627 = vpack.c.b16 %v2597, %v2596
        %v2628 = vpack.c.b16 %v2599, %v2598
        %v2629 = vpack.c.b16 %v2601, %v2600
        %v2630 = vpack.c.b16 %v2603, %v2602
        %v2631 = vpack.c.b16 %v2605, %v2604
        %v2632 = vpack.c.b16 %v2607, %v2606
        %v2633 = vpack.c.b16 %v2609, %v2608
        %v2634 = vpack.c.b16 %v2611, %v2610
        %v2635 = vpack.c.b16 %v2613, %v2612
        %v2636 = vpack.c.b16 %v2615, %v2614
        %v2637 = vpack.c.b16 %v2617, %v2616
        %v2638 = vpack.c.b16 %v2619, %v2618
        %v2639 = vpack.c.b16 %v2621, %v2620
        %v2640 = vpack.c.b16 %v2623, %v2622
        %v2641 = vpack.c.b16 %v2625, %v2624
        %2642 = vrot.lane.b32.xlu0 %v2626, 3
        %v2643 = vpop.permute.xlu0 %2642
        %2644 = vrot.lane.b32.xlu0 %v2627, 3
        %v2645 = vpop.permute.xlu0 %2644
        %2646 = vrot.lane.b32.xlu0 %v2628, 3
        %v2647 = vpop.permute.xlu0 %2646
        %2648 = vrot.lane.b32.xlu0 %v2629, 3
        %v2649 = vpop.permute.xlu0 %2648
        %2650 = vrot.lane.b32.xlu0 %v2630, 3
        %v2651 = vpop.permute.xlu0 %2650
        %2652 = vrot.lane.b32.xlu0 %v2631, 3
        %v2653 = vpop.permute.xlu0 %2652
        %2654 = vrot.lane.b32.xlu0 %v2632, 3
        %v2655 = vpop.permute.xlu0 %2654
        %2656 = vrot.lane.b32.xlu0 %v2633, 3
        %v2657 = vpop.permute.xlu0 %2656
        %2658 = vrot.lane.b32.xlu0 %v2634, 3
        %v2659 = vpop.permute.xlu0 %2658
        %2660 = vrot.lane.b32.xlu0 %v2635, 3
        %v2661 = vpop.permute.xlu0 %2660
        %2662 = vrot.lane.b32.xlu0 %v2636, 3
        %v2663 = vpop.permute.xlu0 %2662
        %2664 = vrot.lane.b32.xlu0 %v2637, 3
        %v2665 = vpop.permute.xlu0 %2664
        %2666 = vrot.lane.b32.xlu0 %v2638, 3
        %v2667 = vpop.permute.xlu0 %2666
        %2668 = vrot.lane.b32.xlu0 %v2639, 3
        %v2669 = vpop.permute.xlu0 %2668
        %2670 = vrot.lane.b32.xlu0 %v2640, 3
        %v2671 = vpop.permute.xlu0 %2670
        %2672 = vrot.lane.b32.xlu0 %v2641, 3
        %v2673 = vpop.permute.xlu0 %2672
        %v2674 = vunpack.c.l.b16 %v1204
        %v2675 = vunpack.c.l.b16 %v1207
        %v2676 = vunpack.c.l.b16 %v1211
        %v2677 = vunpack.c.l.b16 %v1214
        %v2678 = vunpack.c.l.b16 %v1218
        %v2679 = vunpack.c.l.b16 %v1221
        %v2680 = vunpack.c.l.b16 %v1225
        %v2681 = vunpack.c.l.b16 %v1228
        %v2682 = vunpack.c.l.b16 %v1232
        %v2683 = vunpack.c.l.b16 %v1235
        %v2684 = vunpack.c.l.b16 %v1239
        %v2685 = vunpack.c.l.b16 %v1242
        %v2686 = vunpack.c.l.b16 %v1246
        %v2687 = vunpack.c.l.b16 %v1249
        %v2688 = vunpack.c.l.b16 %v1253
        %v2689 = vunpack.c.l.b16 %v1256
        %v2690 = vunpack.c.l.b16 %v1260
        %v2691 = vunpack.c.l.b16 %v1263
        %v2692 = vunpack.c.l.b16 %v1267
        %v2693 = vunpack.c.l.b16 %v1270
        %v2694 = vunpack.c.l.b16 %v1274
        %v2695 = vunpack.c.l.b16 %v1277
        %v2696 = vunpack.c.l.b16 %v1281
        %v2697 = vunpack.c.l.b16 %v1284
        %v2698 = vunpack.c.l.b16 %v1288
        %v2699 = vunpack.c.l.b16 %v1291
        %v2700 = vunpack.c.l.b16 %v1295
        %v2701 = vunpack.c.l.b16 %v1298
        %v2702 = vunpack.c.l.b16 %v1302
        %v2703 = vunpack.c.l.b16 %v1305
        %v2704 = vunpack.c.l.b16 %v1309
        %v2705 = vunpack.c.l.b16 %v1312
        %v2706 = vpack.c.b16 %v2675, %v2674
        %v2707 = vpack.c.b16 %v2677, %v2676
        %v2708 = vpack.c.b16 %v2679, %v2678
        %v2709 = vpack.c.b16 %v2681, %v2680
        %v2710 = vpack.c.b16 %v2683, %v2682
        %v2711 = vpack.c.b16 %v2685, %v2684
        %v2712 = vpack.c.b16 %v2687, %v2686
        %v2713 = vpack.c.b16 %v2689, %v2688
        %v2714 = vpack.c.b16 %v2691, %v2690
        %v2715 = vpack.c.b16 %v2693, %v2692
        %v2716 = vpack.c.b16 %v2695, %v2694
        %v2717 = vpack.c.b16 %v2697, %v2696
        %v2718 = vpack.c.b16 %v2699, %v2698
        %v2719 = vpack.c.b16 %v2701, %v2700
        %v2720 = vpack.c.b16 %v2703, %v2702
        %v2721 = vpack.c.b16 %v2705, %v2704
        %2722 = vrot.lane.b32.xlu0 %v2706, 6
        %v2723 = vpop.permute.xlu0 %2722
        %2724 = vrot.lane.b32.xlu0 %v2707, 6
        %v2725 = vpop.permute.xlu0 %2724
        %2726 = vrot.lane.b32.xlu0 %v2708, 6
        %v2727 = vpop.permute.xlu0 %2726
        %2728 = vrot.lane.b32.xlu0 %v2709, 6
        %v2729 = vpop.permute.xlu0 %2728
        %2730 = vrot.lane.b32.xlu0 %v2710, 6
        %v2731 = vpop.permute.xlu0 %2730
        %2732 = vrot.lane.b32.xlu0 %v2711, 6
        %v2733 = vpop.permute.xlu0 %2732
        %2734 = vrot.lane.b32.xlu0 %v2712, 6
        %v2735 = vpop.permute.xlu0 %2734
        %2736 = vrot.lane.b32.xlu0 %v2713, 6
        %v2737 = vpop.permute.xlu0 %2736
        %2738 = vrot.lane.b32.xlu0 %v2714, 6
        %v2739 = vpop.permute.xlu0 %2738
        %2740 = vrot.lane.b32.xlu0 %v2715, 6
        %v2741 = vpop.permute.xlu0 %2740
        %2742 = vrot.lane.b32.xlu0 %v2716, 6
        %v2743 = vpop.permute.xlu0 %2742
        %2744 = vrot.lane.b32.xlu0 %v2717, 6
        %v2745 = vpop.permute.xlu0 %2744
        %2746 = vrot.lane.b32.xlu0 %v2718, 6
        %v2747 = vpop.permute.xlu0 %2746
        %2748 = vrot.lane.b32.xlu0 %v2719, 6
        %v2749 = vpop.permute.xlu0 %2748
        %2750 = vrot.lane.b32.xlu0 %v2720, 6
        %v2751 = vpop.permute.xlu0 %2750
        %2752 = vrot.lane.b32.xlu0 %v2721, 6
        %v2753 = vpop.permute.xlu0 %2752
        %v2770 = vunpack.c.l.b16 %v1313
        %v2771 = vunpack.c.l.b16 %v1314
        %v2772 = vunpack.c.l.b16 %v1315
        %v2773 = vunpack.c.l.b16 %v1316
        %v2774 = vunpack.c.l.b16 %v1317
        %v2775 = vunpack.c.l.b16 %v1318
        %v2776 = vunpack.c.l.b16 %v1319
        %v2777 = vunpack.c.l.b16 %v1320
        %v2778 = vunpack.c.l.b16 %v1321
        %v2779 = vunpack.c.l.b16 %v1322
        %v2780 = vunpack.c.l.b16 %v1323
        %v2781 = vunpack.c.l.b16 %v1324
        %v2782 = vunpack.c.l.b16 %v1325
        %v2783 = vunpack.c.l.b16 %v1326
        %v2784 = vunpack.c.l.b16 %v1327
        %v2785 = vunpack.c.l.b16 %v1328
        %v2786 = vunpack.c.l.b16 %v1329
        %v2787 = vunpack.c.l.b16 %v1330
        %v2788 = vunpack.c.l.b16 %v1331
        %v2789 = vunpack.c.l.b16 %v1332
        %v2790 = vunpack.c.l.b16 %v1333
        %v2791 = vunpack.c.l.b16 %v1334
        %v2792 = vunpack.c.l.b16 %v1335
        %v2793 = vunpack.c.l.b16 %v1336
        %v2794 = vunpack.c.l.b16 %v1337
        %v2795 = vunpack.c.l.b16 %v1338
        %v2796 = vunpack.c.l.b16 %v1339
        %v2797 = vunpack.c.l.b16 %v1340
        %v2798 = vunpack.c.l.b16 %v1341
        %v2799 = vunpack.c.l.b16 %v1342
        %v2800 = vunpack.c.l.b16 %v1343
        %v2801 = vunpack.c.l.b16 %v1344
        %v2802 = vpack.c.b16 %v2771, %v2770
        %v2803 = vpack.c.b16 %v2773, %v2772
        %v2804 = vpack.c.b16 %v2775, %v2774
        %v2805 = vpack.c.b16 %v2777, %v2776
        %v2806 = vpack.c.b16 %v2779, %v2778
        %v2807 = vpack.c.b16 %v2781, %v2780
        %v2808 = vpack.c.b16 %v2783, %v2782
        %v2809 = vpack.c.b16 %v2785, %v2784
        %v2810 = vpack.c.b16 %v2787, %v2786
        %v2811 = vpack.c.b16 %v2789, %v2788
        %v2812 = vpack.c.b16 %v2791, %v2790
        %v2813 = vpack.c.b16 %v2793, %v2792
        %v2814 = vpack.c.b16 %v2795, %v2794
        %v2815 = vpack.c.b16 %v2797, %v2796
        %v2816 = vpack.c.b16 %v2799, %v2798
        %v2817 = vpack.c.b16 %v2801, %v2800
        %2818 = vrot.lane.b32.xlu0 %v2802, 9
        %v2819 = vpop.permute.xlu0 %2818
        %2820 = vrot.lane.b32.xlu0 %v2803, 9
        %v2821 = vpop.permute.xlu0 %2820
        %2822 = vrot.lane.b32.xlu0 %v2804, 9
        %v2823 = vpop.permute.xlu0 %2822
        %2824 = vrot.lane.b32.xlu0 %v2805, 9
        %v2825 = vpop.permute.xlu0 %2824
        %2826 = vrot.lane.b32.xlu0 %v2806, 9
        %v2827 = vpop.permute.xlu0 %2826
        %2828 = vrot.lane.b32.xlu0 %v2807, 9
        %v2829 = vpop.permute.xlu0 %2828
        %2830 = vrot.lane.b32.xlu0 %v2808, 9
        %v2831 = vpop.permute.xlu0 %2830
        %2832 = vrot.lane.b32.xlu0 %v2809, 9
        %v2833 = vpop.permute.xlu0 %2832
        %2834 = vrot.lane.b32.xlu0 %v2810, 9
        %v2835 = vpop.permute.xlu0 %2834
        %2836 = vrot.lane.b32.xlu0 %v2811, 9
        %v2837 = vpop.permute.xlu0 %2836
        %2838 = vrot.lane.b32.xlu0 %v2812, 9
        %v2839 = vpop.permute.xlu0 %2838
        %2840 = vrot.lane.b32.xlu0 %v2813, 9
        %v2841 = vpop.permute.xlu0 %2840
        %2842 = vrot.lane.b32.xlu0 %v2814, 9
        %v2843 = vpop.permute.xlu0 %2842
        %2844 = vrot.lane.b32.xlu0 %v2815, 9
        %v2845 = vpop.permute.xlu0 %2844
        %2846 = vrot.lane.b32.xlu0 %v2816, 9
        %v2847 = vpop.permute.xlu0 %2846
        %2848 = vrot.lane.b32.xlu0 %v2817, 9
        %v2849 = vpop.permute.xlu0 %2848
        %v2850 = vunpack.c.l.b16 %v1374
        %v2851 = vunpack.c.l.b16 %v1384
        %v2852 = vunpack.c.l.b16 %v1398
        %v2853 = vunpack.c.l.b16 %v1408
        %v2854 = vunpack.c.l.b16 %v1422
        %v2855 = vunpack.c.l.b16 %v1432
        %v2856 = vunpack.c.l.b16 %v1446
        %v2857 = vunpack.c.l.b16 %v1456
        %v2858 = vunpack.c.l.b16 %v1470
        %v2859 = vunpack.c.l.b16 %v1480
        %v2860 = vunpack.c.l.b16 %v1494
        %v2861 = vunpack.c.l.b16 %v1504
        %v2862 = vunpack.c.l.b16 %v1518
        %v2863 = vunpack.c.l.b16 %v1528
        %v2864 = vunpack.c.l.b16 %v1542
        %v2865 = vunpack.c.l.b16 %v1552
        %v2866 = vunpack.c.l.b16 %v1566
        %v2867 = vunpack.c.l.b16 %v1576
        %v2868 = vunpack.c.l.b16 %v1590
        %v2869 = vunpack.c.l.b16 %v1600
        %v2870 = vunpack.c.l.b16 %v1614
        %v2871 = vunpack.c.l.b16 %v1624
        %v2872 = vunpack.c.l.b16 %v1638
        %v2873 = vunpack.c.l.b16 %v1648
        %v2874 = vunpack.c.l.b16 %v1662
        %v2875 = vunpack.c.l.b16 %v1672
        %v2876 = vunpack.c.l.b16 %v1686
        %v2877 = vunpack.c.l.b16 %v1696
        %v2878 = vunpack.c.l.b16 %v1710
        %v2879 = vunpack.c.l.b16 %v1720
        %v2880 = vunpack.c.l.b16 %v1734
        %v2881 = vunpack.c.l.b16 %v1744
        %v2882 = vpack.c.b16 %v2851, %v2850
        %v2883 = vpack.c.b16 %v2853, %v2852
        %v2884 = vpack.c.b16 %v2855, %v2854
        %v2885 = vpack.c.b16 %v2857, %v2856
        %v2886 = vpack.c.b16 %v2859, %v2858
        %v2887 = vpack.c.b16 %v2861, %v2860
        %v2888 = vpack.c.b16 %v2863, %v2862
        %v2889 = vpack.c.b16 %v2865, %v2864
        %v2890 = vpack.c.b16 %v2867, %v2866
        %v2891 = vpack.c.b16 %v2869, %v2868
        %v2892 = vpack.c.b16 %v2871, %v2870
        %v2893 = vpack.c.b16 %v2873, %v2872
        %v2894 = vpack.c.b16 %v2875, %v2874
        %v2895 = vpack.c.b16 %v2877, %v2876
        %v2896 = vpack.c.b16 %v2879, %v2878
        %v2897 = vpack.c.b16 %v2881, %v2880
        %2898 = vrot.lane.b32.xlu0 %v2882, 12
        %v2899 = vpop.permute.xlu0 %2898
        %2900 = vrot.lane.b32.xlu0 %v2883, 12
        %v2901 = vpop.permute.xlu0 %2900
        %2902 = vrot.lane.b32.xlu0 %v2884, 12
        %v2903 = vpop.permute.xlu0 %2902
        %2904 = vrot.lane.b32.xlu0 %v2885, 12
        %v2905 = vpop.permute.xlu0 %2904
        %2906 = vrot.lane.b32.xlu0 %v2886, 12
        %v2907 = vpop.permute.xlu0 %2906
        %2908 = vrot.lane.b32.xlu0 %v2887, 12
        %v2909 = vpop.permute.xlu0 %2908
        %2910 = vrot.lane.b32.xlu0 %v2888, 12
        %v2911 = vpop.permute.xlu0 %2910
        %2912 = vrot.lane.b32.xlu0 %v2889, 12
        %v2913 = vpop.permute.xlu0 %2912
        %2914 = vrot.lane.b32.xlu0 %v2890, 12
        %v2915 = vpop.permute.xlu0 %2914
        %2916 = vrot.lane.b32.xlu0 %v2891, 12
        %v2917 = vpop.permute.xlu0 %2916
        %2918 = vrot.lane.b32.xlu0 %v2892, 12
        %v2919 = vpop.permute.xlu0 %2918
        %2920 = vrot.lane.b32.xlu0 %v2893, 12
        %v2921 = vpop.permute.xlu0 %2920
        %2922 = vrot.lane.b32.xlu0 %v2894, 12
        %v2923 = vpop.permute.xlu0 %2922
        %2924 = vrot.lane.b32.xlu0 %v2895, 12
        %v2925 = vpop.permute.xlu0 %2924
        %2926 = vrot.lane.b32.xlu0 %v2896, 12
        %v2927 = vpop.permute.xlu0 %2926
        %2928 = vrot.lane.b32.xlu0 %v2897, 12
        %v2929 = vpop.permute.xlu0 %2928
        %v2930 = vunpack.c.l.b16 %v1812
        %v2931 = vunpack.c.l.b16 %v1815
        %v2932 = vunpack.c.l.b16 %v1819
        %v2933 = vunpack.c.l.b16 %v1822
        %v2934 = vunpack.c.l.b16 %v1826
        %v2935 = vunpack.c.l.b16 %v1829
        %v2936 = vunpack.c.l.b16 %v1833
        %v2937 = vunpack.c.l.b16 %v1836
        %v2938 = vunpack.c.l.b16 %v1840
        %v2939 = vunpack.c.l.b16 %v1843
        %v2940 = vunpack.c.l.b16 %v1847
        %v2941 = vunpack.c.l.b16 %v1850
        %v2942 = vunpack.c.l.b16 %v1854
        %v2943 = vunpack.c.l.b16 %v1857
        %v2944 = vunpack.c.l.b16 %v1861
        %v2945 = vunpack.c.l.b16 %v1864
        %v2946 = vunpack.c.l.b16 %v1868
        %v2947 = vunpack.c.l.b16 %v1871
        %v2948 = vunpack.c.l.b16 %v1875
        %v2949 = vunpack.c.l.b16 %v1878
        %v2950 = vunpack.c.l.b16 %v1882
        %v2951 = vunpack.c.l.b16 %v1885
        %v2952 = vunpack.c.l.b16 %v1889
        %v2953 = vunpack.c.l.b16 %v1892
        %v2954 = vunpack.c.l.b16 %v1896
        %v2955 = vunpack.c.l.b16 %v1899
        %v2956 = vunpack.c.l.b16 %v1903
        %v2957 = vunpack.c.l.b16 %v1906
        %v2958 = vunpack.c.l.b16 %v1910
        %v2959 = vunpack.c.l.b16 %v1913
        %v2960 = vunpack.c.l.b16 %v1917
        %v2961 = vunpack.c.l.b16 %v1920
        %v2962 = vpack.c.b16 %v2931, %v2930
        %v2963 = vpack.c.b16 %v2933, %v2932
        %v2964 = vpack.c.b16 %v2935, %v2934
        %v2965 = vpack.c.b16 %v2937, %v2936
        %v2966 = vpack.c.b16 %v2939, %v2938
        %v2967 = vpack.c.b16 %v2941, %v2940
        %v2968 = vpack.c.b16 %v2943, %v2942
        %v2969 = vpack.c.b16 %v2945, %v2944
        %v2970 = vpack.c.b16 %v2947, %v2946
        %v2971 = vpack.c.b16 %v2949, %v2948
        %v2972 = vpack.c.b16 %v2951, %v2950
        %v2973 = vpack.c.b16 %v2953, %v2952
        %v2974 = vpack.c.b16 %v2955, %v2954
        %v2975 = vpack.c.b16 %v2957, %v2956
        %v2976 = vpack.c.b16 %v2959, %v2958
        %v2977 = vpack.c.b16 %v2961, %v2960
        %2978 = vrot.lane.b32.xlu0 %v2962, 15
        %v2979 = vpop.permute.xlu0 %2978
        %2980 = vrot.lane.b32.xlu0 %v2963, 15
        %v2981 = vpop.permute.xlu0 %2980
        %2982 = vrot.lane.b32.xlu0 %v2964, 15
        %v2983 = vpop.permute.xlu0 %2982
        %2984 = vrot.lane.b32.xlu0 %v2965, 15
        %v2985 = vpop.permute.xlu0 %2984
        %2986 = vrot.lane.b32.xlu0 %v2966, 15
        %v2987 = vpop.permute.xlu0 %2986
        %2988 = vrot.lane.b32.xlu0 %v2967, 15
        %v2989 = vpop.permute.xlu0 %2988
        %2990 = vrot.lane.b32.xlu0 %v2968, 15
        %v2991 = vpop.permute.xlu0 %2990
        %2992 = vrot.lane.b32.xlu0 %v2969, 15
        %v2993 = vpop.permute.xlu0 %2992
        %2994 = vrot.lane.b32.xlu0 %v2970, 15
        %v2995 = vpop.permute.xlu0 %2994
        %2996 = vrot.lane.b32.xlu0 %v2971, 15
        %v2997 = vpop.permute.xlu0 %2996
        %2998 = vrot.lane.b32.xlu0 %v2972, 15
        %v2999 = vpop.permute.xlu0 %2998
        %3000 = vrot.lane.b32.xlu0 %v2973, 15
        %v3001 = vpop.permute.xlu0 %3000
        %3002 = vrot.lane.b32.xlu0 %v2974, 15
        %v3003 = vpop.permute.xlu0 %3002
        %3004 = vrot.lane.b32.xlu0 %v2975, 15
        %v3005 = vpop.permute.xlu0 %3004
        %3006 = vrot.lane.b32.xlu0 %v2976, 15
        %v3007 = vpop.permute.xlu0 %3006
        %3008 = vrot.lane.b32.xlu0 %v2977, 15
        %v3009 = vpop.permute.xlu0 %3008
        %v3026 = vunpack.c.l.b16 %v1922
        %v3027 = vunpack.c.l.b16 %v1923
        %v3028 = vunpack.c.l.b16 %v1924
        %v3029 = vunpack.c.l.b16 %v1925
        %v3030 = vunpack.c.l.b16 %v1926
        %v3031 = vunpack.c.l.b16 %v1927
        %v3032 = vunpack.c.l.b16 %v1928
        %v3033 = vunpack.c.l.b16 %v1929
        %v3034 = vunpack.c.l.b16 %v1930
        %v3035 = vunpack.c.l.b16 %v1931
        %v3036 = vunpack.c.l.b16 %v1932
        %v3037 = vunpack.c.l.b16 %v1933
        %v3038 = vunpack.c.l.b16 %v1934
        %v3039 = vunpack.c.l.b16 %v1935
        %v3040 = vunpack.c.l.b16 %v1936
        %v3041 = vunpack.c.l.b16 %v1937
        %v3042 = vunpack.c.l.b16 %v1938
        %v3043 = vunpack.c.l.b16 %v1939
        %v3044 = vunpack.c.l.b16 %v1940
        %v3045 = vunpack.c.l.b16 %v1941
        %v3046 = vunpack.c.l.b16 %v1942
        %v3047 = vunpack.c.l.b16 %v1943
        %v3048 = vunpack.c.l.b16 %v1944
        %v3049 = vunpack.c.l.b16 %v1945
        %v3050 = vunpack.c.l.b16 %v1946
        %v3051 = vunpack.c.l.b16 %v1947
        %v3052 = vunpack.c.l.b16 %v1948
        %v3053 = vunpack.c.l.b16 %v1949
        %v3054 = vunpack.c.l.b16 %v1950
        %v3055 = vunpack.c.l.b16 %v1951
        %v3056 = vunpack.c.l.b16 %v1952
        %v3057 = vunpack.c.l.b16 %v1953
        %v3058 = vpack.c.b16 %v3027, %v3026
        %v3059 = vpack.c.b16 %v3029, %v3028
        %v3060 = vpack.c.b16 %v3031, %v3030
        %v3061 = vpack.c.b16 %v3033, %v3032
        %v3062 = vpack.c.b16 %v3035, %v3034
        %v3063 = vpack.c.b16 %v3037, %v3036
        %v3064 = vpack.c.b16 %v3039, %v3038
        %v3065 = vpack.c.b16 %v3041, %v3040
        %v3066 = vpack.c.b16 %v3043, %v3042
        %v3067 = vpack.c.b16 %v3045, %v3044
        %v3068 = vpack.c.b16 %v3047, %v3046
        %v3069 = vpack.c.b16 %v3049, %v3048
        %v3070 = vpack.c.b16 %v3051, %v3050
        %v3071 = vpack.c.b16 %v3053, %v3052
        %v3072 = vpack.c.b16 %v3055, %v3054
        %v3073 = vpack.c.b16 %v3057, %v3056
        %3074 = vrot.lane.b32.xlu0 %v3058, 18
        %v3075 = vpop.permute.xlu0 %3074
        %3076 = vrot.lane.b32.xlu0 %v3059, 18
        %v3077 = vpop.permute.xlu0 %3076
        %3078 = vrot.lane.b32.xlu0 %v3060, 18
        %v3079 = vpop.permute.xlu0 %3078
        %3080 = vrot.lane.b32.xlu0 %v3061, 18
        %v3081 = vpop.permute.xlu0 %3080
        %3082 = vrot.lane.b32.xlu0 %v3062, 18
        %v3083 = vpop.permute.xlu0 %3082
        %3084 = vrot.lane.b32.xlu0 %v3063, 18
        %v3085 = vpop.permute.xlu0 %3084
        %3086 = vrot.lane.b32.xlu0 %v3064, 18
        %v3087 = vpop.permute.xlu0 %3086
        %3088 = vrot.lane.b32.xlu0 %v3065, 18
        %v3089 = vpop.permute.xlu0 %3088
        %3090 = vrot.lane.b32.xlu0 %v3066, 18
        %v3091 = vpop.permute.xlu0 %3090
        %3092 = vrot.lane.b32.xlu0 %v3067, 18
        %v3093 = vpop.permute.xlu0 %3092
        %3094 = vrot.lane.b32.xlu0 %v3068, 18
        %v3095 = vpop.permute.xlu0 %3094
        %3096 = vrot.lane.b32.xlu0 %v3069, 18
        %v3097 = vpop.permute.xlu0 %3096
        %3098 = vrot.lane.b32.xlu0 %v3070, 18
        %v3099 = vpop.permute.xlu0 %3098
        %3100 = vrot.lane.b32.xlu0 %v3071, 18
        %v3101 = vpop.permute.xlu0 %3100
        %3102 = vrot.lane.b32.xlu0 %v3072, 18
        %v3103 = vpop.permute.xlu0 %3102
        %3104 = vrot.lane.b32.xlu0 %v3073, 18
        %v3105 = vpop.permute.xlu0 %3104
        %v3106 = vunpack.c.l.b16 %v1983
        %v3107 = vunpack.c.l.b16 %v1993
        %v3108 = vunpack.c.l.b16 %v2007
        %v3109 = vunpack.c.l.b16 %v2017
        %v3110 = vunpack.c.l.b16 %v2031
        %v3111 = vunpack.c.l.b16 %v2041
        %v3112 = vunpack.c.l.b16 %v2055
        %v3113 = vunpack.c.l.b16 %v2065
        %v3114 = vunpack.c.l.b16 %v2079
        %v3115 = vunpack.c.l.b16 %v2089
        %v3116 = vunpack.c.l.b16 %v2103
        %v3117 = vunpack.c.l.b16 %v2113
        %v3118 = vunpack.c.l.b16 %v2127
        %v3119 = vunpack.c.l.b16 %v2137
        %v3120 = vunpack.c.l.b16 %v2151
        %v3121 = vunpack.c.l.b16 %v2161
        %v3122 = vunpack.c.l.b16 %v2175
        %v3123 = vunpack.c.l.b16 %v2185
        %v3124 = vunpack.c.l.b16 %v2199
        %v3125 = vunpack.c.l.b16 %v2209
        %v3126 = vunpack.c.l.b16 %v2223
        %v3127 = vunpack.c.l.b16 %v2233
        %v3128 = vunpack.c.l.b16 %v2247
        %v3129 = vunpack.c.l.b16 %v2257
        %v3130 = vunpack.c.l.b16 %v2271
        %v3131 = vunpack.c.l.b16 %v2281
        %v3132 = vunpack.c.l.b16 %v2295
        %v3133 = vunpack.c.l.b16 %v2305
        %v3134 = vunpack.c.l.b16 %v2319
        %v3135 = vunpack.c.l.b16 %v2329
        %v3136 = vunpack.c.l.b16 %v2343
        %v3137 = vunpack.c.l.b16 %v2353
        %v3138 = vpack.c.b16 %v3107, %v3106
        %v3139 = vpack.c.b16 %v3109, %v3108
        %v3140 = vpack.c.b16 %v3111, %v3110
        %v3141 = vpack.c.b16 %v3113, %v3112
        %v3142 = vpack.c.b16 %v3115, %v3114
        %v3143 = vpack.c.b16 %v3117, %v3116
        %v3144 = vpack.c.b16 %v3119, %v3118
        %v3145 = vpack.c.b16 %v3121, %v3120
        %v3146 = vpack.c.b16 %v3123, %v3122
        %v3147 = vpack.c.b16 %v3125, %v3124
        %v3148 = vpack.c.b16 %v3127, %v3126
        %v3149 = vpack.c.b16 %v3129, %v3128
        %v3150 = vpack.c.b16 %v3131, %v3130
        %v3151 = vpack.c.b16 %v3133, %v3132
        %v3152 = vpack.c.b16 %v3135, %v3134
        %v3153 = vpack.c.b16 %v3137, %v3136
        %3154 = vrot.lane.b32.xlu0 %v3138, 21
        %v3155 = vpop.permute.xlu0 %3154
        %3156 = vrot.lane.b32.xlu0 %v3139, 21
        %v3157 = vpop.permute.xlu0 %3156
        %3158 = vrot.lane.b32.xlu0 %v3140, 21
        %v3159 = vpop.permute.xlu0 %3158
        %3160 = vrot.lane.b32.xlu0 %v3141, 21
        %v3161 = vpop.permute.xlu0 %3160
        %3162 = vrot.lane.b32.xlu0 %v3142, 21
        %v3163 = vpop.permute.xlu0 %3162
        %3164 = vrot.lane.b32.xlu0 %v3143, 21
        %v3165 = vpop.permute.xlu0 %3164
        %3166 = vrot.lane.b32.xlu0 %v3144, 21
        %v3167 = vpop.permute.xlu0 %3166
        %3168 = vrot.lane.b32.xlu0 %v3145, 21
        %v3169 = vpop.permute.xlu0 %3168
        %3170 = vrot.lane.b32.xlu0 %v3146, 21
        %v3171 = vpop.permute.xlu0 %3170
        %3172 = vrot.lane.b32.xlu0 %v3147, 21
        %v3173 = vpop.permute.xlu0 %3172
        %3174 = vrot.lane.b32.xlu0 %v3148, 21
        %v3175 = vpop.permute.xlu0 %3174
        %3176 = vrot.lane.b32.xlu0 %v3149, 21
        %v3177 = vpop.permute.xlu0 %3176
        %3178 = vrot.lane.b32.xlu0 %v3150, 21
        %v3179 = vpop.permute.xlu0 %3178
        %3180 = vrot.lane.b32.xlu0 %v3151, 21
        %v3181 = vpop.permute.xlu0 %3180
        %3182 = vrot.lane.b32.xlu0 %v3152, 21
        %v3183 = vpop.permute.xlu0 %3182
        %3184 = vrot.lane.b32.xlu0 %v3153, 21
        %v3185 = vpop.permute.xlu0 %3184
        %v3186 = vunpack.c.l.b16 %v2421
        %v3187 = vunpack.c.l.b16 %v2424
        %v3188 = vunpack.c.l.b16 %v2428
        %v3189 = vunpack.c.l.b16 %v2431
        %v3190 = vunpack.c.l.b16 %v2435
        %v3191 = vunpack.c.l.b16 %v2438
        %v3192 = vunpack.c.l.b16 %v2442
        %v3193 = vunpack.c.l.b16 %v2445
        %v3194 = vunpack.c.l.b16 %v2449
        %v3195 = vunpack.c.l.b16 %v2452
        %v3196 = vunpack.c.l.b16 %v2456
        %v3197 = vunpack.c.l.b16 %v2459
        %v3198 = vunpack.c.l.b16 %v2463
        %v3199 = vunpack.c.l.b16 %v2466
        %v3200 = vunpack.c.l.b16 %v2470
        %v3201 = vunpack.c.l.b16 %v2473
        %v3202 = vunpack.c.l.b16 %v2477
        %v3203 = vunpack.c.l.b16 %v2480
        %v3204 = vunpack.c.l.b16 %v2484
        %v3205 = vunpack.c.l.b16 %v2487
        %v3206 = vunpack.c.l.b16 %v2491
        %v3207 = vunpack.c.l.b16 %v2494
        %v3208 = vunpack.c.l.b16 %v2498
        %v3209 = vunpack.c.l.b16 %v2501
        %v3210 = vunpack.c.l.b16 %v2505
        %v3211 = vunpack.c.l.b16 %v2508
        %v3212 = vunpack.c.l.b16 %v2512
        %v3213 = vunpack.c.l.b16 %v2515
        %v3214 = vunpack.c.l.b16 %v2519
        %v3215 = vunpack.c.l.b16 %v2522
        %v3216 = vunpack.c.l.b16 %v2526
        %v3217 = vunpack.c.l.b16 %v2529
        %v3218 = vpack.c.b16 %v3187, %v3186
        %v3219 = vpack.c.b16 %v3189, %v3188
        %v3220 = vpack.c.b16 %v3191, %v3190
        %v3221 = vpack.c.b16 %v3193, %v3192
        %v3222 = vpack.c.b16 %v3195, %v3194
        %v3223 = vpack.c.b16 %v3197, %v3196
        %v3224 = vpack.c.b16 %v3199, %v3198
        %v3225 = vpack.c.b16 %v3201, %v3200
        %v3226 = vpack.c.b16 %v3203, %v3202
        %v3227 = vpack.c.b16 %v3205, %v3204
        %v3228 = vpack.c.b16 %v3207, %v3206
        %v3229 = vpack.c.b16 %v3209, %v3208
        %v3230 = vpack.c.b16 %v3211, %v3210
        %v3231 = vpack.c.b16 %v3213, %v3212
        %v3232 = vpack.c.b16 %v3215, %v3214
        %v3233 = vpack.c.b16 %v3217, %v3216
        %3234 = vrot.lane.b32.xlu0 %v3218, 24
        %v3235 = vpop.permute.xlu0 %3234
        %3236 = vrot.lane.b32.xlu0 %v3219, 24
        %v3237 = vpop.permute.xlu0 %3236
        %3238 = vrot.lane.b32.xlu0 %v3220, 24
        %v3239 = vpop.permute.xlu0 %3238
        %3240 = vrot.lane.b32.xlu0 %v3221, 24
        %v3241 = vpop.permute.xlu0 %3240
        %3242 = vrot.lane.b32.xlu0 %v3222, 24
        %v3243 = vpop.permute.xlu0 %3242
        %3244 = vrot.lane.b32.xlu0 %v3223, 24
        %v3245 = vpop.permute.xlu0 %3244
        %3246 = vrot.lane.b32.xlu0 %v3224, 24
        %v3247 = vpop.permute.xlu0 %3246
        %3248 = vrot.lane.b32.xlu0 %v3225, 24
        %v3249 = vpop.permute.xlu0 %3248
        %3250 = vrot.lane.b32.xlu0 %v3226, 24
        %v3251 = vpop.permute.xlu0 %3250
        %3252 = vrot.lane.b32.xlu0 %v3227, 24
        %v3253 = vpop.permute.xlu0 %3252
        %3254 = vrot.lane.b32.xlu0 %v3228, 24
        %v3255 = vpop.permute.xlu0 %3254
        %3256 = vrot.lane.b32.xlu0 %v3229, 24
        %v3257 = vpop.permute.xlu0 %3256
        %3258 = vrot.lane.b32.xlu0 %v3230, 24
        %v3259 = vpop.permute.xlu0 %3258
        %3260 = vrot.lane.b32.xlu0 %v3231, 24
        %v3261 = vpop.permute.xlu0 %3260
        %3262 = vrot.lane.b32.xlu0 %v3232, 24
        %v3263 = vpop.permute.xlu0 %3262
        %3264 = vrot.lane.b32.xlu0 %v3233, 24
        %v3265 = vpop.permute.xlu0 %3264
        %vm3266 = vcmask 23552
        %v3269 = vsel %vm3266, %v2578, %v2643
        %v3272 = vsel %vm3266, %v2579, %v2645
        %v3275 = vsel %vm3266, %v2580, %v2647
        %v3278 = vsel %vm3266, %v2581, %v2649
        %v3281 = vsel %vm3266, %v2582, %v2651
        %v3284 = vsel %vm3266, %v2583, %v2653
        %v3287 = vsel %vm3266, %v2584, %v2655
        %v3290 = vsel %vm3266, %v2585, %v2657
        %v3293 = vsel %vm3266, %v2586, %v2659
        %v3296 = vsel %vm3266, %v2587, %v2661
        %v3299 = vsel %vm3266, %v2588, %v2663
        %v3302 = vsel %vm3266, %v2589, %v2665
        %v3305 = vsel %vm3266, %v2590, %v2667
        %v3308 = vsel %vm3266, %v2591, %v2669
        %v3311 = vsel %vm3266, %v2592, %v2671
        %v3314 = vsel %vm3266, %v2593, %v2673
        %vm3315 = vcmask 48128
        %v3317 = vsel %vm3315, %v3269, %v2723
        %v3319 = vsel %vm3315, %v3272, %v2725
        %v3321 = vsel %vm3315, %v3275, %v2727
        %v3323 = vsel %vm3315, %v3278, %v2729
        %v3325 = vsel %vm3315, %v3281, %v2731
        %v3327 = vsel %vm3315, %v3284, %v2733
        %v3329 = vsel %vm3315, %v3287, %v2735
        %v3331 = vsel %vm3315, %v3290, %v2737
        %v3333 = vsel %vm3315, %v3293, %v2739
        %v3335 = vsel %vm3315, %v3296, %v2741
        %v3337 = vsel %vm3315, %v3299, %v2743
        %v3339 = vsel %vm3315, %v3302, %v2745
        %v3341 = vsel %vm3315, %v3305, %v2747
        %v3343 = vsel %vm3315, %v3308, %v2749
        %v3345 = vsel %vm3315, %v3311, %v2751
        %v3347 = vsel %vm3315, %v3314, %v2753
        %vm3348 = vcmask 72704
        %v3350 = vsel %vm3348, %v3317, %v2819
        %v3352 = vsel %vm3348, %v3319, %v2821
        %v3354 = vsel %vm3348, %v3321, %v2823
        %v3356 = vsel %vm3348, %v3323, %v2825
        %v3358 = vsel %vm3348, %v3325, %v2827
        %v3360 = vsel %vm3348, %v3327, %v2829
        %v3362 = vsel %vm3348, %v3329, %v2831
        %v3364 = vsel %vm3348, %v3331, %v2833
        %v3366 = vsel %vm3348, %v3333, %v2835
        %v3368 = vsel %vm3348, %v3335, %v2837
        %v3370 = vsel %vm3348, %v3337, %v2839
        %v3372 = vsel %vm3348, %v3339, %v2841
        %v3374 = vsel %vm3348, %v3341, %v2843
        %v3376 = vsel %vm3348, %v3343, %v2845
        %v3378 = vsel %vm3348, %v3345, %v2847
        %v3380 = vsel %vm3348, %v3347, %v2849
        %vm3381 = vcmask 97280
        %v3383 = vsel %vm3381, %v3350, %v2899
        %v3385 = vsel %vm3381, %v3352, %v2901
        %v3387 = vsel %vm3381, %v3354, %v2903
        %v3389 = vsel %vm3381, %v3356, %v2905
        %v3391 = vsel %vm3381, %v3358, %v2907
        %v3393 = vsel %vm3381, %v3360, %v2909
        %v3395 = vsel %vm3381, %v3362, %v2911
        %v3397 = vsel %vm3381, %v3364, %v2913
        %v3399 = vsel %vm3381, %v3366, %v2915
        %v3401 = vsel %vm3381, %v3368, %v2917
        %v3403 = vsel %vm3381, %v3370, %v2919
        %v3405 = vsel %vm3381, %v3372, %v2921
        %v3407 = vsel %vm3381, %v3374, %v2923
        %v3409 = vsel %vm3381, %v3376, %v2925
        %v3411 = vsel %vm3381, %v3378, %v2927
        %v3413 = vsel %vm3381, %v3380, %v2929
        %vm3414 = vcmask 121856
        %v3416 = vsel %vm3414, %v3383, %v2979
        %v3418 = vsel %vm3414, %v3385, %v2981
        %v3420 = vsel %vm3414, %v3387, %v2983
        %v3422 = vsel %vm3414, %v3389, %v2985
        %v3424 = vsel %vm3414, %v3391, %v2987
        %v3426 = vsel %vm3414, %v3393, %v2989
        %v3428 = vsel %vm3414, %v3395, %v2991
        %v3430 = vsel %vm3414, %v3397, %v2993
        %v3432 = vsel %vm3414, %v3399, %v2995
        %v3434 = vsel %vm3414, %v3401, %v2997
        %v3436 = vsel %vm3414, %v3403, %v2999
        %v3438 = vsel %vm3414, %v3405, %v3001
        %v3440 = vsel %vm3414, %v3407, %v3003
        %v3442 = vsel %vm3414, %v3409, %v3005
        %v3444 = vsel %vm3414, %v3411, %v3007
        %v3446 = vsel %vm3414, %v3413, %v3009
        %vm3447 = vcmask 146432
        %v3449 = vsel %vm3447, %v3416, %v3075
        %v3451 = vsel %vm3447, %v3418, %v3077
        %v3453 = vsel %vm3447, %v3420, %v3079
        %v3455 = vsel %vm3447, %v3422, %v3081
        %v3457 = vsel %vm3447, %v3424, %v3083
        %v3459 = vsel %vm3447, %v3426, %v3085
        %v3461 = vsel %vm3447, %v3428, %v3087
        %v3463 = vsel %vm3447, %v3430, %v3089
        %v3465 = vsel %vm3447, %v3432, %v3091
        %v3467 = vsel %vm3447, %v3434, %v3093
        %v3469 = vsel %vm3447, %v3436, %v3095
        %v3471 = vsel %vm3447, %v3438, %v3097
        %v3473 = vsel %vm3447, %v3440, %v3099
        %v3475 = vsel %vm3447, %v3442, %v3101
        %v3477 = vsel %vm3447, %v3444, %v3103
        %v3479 = vsel %vm3447, %v3446, %v3105
        %vm3480 = vcmask 171008
        %v3482 = vsel %vm3480, %v3449, %v3155
        %v3484 = vsel %vm3480, %v3451, %v3157
        %v3486 = vsel %vm3480, %v3453, %v3159
        %v3488 = vsel %vm3480, %v3455, %v3161
        %v3490 = vsel %vm3480, %v3457, %v3163
        %v3492 = vsel %vm3480, %v3459, %v3165
        %v3494 = vsel %vm3480, %v3461, %v3167
        %v3496 = vsel %vm3480, %v3463, %v3169
        %v3498 = vsel %vm3480, %v3465, %v3171
        %v3500 = vsel %vm3480, %v3467, %v3173
        %v3502 = vsel %vm3480, %v3469, %v3175
        %v3504 = vsel %vm3480, %v3471, %v3177
        %v3506 = vsel %vm3480, %v3473, %v3179
        %v3508 = vsel %vm3480, %v3475, %v3181
        %v3510 = vsel %vm3480, %v3477, %v3183
        %v3512 = vsel %vm3480, %v3479, %v3185
        %vm3513 = vcmask 195584
        %v3515 = vsel %vm3513, %v3482, %v3235
        %v3517 = vsel %vm3513, %v3484, %v3237
        %v3519 = vsel %vm3513, %v3486, %v3239
        %v3521 = vsel %vm3513, %v3488, %v3241
        %v3523 = vsel %vm3513, %v3490, %v3243
        %v3525 = vsel %vm3513, %v3492, %v3245
        %v3527 = vsel %vm3513, %v3494, %v3247
        %v3529 = vsel %vm3513, %v3496, %v3249
        %v3531 = vsel %vm3513, %v3498, %v3251
        %v3533 = vsel %vm3513, %v3500, %v3253
        %v3535 = vsel %vm3513, %v3502, %v3255
        %v3537 = vsel %vm3513, %v3504, %v3257
        %v3539 = vsel %vm3513, %v3506, %v3259
        %v3541 = vsel %vm3513, %v3508, %v3261
        %v3543 = vsel %vm3513, %v3510, %v3263
        %v3545 = vsel %vm3513, %v3512, %v3265
        %v3546 = vld [vmem:[%s1] sm:$0xf]
        %v3547 = vld [vmem:[%s1 + $0x4] sm:$0xf]
        %v3548 = vld [vmem:[%s1 + $0x8] sm:$0xf]
        %v3549 = vld [vmem:[%s1 + $0xc] sm:$0x3]
        %v3550 = vld [vmem:[%s2] sm:$0x1]
        %v3552 = vlaneseq
        %v3553 = vshrl.u32 %v3552, 7
        %v3554 = vsub.s32 0, %v3553
        %v3555 = vrot.slane %v3550, %v3554
        %v3561 = vunpack.c.l.b16 %v3546
        %v3562 = vunpack.c.l.b16 %v3547
        %v3563 = vunpack.c.l.b16 %v3548
        %v3564 = vunpack.c.l.b16 %v3549
        %v3565 = vpack.c.b16 %v3562, %v3561
        %v3566 = vpack.c.b16 %v3564, %v3563
        %vm3568 = vcmask 220160
        %v3569 = vsel %vm3568, %v3515, 0
        %v3571 = vsel %vm3568, %v3517, 0
        %v3573 = vsel %vm3568, %v3519, 0
        %v3575 = vsel %vm3568, %v3521, 0
        %v3577 = vsel %vm3568, %v3523, 0
        %v3579 = vsel %vm3568, %v3525, 0
        %v3581 = vsel %vm3568, %v3527, 0
        %v3583 = vsel %vm3568, %v3529, 0
        %v3585 = vsel %vm3568, %v3531, 0
        %v3587 = vsel %vm3568, %v3533, 0
        %v3589 = vsel %vm3568, %v3535, 0
        %v3591 = vsel %vm3568, %v3537, 0
        %v3593 = vsel %vm3568, %v3539, 0
        %v3595 = vsel %vm3568, %v3541, 0
        %v3597 = vsel %vm3568, %v3543, 0
        %v3599 = vsel %vm3568, %v3545, 0
        %vm3601 = vcmask 1044480
        %vm3602 = vcmask 1045504
        %v3603 = vsel %vm3601, 4294967295, 65535
        %v3604 = vsel %vm3602, %v3603, 0
        %v3606 = vand.u32 %v3566, %v3604
        %3608 = vmatprep.subr.bf16.mxu0 0
        %3609 = vmatpush1.bf16.msra.mxu0 %v3565
        %3610 = vmatprep.subr.bf16.mxu0 0
        %3611 = vmatpush1.bf16.msra.mxu0 %v3606
        %3612 = vmatprep.subr.bf16.mxu0 0
        %3613 = vmatpush1.bf16.msra.mxu0 0
        %3614 = vmatprep.subr.bf16.mxu0 0
        %3615 = vmatpush1.bf16.msra.mxu0 0
        %3616 = vmatprep.subr.bf16.mxu0 0
        %3617 = vmatpush1.bf16.msra.mxu0 0
        %3618 = vmatprep.subr.bf16.mxu0 0
        %3619 = vmatpush1.bf16.msra.mxu0 0
        %3620 = vmatprep.subr.bf16.mxu0 0
        %3621 = vmatpush1.bf16.msra.mxu0 0
        %3622 = vmatprep.subr.bf16.mxu0 0
        %3623 = vmatpush1.bf16.msra.mxu0 0
        %3624 = vmatprep.subr.bf16.mxu0 0
        %3625 = vmatpush1.bf16.msra.mxu0 0
        %3626 = vmatprep.subr.bf16.mxu0 0
        %3627 = vmatpush1.bf16.msra.mxu0 0
        %3628 = vmatprep.subr.bf16.mxu0 0
        %3629 = vmatpush1.bf16.msra.mxu0 0
        %3630 = vmatprep.subr.bf16.mxu0 0
        %3631 = vmatpush1.bf16.msra.mxu0 0
        %3632 = vmatprep.subr.bf16.mxu0 0
        %3633 = vmatpush1.bf16.msra.mxu0 0
        %3634 = vmatprep.subr.bf16.mxu0 0
        %3635 = vmatpush1.bf16.msra.mxu0 0
        %3636 = vmatprep.subr.bf16.mxu0 0
        %3637 = vmatpush1.bf16.msra.mxu0 0
        %3638 = vmatprep.subr.bf16.mxu0 0
        %3639 = vmatpush1.bf16.msra.mxu0 0
        %3640 = vmatprep.mubr.bf16.mxu0 0
        %3641 = vmatmul.mubr.bf16.gmra.mrb[0].mxu0 %v3569
        %v3642 = vpop.f32.mrb[0].mxu0
        %v3643 = vadd.f32 %v3555, %v3642
        %v3644 = vpop.f32.mrb[0].mxu0
        %v3645 = vpop.f32.mrb[0].mxu0
        %v3646 = vadd.f32 %v3555, %v3645
        %v3647 = vpop.f32.mrb[0].mxu0
        %3648 = vmatprep.mubr.bf16.mxu0 0
        %3649 = vmatmul.mubr.bf16.gmra.mrb[0].mxu0 %v3571
        %v3650 = vpop.f32.mrb[0].mxu0
        %v3651 = vadd.f32 %v3555, %v3650
        %v3652 = vpop.f32.mrb[0].mxu0
        %v3653 = vpop.f32.mrb[0].mxu0
        %v3654 = vadd.f32 %v3555, %v3653
        %v3655 = vpop.f32.mrb[0].mxu0
        %3656 = vmatprep.mubr.bf16.mxu0 0
        %3657 = vmatmul.mubr.bf16.gmra.mrb[0].mxu0 %v3573
        %v3658 = vpop.f32.mrb[0].mxu0
        %v3659 = vadd.f32 %v3555, %v3658
        %v3660 = vpop.f32.mrb[0].mxu0
        %v3661 = vpop.f32.mrb[0].mxu0
        %v3662 = vadd.f32 %v3555, %v3661
        %v3663 = vpop.f32.mrb[0].mxu0
        %3664 = vmatprep.mubr.bf16.mxu0 0
        %3665 = vmatmul.mubr.bf16.gmra.mrb[0].mxu0 %v3575
        %v3666 = vpop.f32.mrb[0].mxu0
        %v3667 = vadd.f32 %v3555, %v3666
        %v3668 = vpop.f32.mrb[0].mxu0
        %v3669 = vpop.f32.mrb[0].mxu0
        %v3670 = vadd.f32 %v3555, %v3669
        %v3671 = vpop.f32.mrb[0].mxu0
        %3672 = vmatprep.mubr.bf16.mxu0 0
        %3673 = vmatmul.mubr.bf16.gmra.mrb[0].mxu0 %v3577
        %v3674 = vpop.f32.mrb[0].mxu0
        %v3675 = vadd.f32 %v3555, %v3674
        %v3676 = vpop.f32.mrb[0].mxu0
        %v3677 = vpop.f32.mrb[0].mxu0
        %v3678 = vadd.f32 %v3555, %v3677
        %v3679 = vpop.f32.mrb[0].mxu0
        %3680 = vmatprep.mubr.bf16.mxu0 0
        %3681 = vmatmul.mubr.bf16.gmra.mrb[0].mxu0 %v3579
        %v3682 = vpop.f32.mrb[0].mxu0
        %v3683 = vadd.f32 %v3555, %v3682
        %v3684 = vpop.f32.mrb[0].mxu0
        %v3685 = vpop.f32.mrb[0].mxu0
        %v3686 = vadd.f32 %v3555, %v3685
        %v3687 = vpop.f32.mrb[0].mxu0
        %3688 = vmatprep.mubr.bf16.mxu0 0
        %3689 = vmatmul.mubr.bf16.gmra.mrb[0].mxu0 %v3581
        %v3690 = vpop.f32.mrb[0].mxu0
        %v3691 = vadd.f32 %v3555, %v3690
        %v3692 = vpop.f32.mrb[0].mxu0
        %v3693 = vpop.f32.mrb[0].mxu0
        %v3694 = vadd.f32 %v3555, %v3693
        %v3695 = vpop.f32.mrb[0].mxu0
        %3696 = vmatprep.mubr.bf16.mxu0 0
        %3697 = vmatmul.mubr.bf16.gmra.mrb[0].mxu0 %v3583
        %v3698 = vpop.f32.mrb[0].mxu0
        %v3699 = vadd.f32 %v3555, %v3698
        %v3700 = vpop.f32.mrb[0].mxu0
        %v3701 = vpop.f32.mrb[0].mxu0
        %v3702 = vadd.f32 %v3555, %v3701
        %v3703 = vpop.f32.mrb[0].mxu0
        %3704 = vmatprep.mubr.bf16.mxu0 0
        %3705 = vmatmul.mubr.bf16.gmra.mrb[0].mxu0 %v3585
        %v3706 = vpop.f32.mrb[0].mxu0
        %v3707 = vadd.f32 %v3555, %v3706
        %v3708 = vpop.f32.mrb[0].mxu0
        %v3709 = vpop.f32.mrb[0].mxu0
        %v3710 = vadd.f32 %v3555, %v3709
        %v3711 = vpop.f32.mrb[0].mxu0
        %3712 = vmatprep.mubr.bf16.mxu0 0
        %3713 = vmatmul.mubr.bf16.gmra.mrb[0].mxu0 %v3587
        %v3714 = vpop.f32.mrb[0].mxu0
        %v3715 = vadd.f32 %v3555, %v3714
        %v3716 = vpop.f32.mrb[0].mxu0
        %v3717 = vpop.f32.mrb[0].mxu0
        %v3718 = vadd.f32 %v3555, %v3717
        %v3719 = vpop.f32.mrb[0].mxu0
        %3720 = vmatprep.mubr.bf16.mxu0 0
        %3721 = vmatmul.mubr.bf16.gmra.mrb[0].mxu0 %v3589
        %v3722 = vpop.f32.mrb[0].mxu0
        %v3723 = vadd.f32 %v3555, %v3722
        %v3724 = vpop.f32.mrb[0].mxu0
        %v3725 = vpop.f32.mrb[0].mxu0
        %v3726 = vadd.f32 %v3555, %v3725
        %v3727 = vpop.f32.mrb[0].mxu0
        %3728 = vmatprep.mubr.bf16.mxu0 0
        %3729 = vmatmul.mubr.bf16.gmra.mrb[0].mxu0 %v3591
        %v3730 = vpop.f32.mrb[0].mxu0
        %v3731 = vadd.f32 %v3555, %v3730
        %v3732 = vpop.f32.mrb[0].mxu0
        %v3733 = vpop.f32.mrb[0].mxu0
        %v3734 = vadd.f32 %v3555, %v3733
        %v3735 = vpop.f32.mrb[0].mxu0
        %3736 = vmatprep.mubr.bf16.mxu0 0
        %3737 = vmatmul.mubr.bf16.gmra.mrb[0].mxu0 %v3593
        %v3738 = vpop.f32.mrb[0].mxu0
        %v3739 = vadd.f32 %v3555, %v3738
        %v3740 = vpop.f32.mrb[0].mxu0
        %v3741 = vpop.f32.mrb[0].mxu0
        %v3742 = vadd.f32 %v3555, %v3741
        %v3743 = vpop.f32.mrb[0].mxu0
        %3744 = vmatprep.mubr.bf16.mxu0 0
        %3745 = vmatmul.mubr.bf16.gmra.mrb[0].mxu0 %v3595
        %v3746 = vpop.f32.mrb[0].mxu0
        %v3747 = vadd.f32 %v3555, %v3746
        %v3748 = vpop.f32.mrb[0].mxu0
        %v3749 = vpop.f32.mrb[0].mxu0
        %v3750 = vadd.f32 %v3555, %v3749
        %v3751 = vpop.f32.mrb[0].mxu0
        %3752 = vmatprep.mubr.bf16.mxu0 0
        %3753 = vmatmul.mubr.bf16.gmra.mrb[0].mxu0 %v3597
        %v3754 = vpop.f32.mrb[0].mxu0
        %v3755 = vadd.f32 %v3555, %v3754
        %v3756 = vpop.f32.mrb[0].mxu0
        %v3757 = vpop.f32.mrb[0].mxu0
        %v3758 = vadd.f32 %v3555, %v3757
        %v3759 = vpop.f32.mrb[0].mxu0
        %3760 = vmatprep.mubr.bf16.mxu0 0
        %3761 = vmatmul.mubr.bf16.gmra.mrb[0].mxu0 %v3599
        %v3762 = vpop.f32.mrb[0].mxu0
        %v3763 = vadd.f32 %v3555, %v3762
        %v3764 = vpop.f32.mrb[0].mxu0
        %v3765 = vpop.f32.mrb[0].mxu0
        %v3766 = vadd.f32 %v3555, %v3765
        %v3767 = vpop.f32.mrb[0].mxu0
        %3768 = vdwg.mxu0
        %v3769 = vmax.f32 %v3643, 0.0
        %v3770 = vmax.f32 %v3646, 0.0
        %v3771 = vmax.f32 %v3651, 0.0
        %v3772 = vmax.f32 %v3654, 0.0
        %v3773 = vmax.f32 %v3659, 0.0
        %v3774 = vmax.f32 %v3662, 0.0
        %v3775 = vmax.f32 %v3667, 0.0
        %v3776 = vmax.f32 %v3670, 0.0
        %v3777 = vmax.f32 %v3675, 0.0
        %v3778 = vmax.f32 %v3678, 0.0
        %v3779 = vmax.f32 %v3683, 0.0
        %v3780 = vmax.f32 %v3686, 0.0
        %v3781 = vmax.f32 %v3691, 0.0
        %v3782 = vmax.f32 %v3694, 0.0
        %v3783 = vmax.f32 %v3699, 0.0
        %v3784 = vmax.f32 %v3702, 0.0
        %v3785 = vmax.f32 %v3707, 0.0
        %v3786 = vmax.f32 %v3710, 0.0
        %v3787 = vmax.f32 %v3715, 0.0
        %v3788 = vmax.f32 %v3718, 0.0
        %v3789 = vmax.f32 %v3723, 0.0
        %v3790 = vmax.f32 %v3726, 0.0
        %v3791 = vmax.f32 %v3731, 0.0
        %v3792 = vmax.f32 %v3734, 0.0
        %v3793 = vmax.f32 %v3739, 0.0
        %v3794 = vmax.f32 %v3742, 0.0
        %v3795 = vmax.f32 %v3747, 0.0
        %v3796 = vmax.f32 %v3750, 0.0
        %v3797 = vmax.f32 %v3755, 0.0
        %v3798 = vmax.f32 %v3758, 0.0
        %v3799 = vmax.f32 %v3763, 0.0
        %v3800 = vmax.f32 %v3766, 0.0
        %v3801 = vpack.c.bf16 %v3770, %v3769
        %v3802 = vpack.c.bf16 %v3772, %v3771
        %v3803 = vpack.c.bf16 %v3774, %v3773
        %v3804 = vpack.c.bf16 %v3776, %v3775
        %v3805 = vpack.c.bf16 %v3778, %v3777
        %v3806 = vpack.c.bf16 %v3780, %v3779
        %v3807 = vpack.c.bf16 %v3782, %v3781
        %v3808 = vpack.c.bf16 %v3784, %v3783
        %v3809 = vpack.c.bf16 %v3786, %v3785
        %v3810 = vpack.c.bf16 %v3788, %v3787
        %v3811 = vpack.c.bf16 %v3790, %v3789
        %v3812 = vpack.c.bf16 %v3792, %v3791
        %v3813 = vpack.c.bf16 %v3794, %v3793
        %v3814 = vpack.c.bf16 %v3796, %v3795
        %v3815 = vpack.c.bf16 %v3798, %v3797
        %v3816 = vpack.c.bf16 %v3800, %v3799
        %v3833 = vunpack.c.l.b16 %v3801
        %v3834 = vunpack.c.h.b16 %v3801
        %v3835 = vunpack.c.l.b16 %v3802
        %v3836 = vunpack.c.h.b16 %v3802
        %v3837 = vunpack.c.l.b16 %v3803
        %v3838 = vunpack.c.h.b16 %v3803
        %v3839 = vunpack.c.l.b16 %v3804
        %v3840 = vunpack.c.h.b16 %v3804
        %v3841 = vunpack.c.l.b16 %v3805
        %v3842 = vunpack.c.h.b16 %v3805
        %v3843 = vunpack.c.l.b16 %v3806
        %v3844 = vunpack.c.h.b16 %v3806
        %v3845 = vunpack.c.l.b16 %v3807
        %v3846 = vunpack.c.h.b16 %v3807
        %v3847 = vunpack.c.l.b16 %v3808
        %v3848 = vunpack.c.h.b16 %v3808
        %v3849 = vunpack.c.l.b16 %v3809
        %v3850 = vunpack.c.h.b16 %v3809
        %v3851 = vunpack.c.l.b16 %v3810
        %v3852 = vunpack.c.h.b16 %v3810
        %v3853 = vunpack.c.l.b16 %v3811
        %v3854 = vunpack.c.h.b16 %v3811
        %v3855 = vunpack.c.l.b16 %v3812
        %v3856 = vunpack.c.h.b16 %v3812
        %v3857 = vunpack.c.l.b16 %v3813
        %v3858 = vunpack.c.h.b16 %v3813
        %v3859 = vunpack.c.l.b16 %v3814
        %v3860 = vunpack.c.h.b16 %v3814
        %v3861 = vunpack.c.l.b16 %v3815
        %v3862 = vunpack.c.h.b16 %v3815
        %v3863 = vunpack.c.l.b16 %v3816
        %v3864 = vunpack.c.h.b16 %v3816
        %v3865 = vpack.c.b16 %v3833, %v3833
        %v3866 = vpack.c.b16 %v3834, %v3834
        %v3867 = vpack.c.b16 %v3835, %v3835
        %v3868 = vpack.c.b16 %v3836, %v3836
        %v3869 = vpack.c.b16 %v3837, %v3837
        %v3870 = vpack.c.b16 %v3838, %v3838
        %v3871 = vpack.c.b16 %v3839, %v3839
        %v3872 = vpack.c.b16 %v3840, %v3840
        %v3873 = vpack.c.b16 %v3841, %v3841
        %v3874 = vpack.c.b16 %v3842, %v3842
        %v3875 = vpack.c.b16 %v3843, %v3843
        %v3876 = vpack.c.b16 %v3844, %v3844
        %v3877 = vpack.c.b16 %v3845, %v3845
        %v3878 = vpack.c.b16 %v3846, %v3846
        %v3879 = vpack.c.b16 %v3847, %v3847
        %v3880 = vpack.c.b16 %v3848, %v3848
        %v3881 = vpack.c.b16 %v3849, %v3849
        %v3882 = vpack.c.b16 %v3850, %v3850
        %v3883 = vpack.c.b16 %v3851, %v3851
        %v3884 = vpack.c.b16 %v3852, %v3852
        %v3885 = vpack.c.b16 %v3853, %v3853
        %v3886 = vpack.c.b16 %v3854, %v3854
        %v3887 = vpack.c.b16 %v3855, %v3855
        %v3888 = vpack.c.b16 %v3856, %v3856
        %v3889 = vpack.c.b16 %v3857, %v3857
        %v3890 = vpack.c.b16 %v3858, %v3858
        %v3891 = vpack.c.b16 %v3859, %v3859
        %v3892 = vpack.c.b16 %v3860, %v3860
        %v3893 = vpack.c.b16 %v3861, %v3861
        %v3894 = vpack.c.b16 %v3862, %v3862
        %v3895 = vpack.c.b16 %v3863, %v3863
        %v3896 = vpack.c.b16 %v3864, %v3864
        %vm3929 = vcmask 519168
        %3930 = vst.msk [vmem:[%s163] sm:$0xf] %vm3929, %v3865
        %3931 = vst.msk [vmem:[%s163 + $0x4] sm:$0xf] %vm3929, %v3866
        %3932 = vst.msk [vmem:[%s163 + $0x8] sm:$0xf] %vm3929, %v3867
        %3933 = vst.msk [vmem:[%s163 + $0xc] sm:$0xf] %vm3929, %v3868
        %3934 = vst.msk [vmem:[%s163 + $0x10] sm:$0xf] %vm3929, %v3869
        %3935 = vst.msk [vmem:[%s163 + $0x14] sm:$0xf] %vm3929, %v3870
        %3936 = vst.msk [vmem:[%s163 + $0x18] sm:$0xf] %vm3929, %v3871
        %3937 = vst.msk [vmem:[%s163 + $0x1c] sm:$0xf] %vm3929, %v3872
        %3938 = vst.msk [vmem:[%s163 + $0x20] sm:$0xf] %vm3929, %v3873
        %3939 = vst.msk [vmem:[%s163 + $0x24] sm:$0xf] %vm3929, %v3874
        %3940 = vst.msk [vmem:[%s163 + $0x28] sm:$0xf] %vm3929, %v3875
        %3941 = vst.msk [vmem:[%s163 + $0x2c] sm:$0xf] %vm3929, %v3876
        %3942 = vst.msk [vmem:[%s163 + $0x30] sm:$0xf] %vm3929, %v3877
        %3943 = vst.msk [vmem:[%s163 + $0x34] sm:$0xf] %vm3929, %v3878
        %3944 = vst.msk [vmem:[%s163 + $0x38] sm:$0xf] %vm3929, %v3879
        %3945 = vst.msk [vmem:[%s163 + $0x3c] sm:$0xf] %vm3929, %v3880
        %3946 = vst.msk [vmem:[%s163 + $0x40] sm:$0xf] %vm3929, %v3881
        %3947 = vst.msk [vmem:[%s163 + $0x44] sm:$0xf] %vm3929, %v3882
        %3948 = vst.msk [vmem:[%s163 + $0x48] sm:$0xf] %vm3929, %v3883
        %3949 = vst.msk [vmem:[%s163 + $0x4c] sm:$0xf] %vm3929, %v3884
        %3950 = vst.msk [vmem:[%s163 + $0x50] sm:$0xf] %vm3929, %v3885
        %3951 = vst.msk [vmem:[%s163 + $0x54] sm:$0xf] %vm3929, %v3886
        %3952 = vst.msk [vmem:[%s163 + $0x58] sm:$0xf] %vm3929, %v3887
        %3953 = vst.msk [vmem:[%s163 + $0x5c] sm:$0xf] %vm3929, %v3888
        %3954 = vst.msk [vmem:[%s163 + $0x60] sm:$0xf] %vm3929, %v3889
        %3955 = vst.msk [vmem:[%s163 + $0x64] sm:$0xf] %vm3929, %v3890
        %3956 = vst.msk [vmem:[%s163 + $0x68] sm:$0xf] %vm3929, %v3891
        %3957 = vst.msk [vmem:[%s163 + $0x6c] sm:$0xf] %vm3929, %v3892
        %3958 = vst.msk [vmem:[%s163 + $0x70] sm:$0xf] %vm3929, %v3893
        %3959 = vst.msk [vmem:[%s163 + $0x74] sm:$0xf] %vm3929, %v3894
        %3960 = vst.msk [vmem:[%s163 + $0x78] sm:$0xf] %vm3929, %v3895
        %3961 = vst.msk [vmem:[%s163 + $0x7c] sm:$0xf] %vm3929, %v3896
        %s3962 = sand.u32 %s93, 1
        %s3963 = scalar_lea.sflag [#allocation4], %s3962
        %s3964 = sand.u32 %s93, 1
        %s3965 = smul.addr %s3964, 128
        %s3966 = scalar_lea.vmem [#allocation3], %s3965
        // Predicated region
        $region33: #{tpu_custom_call.1} parent=31 // pred_check
          %p3967 = pneg %p103
        $region34: #{tpu_custom_call.1} parent=31 // pred_check_branch
          %3969 = sbr.rel (%p3967) target = $region36
        $region35: #{tpu_custom_call.1} parent=31 // pred_region
          %s3971 = ssub.s32 2048, 2048
          %3972 = vsyncadd %s3963, %s3971
          %s3973 = smul.addr %s17, 32
          %s3974 = smul.addr %s3973, 64
          %s3975 = scalar_lea.hbm %s3, %s3974
          %s3976 = sshll.u32 %s3966, 4
          %s3977 = int_to_ptr.vmem [resolvable:$true] %s3976
          %3982 = dma.vmem_to_hbm [thread:$0]  %s3977, 2048, %s3975, %s3963, 64, 64, 4
        $region36: #{tpu_custom_call.1} parent=31 // pred_fallthru
          _
      $region32: #{tpu_custom_call.1} parent=5 // pred_fallthru
        _
      %p3983 = scmp.le.s32.totalorder 2, %s12
      // Predicated region
      $region37: #{tpu_custom_call.1} parent=5 // pred_check
        %p3984 = pneg %p3983
      $region38: #{tpu_custom_call.1} parent=5 // pred_check_branch
        %3986 = sbr.rel (%p3984) target = $region40
      $region39: #{tpu_custom_call.1} parent=5 // pred_region
        %s3987 = ssub.s32 %s12, 2
        // Predicated region
        $region41: #{tpu_custom_call.1} parent=39 // pred_check
          %p3988 = pneg %p109
        $region42: #{tpu_custom_call.1} parent=39 // pred_check_branch
          %3990 = sbr.rel (%p3988) target = $region44
        $region43: #{tpu_custom_call.1} parent=39 // pred_region
          %s3991 = sand.u32 %s94, 1
          %s3992 = scalar_lea.sflag [#allocation4], %s3991
          %s3993 = sand.u32 %s94, 1
          %s3994 = smul.addr %s3993, 128
          %s3995 = scalar_lea.vmem [#allocation3], %s3994
          %3996 = dma.done %s3992, 2048
        $region44: #{tpu_custom_call.1} parent=39 // pred_fallthru
          _
      $region40: #{tpu_custom_call.1} parent=5 // pred_fallthru
        _
    $region6: #{tpu_custom_call.1} parent=1 // loop_footer
      %s16 = sadd.s32 1, %s12
    $region7: #{tpu_custom_call.1} parent=1 // loop_footer_branch
      %11 = sbr.rel target = $region3
    $region8: #{tpu_custom_call.1} parent=1 // loop_exit
      _
    %3997 = vsyncpa [#allocation4], 1
    %s3998 = scalar_lea.sflag [#allocation4], 1
    %3999 = vsyncpa %s3998, 1

</llo_original>
